<compile_context>
chip_gen: v7x
topology: tpu7x:2x2x1
jax: 0.10.0
libtpu: 0.0.40
codegen_flags: <defaults>
</compile_context>

<pallas_src>
import numpy as np
import jax
import jax.numpy as jnp
from jax import lax
from jax.experimental import pallas as pl
from jax.experimental.pallas import tpu as pltpu

# ----------------------- synthetic model hyper-parameters -----------------------
B = 2              # batch size
L = 16             # sequence length
BL = B * L         # fused batch*time rows
H = 32             # mamba hidden size (d_model)
V = 128            # tokenizer_len (after resize_token_embeddings)
MEM_ID = V - 1     # <MEM> token id
M_TOK = 4          # number of <MEM> tokens per sequence (equal per row, torch.stack requires it)
D_OUT = 64         # llm_input_size
EXPAND = 2
D_INNER = EXPAND * H          # 64
D_STATE = 8                   # SSM state size N
D_CONV = 4                    # depthwise conv width
DT_RANK = max(1, H // 16)     # 2

# ---- bf16 weight-slab row offsets (all multiples of 16 -> clean bf16 sublane tiles) ----
ROW_EMB = 0                        # (V, H)       rows   0:128, lanes 0:H
ROW_WIN_X = ROW_EMB + V            # (H, Di)      rows 128:160
ROW_WIN_R = ROW_WIN_X + H          # (H, Di)      rows 160:192
ROW_WDT = ROW_WIN_R + H            # (Di, Di)     rows 192:256
ROW_WOUT = ROW_WDT + D_INNER       # (Di, H)      rows 256:320, lanes 0:H
ROW_WPROJ = ROW_WOUT + D_INNER     # (H, D_OUT)   rows 320:352
WSLAB_ROWS = ROW_WPROJ + H         # 352
WSLAB_LANES = 64

# ---- f32 small-param slab row offsets ----
FROW_CONVW = 0                     # (D_CONV, Di)
FROW_CONVB = FROW_CONVW + D_CONV   # 4
FROW_BDT = FROW_CONVB + 1          # 5
FROW_DSKIP = FROW_BDT + 1          # 6
FROW_BPROJ = FROW_DSKIP + 1        # 7
FROW_WBC = FROW_BPROJ + 1          # 8
FROW_ABT = FROW_WBC + 2 * D_STATE  # 24
FSLAB_ROWS = FROW_ABT + D_STATE    # 32
FSLAB_LANES = 128


def _silu(x):
    return x * (1.0 / (1.0 + jnp.exp(-x)))


def _softplus(x):
    # numerically stable form
    return jnp.maximum(x, 0.0) + jnp.log(1.0 + jnp.exp(-jnp.abs(x)))


# ============================ fused MambaCompressor kernel ============================
def fused_kernel(idspos_ref, wslab_ref, fslab_ref, o_ref,
                 da_scr, bu_scr, cc_scr, y_scr):
    f32 = jnp.float32
    bf16 = jnp.bfloat16

    # ---- unpack runtime integers and packed weight slabs (static slices, 1 DMA each) ----
    ids_col = idspos_ref[0:BL, :]                                   # (BL, 1) int32
    pos_col = idspos_ref[BL:BL + B * M_TOK, :]                      # (B*M, 1) int32

    emb_w = wslab_ref[ROW_EMB:ROW_EMB + V, 0:H]                     # (V, H)   bf16
    w_in_x = wslab_ref[ROW_WIN_X:ROW_WIN_X + H, :]                  # (H, Di)  bf16
    w_in_r = wslab_ref[ROW_WIN_R:ROW_WIN_R + H, :]                  # (H, Di)  bf16
    w_dt = wslab_ref[ROW_WDT:ROW_WDT + D_INNER, :]                  # (Di, Di) bf16
    w_out = wslab_ref[ROW_WOUT:ROW_WOUT + D_INNER, 0:H]             # (Di, H)  bf16
    w_proj = wslab_ref[ROW_WPROJ:ROW_WPROJ + H, :]                  # (H, D_OUT) bf16

    conv_w = fslab_ref[FROW_CONVW:FROW_CONVW + D_CONV, 0:D_INNER]   # (D_CONV, Di)
    conv_b = fslab_ref[FROW_CONVB:FROW_CONVB + 1, 0:D_INNER]        # (1, Di)
    b_dt = fslab_ref[FROW_BDT:FROW_BDT + 1, 0:D_INNER]              # (1, Di)
    d_skip = fslab_ref[FROW_DSKIP:FROW_DSKIP + 1, 0:D_INNER]        # (1, Di)
    b_proj = fslab_ref[FROW_BPROJ:FROW_BPROJ + 1, 0:D_OUT]          # (1, D_OUT)
    w_bc = fslab_ref[FROW_WBC:FROW_WBC + 2 * D_STATE, 0:D_INNER]    # (2N, Di)
    a_bt = fslab_ref[FROW_ABT:FROW_ABT + D_STATE, :]                # (N, B*Di)

    # ---- embedding lookup as one-hot bf16 MXU matmul (exact 0/1 selector) ----
    tok_iota = lax.broadcasted_iota(jnp.int32, (BL, V), 1)
    onehot = jnp.where(tok_iota == ids_col, 1.0, 0.0).astype(bf16)           # (BL, V)
    emb_tm = jnp.dot(onehot, emb_w, preferred_element_type=f32)              # (BL, H)

    # ---- in_proj: separate x / res matmuls (no mid-vreg lane slices) ----
    emb_bf = emb_tm.astype(bf16)
    x_tm = jnp.dot(emb_bf, w_in_x, preferred_element_type=f32)               # (BL, Di)
    res_tm = jnp.dot(emb_bf, w_in_r, preferred_element_type=f32)             # (BL, Di)

    # ---- causal depthwise conv along time: sublane rotations + prefix masks ----
    row_in_seq = lax.rem(lax.broadcasted_iota(jnp.int32, (BL, D_INNER), 0), L)
    acc = conv_w[D_CONV - 1:D_CONV, :] * x_tm                                # shift s = 0
    for s in range(1, D_CONV):
        k = D_CONV - 1 - s
        shifted = pltpu.roll(x_tm, shift=s, axis=0)                          # x[t-s] (wrapped)
        shifted = jnp.where(row_in_seq >= s, shifted, 0.0)                   # kill wrap / batch edge
        acc = acc + conv_w[k:k + 1, :] * shifted
    xc_tm = _silu(acc + conv_b)                                              # (BL, Di) f32

    # ---- dt projection (low-rank folded offline), stable softplus ----
    xc_bf = xc_tm.astype(bf16)
    dt_tm = _softplus(jnp.dot(xc_bf, w_dt, preferred_element_type=f32) + b_dt)   # (BL, Di)

    # ---- B / C projections (tiny, f32 for scan precision) ----
    bc_s = lax.dot_general(w_bc, xc_tm, (((1,), (1,)), ((), ())),
                           preferred_element_type=f32)                       # (2N, BL)
    b_s = bc_s[0:D_STATE, :]                                                 # (N, BL)
    c_s = bc_s[D_STATE:2 * D_STATE, :]                                       # (N, BL)

    # ---- scan-layout tensors: (L, B*Di) = (16, 128) ----
    u_tm = dt_tm * xc_tm
    dt_s = jnp.concatenate([dt_tm[:L, :], dt_tm[L:, :]], axis=1)             # (L, B*Di)
    u_s = jnp.concatenate([u_tm[:L, :], u_tm[L:, :]], axis=1)                # (L, B*Di)

    lane = lax.broadcasted_iota(jnp.int32, (1, B * D_INNER), 1)
    m0 = jnp.where(lane < D_INNER, 1.0, 0.0).astype(f32)                     # batch-0 lane block
    m1 = 1.0 - m0                                                            # batch-1 lane block

    # ---- pre-pass: build dA / B*u / C slabs in VMEM scratch (all off the h-chain) ----
    for t in range(L):
        r = t * D_STATE
        b_t = b_s[:, t:t + 1] * m0 + b_s[:, L + t:L + t + 1] * m1            # (N, B*Di)
        c_t = c_s[:, t:t + 1] * m0 + c_s[:, L + t:L + t + 1] * m1            # (N, B*Di)
        da_scr[r:r + D_STATE, :] = jnp.exp(dt_s[t:t + 1, :] * a_bt)
        bu_scr[r:r + D_STATE, :] = u_s[t:t + 1, :] * b_t
        cc_scr[r:r + D_STATE, :] = c_t

    # ---- recurrence: state is ONE vreg (8,128); only 2 VPU ops on the carried chain ----
    h = jnp.zeros((D_STATE, B * D_INNER), f32)
    for t in range(L):
        r = t * D_STATE
        h = da_scr[r:r + D_STATE, :] * h + bu_scr[r:r + D_STATE, :]
        y_scr[t:t + 1, :] = jnp.sum(h * cc_scr[r:r + D_STATE, :], axis=0,
                                    keepdims=True)                           # off-chain reduce

    y_s = y_scr[...]                                                         # (L, B*Di)

    # ---- back to time-major, skip + gate, out_proj, residual ----
    y_tm = jnp.concatenate([y_s[:, :D_INNER], y_s[:, D_INNER:]], axis=0)     # (BL, Di)
    y_tm = y_tm + d_skip * xc_tm
    gated = y_tm * _silu(res_tm)
    hidden = emb_tm + jnp.dot(gated.astype(bf16), w_out,
                              preferred_element_type=f32)                    # (BL, H)

    # ---- <MEM> gather via one-hot selector (bounds-safe) + memory projection ----
    sel_iota = lax.broadcasted_iota(jnp.int32, (B * M_TOK, BL), 1)
    sel = jnp.where(sel_iota == pos_col, 1.0, 0.0).astype(bf16)              # (B*M, BL)
    mem = jnp.dot(sel, hidden.astype(bf16), preferred_element_type=f32)      # (B*M, H)
    out = jnp.dot(mem.astype(bf16), w_proj, preferred_element_type=f32) + b_proj
    o_ref[...] = out.astype(o_ref.dtype)                                     # (B*M, D_OUT)


# ================================ parameter packing ================================
def pack_params(p):
    """Fold / pre-transpose the original parameterization into 2 kernel-ready slabs."""
    f32, bf16 = jnp.float32, jnp.bfloat16

    def pad_lanes(m, width):
        return jnp.pad(m.astype(f32), ((0, 0), (0, width - m.shape[1])))

    # bf16 slab: all MXU weights, lane width 64, row offsets are multiples of 16
    w_dt_full = (p["w_dt_T"] @ p["w_x_T"][:DT_RANK]).T                       # (Di, Di)
    wslab = jnp.concatenate([
        pad_lanes(p["embedding"], WSLAB_LANES),                              # rows 0:128
        pad_lanes(p["w_in_x_T"].T, WSLAB_LANES),                             # 128:160
        pad_lanes(p["w_in_r_T"].T, WSLAB_LANES),                             # 160:192
        pad_lanes(w_dt_full, WSLAB_LANES),                                   # 192:256
        pad_lanes(p["w_out_T"].T, WSLAB_LANES),                              # 256:320
        pad_lanes(p["w_proj"], WSLAB_LANES),                                 # 320:352
    ], axis=0).astype(bf16)                                                  # (352, 64)

    # f32 slab: tiny elementwise / scan params, lane width 128
    fslab = jnp.concatenate([
        pad_lanes(p["conv_w"].T, FSLAB_LANES),                               # rows 0:4
        pad_lanes(p["conv_b"].T, FSLAB_LANES),                               # row 4
        pad_lanes(p["b_dt"].T, FSLAB_LANES),                                 # row 5
        pad_lanes(p["d_skip"].T, FSLAB_LANES),                               # row 6
        pad_lanes(p["b_proj"], FSLAB_LANES),                                 # row 7
        pad_lanes(p["w_x_T"][DT_RANK:DT_RANK + 2 * D_STATE], FSLAB_LANES),   # rows 8:24
        jnp.tile(p["a"].T, (1, B)).astype(f32),                              # rows 24:32
    ], axis=0).astype(f32)                                                   # (32, 128)

    return dict(wslab=wslab, fslab=fslab)


# ==================================== wrapper ====================================
@jax.jit
def mamba_compressor_forward(input_ids, positions, kp):
    ids_col = input_ids.reshape(BL, 1).astype(jnp.int32)                     # (B*L, 1)
    pos_col = (positions.astype(jnp.int32)
               + (jnp.arange(B, dtype=jnp.int32) * L)[:, None]).reshape(B * M_TOK, 1)
    idspos = jnp.concatenate([ids_col, pos_col], axis=0)                     # (B*L + B*M, 1)
    out2d = pl.pallas_call(
        fused_kernel,
        out_shape=jax.ShapeDtypeStruct((B * M_TOK, D_OUT), jnp.float32),
        scratch_shapes=[
            pltpu.VMEM((L * D_STATE, B * D_INNER), jnp.float32),   # dA slab
            pltpu.VMEM((L * D_STATE, B * D_INNER), jnp.float32),   # B*u slab
            pltpu.VMEM((L * D_STATE, B * D_INNER), jnp.float32),   # C slab
            pltpu.VMEM((L, B * D_INNER), jnp.float32),             # y rows
        ],
    )(idspos, kp["wslab"], kp["fslab"])
    return out2d.reshape(B, M_TOK, D_OUT)


# =============================== pure-JAX reference ===============================
def reference_forward(input_ids, positions, p):
    emb = jnp.take(p["embedding"], input_ids, axis=0).astype(jnp.float32)
    outs = []
    for b in range(B):
        embT = emb[b].T
        xT = p["w_in_x_T"] @ embT
        resT = p["w_in_r_T"] @ embT
        acc = jnp.zeros_like(xT)
        for k in range(D_CONV):
            s = D_CONV - 1 - k
            shifted = jnp.pad(xT, ((0, 0), (s, 0)))[:, :L]
            acc = acc + p["conv_w"][:, k:k + 1] * shifted
        xc = _silu(acc + p["conv_b"])
        dbc = p["w_x_T"] @ xc
        dtT = _softplus(p["w_dt_T"] @ dbc[:DT_RANK] + p["b_dt"])
        bmT = dbc[DT_RANK:DT_RANK + D_STATE]
        cmT = dbc[DT_RANK + D_STATE:]
        h = jnp.zeros((D_INNER, D_STATE), jnp.float32)
        ys = []
        for t in range(L):
            dA = jnp.exp(dtT[:, t:t + 1] * p["a"])
            dBx = (dtT[:, t:t + 1] * xc[:, t:t + 1]) @ bmT[:, t:t + 1].T
            h = dA * h + dBx
            ys.append(h @ cmT[:, t:t + 1] + p["d_skip"] * xc[:, t:t + 1])
        yT = jnp.concatenate(ys, axis=1) * _silu(resT)
        hidden = (embT + p["w_out_T"] @ yT).T                                # (L, H)
        mem = hidden[positions[b]]                                           # (M, H)
        outs.append(mem @ p["w_proj"] + p["b_proj"][0])
    return jnp.stack(outs)


# ==================================== parameters ====================================
def make_params(key):
    ks = jax.random.split(key, 10)

    def rnd(k, shape, scale):
        return (jax.random.normal(k, shape, jnp.float32) * scale).astype(jnp.float32)

    return {
        "embedding": rnd(ks[0], (V, H), 0.02),
        "w_in_x_T": rnd(ks[1], (D_INNER, H), 1.0 / np.sqrt(H)),
        "w_in_r_T": rnd(ks[2], (D_INNER, H), 1.0 / np.sqrt(H)),
        "conv_w": rnd(ks[3], (D_INNER, D_CONV), 1.0 / np.sqrt(D_CONV)),
        "conv_b": jnp.zeros((D_INNER, 1), jnp.float32),
        "w_x_T": rnd(ks[4], (DT_RANK + 2 * D_STATE, D_INNER), 1.0 / np.sqrt(D_INNER)),
        "w_dt_T": rnd(ks[5], (D_INNER, DT_RANK), 1.0 / np.sqrt(DT_RANK)),
        "b_dt": jnp.zeros((D_INNER, 1), jnp.float32),
        "a": -jnp.broadcast_to(jnp.arange(1, D_STATE + 1, dtype=jnp.float32),
                               (D_INNER, D_STATE)),
        "d_skip": jnp.ones((D_INNER, 1), jnp.float32),
        "w_out_T": rnd(ks[6], (H, D_INNER), 1.0 / np.sqrt(D_INNER)),
        "w_proj": rnd(ks[7], (H, D_OUT), 1.0 / np.sqrt(H)),   # memory_projection.weight^T
        "b_proj": rnd(ks[8], (1, D_OUT), 0.02),               # memory_projection.bias
    }


if __name__ == "__main__":
    key = jax.random.PRNGKey(0)
    pkey, ikey = jax.random.split(key)
    params = make_params(pkey)

    # deterministic token ids with exactly M_TOK <MEM> tokens per row
    input_ids = jax.random.randint(ikey, (B, L), 0, V - 1, dtype=jnp.int32)
    mem_pos = np.array([[1, 5, 9, 13], [2, 6, 10, 14]], dtype=np.int32)
    for b in range(B):
        input_ids = input_ids.at[b, mem_pos[b]].set(MEM_ID)

    # locate <MEM> tokens (dynamic nonzero done host-side; equal count per row,
    # matching the torch.stack requirement in the reference module)
    mask = np.asarray(input_ids == MEM_ID)
    counts = mask.sum(axis=1)
    assert (counts == M_TOK).all(), "each row must contain exactly M_TOK <MEM> tokens"
    positions = jnp.asarray(
        np.stack([np.nonzero(mask[b])[0] for b in range(B)]).astype(np.int32))  # (B, M_TOK)

    packed = pack_params(params)
    out = mamba_compressor_forward(input_ids, positions, packed)
    out = jax.block_until_ready(out)

    ref = reference_forward(input_ids, positions, params)
    np.testing.assert_allclose(np.asarray(out), np.asarray(ref), rtol=2e-2, atol=2e-3)

    assert out.shape == (B, M_TOK, D_OUT)
    print("KERNEL_OK")
</pallas_src>

<mosaic_0001>
module attributes {stable_mosaic.version = 11 : i64} {
  func.func @fused_kernel(%arg0: memref<40x1xi32, #tpu.memory_space<vmem>>, %arg1: memref<352x64xbf16, #tpu.memory_space<vmem>>, %arg2: memref<32x128xf32, #tpu.memory_space<vmem>>, %arg3: memref<8x64xf32, #tpu.memory_space<vmem>>, %arg4: memref<128x128xf32, #tpu.memory_space<vmem>>, %arg5: memref<128x128xf32, #tpu.memory_space<vmem>>, %arg6: memref<128x128xf32, #tpu.memory_space<vmem>>, %arg7: memref<16x128xf32, #tpu.memory_space<vmem>>) attributes {dimension_semantics = [], scalar_prefetch = 0 : i64, scratch_operands = 4 : i64, tpu.core_type = #tpu.core_type<tc>} {
    %c0 = arith.constant 0 : index
    %c0_0 = arith.constant 0 : index
    %0 = vector.load %arg0[%c0, %c0_0] : memref<40x1xi32, #tpu.memory_space<vmem>>, vector<32x1xi32>
    %c32 = arith.constant 32 : index
    %c0_1 = arith.constant 0 : index
    %1 = vector.load %arg0[%c32, %c0_1] : memref<40x1xi32, #tpu.memory_space<vmem>>, vector<8x1xi32>
    %c0_2 = arith.constant 0 : index
    %c0_3 = arith.constant 0 : index
    %2 = vector.load %arg1[%c0_2, %c0_3] : memref<352x64xbf16, #tpu.memory_space<vmem>>, vector<128x32xbf16>
    %c128 = arith.constant 128 : index
    %c0_4 = arith.constant 0 : index
    %3 = vector.load %arg1[%c128, %c0_4] : memref<352x64xbf16, #tpu.memory_space<vmem>>, vector<32x64xbf16>
    %c160 = arith.constant 160 : index
    %c0_5 = arith.constant 0 : index
    %4 = vector.load %arg1[%c160, %c0_5] : memref<352x64xbf16, #tpu.memory_space<vmem>>, vector<32x64xbf16>
    %c192 = arith.constant 192 : index
    %c0_6 = arith.constant 0 : index
    %5 = vector.load %arg1[%c192, %c0_6] : memref<352x64xbf16, #tpu.memory_space<vmem>>, vector<64x64xbf16>
    %c256 = arith.constant 256 : index
    %c0_7 = arith.constant 0 : index
    %6 = vector.load %arg1[%c256, %c0_7] : memref<352x64xbf16, #tpu.memory_space<vmem>>, vector<64x32xbf16>
    %c320 = arith.constant 320 : index
    %c0_8 = arith.constant 0 : index
    %7 = vector.load %arg1[%c320, %c0_8] : memref<352x64xbf16, #tpu.memory_space<vmem>>, vector<32x64xbf16>
    %c0_9 = arith.constant 0 : index
    %c0_10 = arith.constant 0 : index
    %8 = vector.load %arg2[%c0_9, %c0_10] : memref<32x128xf32, #tpu.memory_space<vmem>>, vector<4x64xf32>
    %c4 = arith.constant 4 : index
    %c0_11 = arith.constant 0 : index
    %9 = vector.load %arg2[%c4, %c0_11] : memref<32x128xf32, #tpu.memory_space<vmem>>, vector<1x64xf32>
    %c5 = arith.constant 5 : index
    %c0_12 = arith.constant 0 : index
    %10 = vector.load %arg2[%c5, %c0_12] : memref<32x128xf32, #tpu.memory_space<vmem>>, vector<1x64xf32>
    %c6 = arith.constant 6 : index
    %c0_13 = arith.constant 0 : index
    %11 = vector.load %arg2[%c6, %c0_13] : memref<32x128xf32, #tpu.memory_space<vmem>>, vector<1x64xf32>
    %c7 = arith.constant 7 : index
    %c0_14 = arith.constant 0 : index
    %12 = vector.load %arg2[%c7, %c0_14] : memref<32x128xf32, #tpu.memory_space<vmem>>, vector<1x64xf32>
    %c8 = arith.constant 8 : index
    %c0_15 = arith.constant 0 : index
    %13 = vector.load %arg2[%c8, %c0_15] : memref<32x128xf32, #tpu.memory_space<vmem>>, vector<16x64xf32>
    %c24 = arith.constant 24 : index
    %c0_16 = arith.constant 0 : index
    %14 = vector.load %arg2[%c24, %c0_16] : memref<32x128xf32, #tpu.memory_space<vmem>>, vector<8x128xf32>
    %15 = tpu.iota {dimensions = array<i32: 1>} : vector<32x128xi32>
    %16 = vector.broadcast %0 : vector<32x1xi32> to vector<32x128xi32>
    %17 = arith.cmpi eq, %15, %16 : vector<32x128xi32>
    %cst = arith.constant 1.000000e+00 : f32
    %cst_17 = arith.constant 0.000000e+00 : f32
    %18 = vector.broadcast %cst : f32 to vector<32x128xf32>
    %19 = vector.broadcast %cst_17 : f32 to vector<32x128xf32>
    %20 = arith.select %17, %18, %19 : vector<32x128xi1>, vector<32x128xf32>
    %21 = arith.truncf %20 : vector<32x128xf32> to vector<32x128xbf16>
    %cst_18 = arith.constant dense<0.000000e+00> : vector<32x32xf32>
    %22 = tpu.matmul %21, %2, %cst_18 {dimension_numbers = #tpu.dot_dimension_numbers<[1], [0], [0], [1], [0, 0, 1, 1], [], []>} : vector<32x128xbf16>, vector<128x32xbf16>, vector<32x32xf32> -> vector<32x32xf32>
    %23 = arith.truncf %22 : vector<32x32xf32> to vector<32x32xbf16>
    %cst_19 = arith.constant dense<0.000000e+00> : vector<32x64xf32>
    %24 = tpu.matmul %23, %3, %cst_19 {dimension_numbers = #tpu.dot_dimension_numbers<[1], [0], [0], [1], [0, 0, 1, 1], [], []>} : vector<32x32xbf16>, vector<32x64xbf16>, vector<32x64xf32> -> vector<32x64xf32>
    %cst_20 = arith.constant dense<0.000000e+00> : vector<32x64xf32>
    %25 = tpu.matmul %23, %4, %cst_20 {dimension_numbers = #tpu.dot_dimension_numbers<[1], [0], [0], [1], [0, 0, 1, 1], [], []>} : vector<32x32xbf16>, vector<32x64xbf16>, vector<32x64xf32> -> vector<32x64xf32>
    %26 = tpu.iota {dimensions = array<i32: 0>} : vector<32x64xi32>
    %c16_i32 = arith.constant 16 : i32
    %27 = vector.broadcast %c16_i32 : i32 to vector<32x64xi32>
    %28 = arith.remsi %26, %27 : vector<32x64xi32>
    %29 = vector.extract_strided_slice %8 {offsets = [3, 0], sizes = [1, 64], strides = [1, 1]} : vector<4x64xf32> to vector<1x64xf32>
    %30 = vector.broadcast %29 : vector<1x64xf32> to vector<32x64xf32>
    %31 = arith.mulf %30, %24 : vector<32x64xf32>
    %c1_i32 = arith.constant 1 : i32
    %32 = tpu.dynamic_rotate %24 by %c1_i32 dim 0 : vector<32x64xf32>, i32 -> vector<32x64xf32>
    %c1_i32_21 = arith.constant 1 : i32
    %33 = vector.broadcast %c1_i32_21 : i32 to vector<32x64xi32>
    %34 = arith.cmpi sge, %28, %33 : vector<32x64xi32>
    %cst_22 = arith.constant 0.000000e+00 : f32
    %35 = vector.broadcast %cst_22 : f32 to vector<32x64xf32>
    %36 = arith.select %34, %32, %35 : vector<32x64xi1>, vector<32x64xf32>
    %37 = vector.extract_strided_slice %8 {offsets = [2, 0], sizes = [1, 64], strides = [1, 1]} : vector<4x64xf32> to vector<1x64xf32>
    %38 = vector.broadcast %37 : vector<1x64xf32> to vector<32x64xf32>
    %39 = arith.mulf %38, %36 : vector<32x64xf32>
    %40 = arith.addf %31, %39 : vector<32x64xf32>
    %c2_i32 = arith.constant 2 : i32
    %41 = tpu.dynamic_rotate %24 by %c2_i32 dim 0 : vector<32x64xf32>, i32 -> vector<32x64xf32>
    %c2_i32_23 = arith.constant 2 : i32
    %42 = vector.broadcast %c2_i32_23 : i32 to vector<32x64xi32>
    %43 = arith.cmpi sge, %28, %42 : vector<32x64xi32>
    %cst_24 = arith.constant 0.000000e+00 : f32
    %44 = vector.broadcast %cst_24 : f32 to vector<32x64xf32>
    %45 = arith.select %43, %41, %44 : vector<32x64xi1>, vector<32x64xf32>
    %46 = vector.extract_strided_slice %8 {offsets = [1, 0], sizes = [1, 64], strides = [1, 1]} : vector<4x64xf32> to vector<1x64xf32>
    %47 = vector.broadcast %46 : vector<1x64xf32> to vector<32x64xf32>
    %48 = arith.mulf %47, %45 : vector<32x64xf32>
    %49 = arith.addf %40, %48 : vector<32x64xf32>
    %c3_i32 = arith.constant 3 : i32
    %50 = tpu.dynamic_rotate %24 by %c3_i32 dim 0 : vector<32x64xf32>, i32 -> vector<32x64xf32>
    %c3_i32_25 = arith.constant 3 : i32
    %51 = vector.broadcast %c3_i32_25 : i32 to vector<32x64xi32>
    %52 = arith.cmpi sge, %28, %51 : vector<32x64xi32>
    %cst_26 = arith.constant 0.000000e+00 : f32
    %53 = vector.broadcast %cst_26 : f32 to vector<32x64xf32>
    %54 = arith.select %52, %50, %53 : vector<32x64xi1>, vector<32x64xf32>
    %55 = vector.extract_strided_slice %8 {offsets = [0, 0], sizes = [1, 64], strides = [1, 1]} : vector<4x64xf32> to vector<1x64xf32>
    %56 = vector.broadcast %55 : vector<1x64xf32> to vector<32x64xf32>
    %57 = arith.mulf %56, %54 : vector<32x64xf32>
    %58 = arith.addf %49, %57 : vector<32x64xf32>
    %59 = vector.broadcast %9 : vector<1x64xf32> to vector<32x64xf32>
    %60 = arith.addf %58, %59 : vector<32x64xf32>
    %cst_27 = arith.constant 0.000000e+00 : f32
    %61 = vector.broadcast %cst_27 : f32 to vector<32x64xf32>
    %62 = arith.subf %61, %60 : vector<32x64xf32>
    %63 = math.exp %62 : vector<32x64xf32>
    %cst_28 = arith.constant 1.000000e+00 : f32
    %64 = vector.broadcast %cst_28 : f32 to vector<32x64xf32>
    %65 = arith.addf %64, %63 : vector<32x64xf32>
    %cst_29 = arith.constant 1.000000e+00 : f32
    %66 = vector.broadcast %cst_29 : f32 to vector<32x64xf32>
    %67 = arith.divf %66, %65 : vector<32x64xf32>
    %68 = arith.mulf %60, %67 : vector<32x64xf32>
    %69 = arith.truncf %68 : vector<32x64xf32> to vector<32x64xbf16>
    %cst_30 = arith.constant dense<0.000000e+00> : vector<32x64xf32>
    %70 = tpu.matmul %69, %5, %cst_30 {dimension_numbers = #tpu.dot_dimension_numbers<[1], [0], [0], [1], [0, 0, 1, 1], [], []>} : vector<32x64xbf16>, vector<64x64xbf16>, vector<32x64xf32> -> vector<32x64xf32>
    %71 = vector.broadcast %10 : vector<1x64xf32> to vector<32x64xf32>
    %72 = arith.addf %70, %71 : vector<32x64xf32>
    %cst_31 = arith.constant 0.000000e+00 : f32
    %73 = vector.broadcast %cst_31 : f32 to vector<32x64xf32>
    %74 = arith.maximumf %72, %73 : vector<32x64xf32>
    %75 = math.absf %72 : vector<32x64xf32>
    %cst_32 = arith.constant 0.000000e+00 : f32
    %76 = vector.broadcast %cst_32 : f32 to vector<32x64xf32>
    %77 = arith.subf %76, %75 : vector<32x64xf32>
    %78 = math.exp %77 : vector<32x64xf32>
    %cst_33 = arith.constant 1.000000e+00 : f32
    %79 = vector.broadcast %cst_33 : f32 to vector<32x64xf32>
    %80 = arith.addf %79, %78 : vector<32x64xf32>
    %81 = math.log %80 : vector<32x64xf32>
    %82 = arith.addf %74, %81 : vector<32x64xf32>
    %cst_34 = arith.constant dense<0.000000e+00> : vector<16x32xf32>
    %83 = tpu.matmul %13, %68, %cst_34 {dimension_numbers = #tpu.dot_dimension_numbers<[1], [1], [0], [0], [0, 0, 1, 0], [], []>} : vector<16x64xf32>, vector<32x64xf32>, vector<16x32xf32> -> vector<16x32xf32>
    %84 = vector.extract_strided_slice %83 {offsets = [0, 0], sizes = [8, 32], strides = [1, 1]} : vector<16x32xf32> to vector<8x32xf32>
    %85 = vector.extract_strided_slice %83 {offsets = [8, 0], sizes = [8, 32], strides = [1, 1]} : vector<16x32xf32> to vector<8x32xf32>
    %86 = arith.mulf %82, %68 : vector<32x64xf32>
    %87 = vector.extract_strided_slice %82 {offsets = [0, 0], sizes = [16, 64], strides = [1, 1]} : vector<32x64xf32> to vector<16x64xf32>
    %88 = vector.extract_strided_slice %82 {offsets = [16, 0], sizes = [16, 64], strides = [1, 1]} : vector<32x64xf32> to vector<16x64xf32>
    %89 = tpu.concatenate %87, %88 in 1 : vector<16x64xf32>, vector<16x64xf32> -> vector<16x128xf32>
    %90 = vector.extract_strided_slice %86 {offsets = [0, 0], sizes = [16, 64], strides = [1, 1]} : vector<32x64xf32> to vector<16x64xf32>
    %91 = vector.extract_strided_slice %86 {offsets = [16, 0], sizes = [16, 64], strides = [1, 1]} : vector<32x64xf32> to vector<16x64xf32>
    %92 = tpu.concatenate %90, %91 in 1 : vector<16x64xf32>, vector<16x64xf32> -> vector<16x128xf32>
    %93 = tpu.iota {dimensions = array<i32: 1>} : vector<1x128xi32>
    %c64_i32 = arith.constant 64 : i32
    %94 = vector.broadcast %c64_i32 : i32 to vector<1x128xi32>
    %95 = arith.cmpi slt, %93, %94 : vector<1x128xi32>
    %cst_35 = arith.constant 1.000000e+00 : f32
    %cst_36 = arith.constant 0.000000e+00 : f32
    %96 = vector.broadcast %cst_35 : f32 to vector<1x128xf32>
    %97 = vector.broadcast %cst_36 : f32 to vector<1x128xf32>
    %98 = arith.select %95, %96, %97 : vector<1x128xi1>, vector<1x128xf32>
    %cst_37 = arith.constant 1.000000e+00 : f32
    %99 = vector.broadcast %cst_37 : f32 to vector<1x128xf32>
    %100 = arith.subf %99, %98 : vector<1x128xf32>
    %101 = vector.extract_strided_slice %84 {offsets = [0, 0], sizes = [8, 1], strides = [1, 1]} : vector<8x32xf32> to vector<8x1xf32>
    %102 = vector.broadcast %101 : vector<8x1xf32> to vector<8x128xf32>
    %103 = vector.broadcast %98 : vector<1x128xf32> to vector<8x128xf32>
    %104 = arith.mulf %102, %103 : vector<8x128xf32>
    %105 = vector.extract_strided_slice %84 {offsets = [0, 16], sizes = [8, 1], strides = [1, 1]} : vector<8x32xf32> to vector<8x1xf32>
    %106 = vector.broadcast %105 : vector<8x1xf32> to vector<8x128xf32>
    %107 = vector.broadcast %100 : vector<1x128xf32> to vector<8x128xf32>
    %108 = arith.mulf %106, %107 : vector<8x128xf32>
    %109 = arith.addf %104, %108 : vector<8x128xf32>
    %110 = vector.extract_strided_slice %85 {offsets = [0, 0], sizes = [8, 1], strides = [1, 1]} : vector<8x32xf32> to vector<8x1xf32>
    %111 = vector.broadcast %110 : vector<8x1xf32> to vector<8x128xf32>
    %112 = vector.broadcast %98 : vector<1x128xf32> to vector<8x128xf32>
    %113 = arith.mulf %111, %112 : vector<8x128xf32>
    %114 = vector.extract_strided_slice %85 {offsets = [0, 16], sizes = [8, 1], strides = [1, 1]} : vector<8x32xf32> to vector<8x1xf32>
    %115 = vector.broadcast %114 : vector<8x1xf32> to vector<8x128xf32>
    %116 = vector.broadcast %100 : vector<1x128xf32> to vector<8x128xf32>
    %117 = arith.mulf %115, %116 : vector<8x128xf32>
    %118 = arith.addf %113, %117 : vector<8x128xf32>
    %119 = vector.extract_strided_slice %89 {offsets = [0, 0], sizes = [1, 128], strides = [1, 1]} : vector<16x128xf32> to vector<1x128xf32>
    %120 = vector.broadcast %119 : vector<1x128xf32> to vector<8x128xf32>
    %121 = arith.mulf %120, %14 : vector<8x128xf32>
    %122 = math.exp %121 : vector<8x128xf32>
    %c0_38 = arith.constant 0 : index
    %c0_39 = arith.constant 0 : index
    %123 = vector.load %arg4[%c0_38, %c0_39] : memref<128x128xf32, #tpu.memory_space<vmem>>, vector<8x128xf32>
    tpu.vector_store %arg4[%c0_38, %c0_39], %122 {strides = array<i32>} : memref<128x128xf32, #tpu.memory_space<vmem>>, vector<8x128xf32>,
    %124 = vector.extract_strided_slice %92 {offsets = [0, 0], sizes = [1, 128], strides = [1, 1]} : vector<16x128xf32> to vector<1x128xf32>
    %125 = vector.broadcast %124 : vector<1x128xf32> to vector<8x128xf32>
    %126 = arith.mulf %125, %109 : vector<8x128xf32>
    %c0_40 = arith.constant 0 : index
    %c0_41 = arith.constant 0 : index
    %127 = vector.load %arg5[%c0_40, %c0_41] : memref<128x128xf32, #tpu.memory_space<vmem>>, vector<8x128xf32>
    tpu.vector_store %arg5[%c0_40, %c0_41], %126 {strides = array<i32>} : memref<128x128xf32, #tpu.memory_space<vmem>>, vector<8x128xf32>,
    %c0_42 = arith.constant 0 : index
    %c0_43 = arith.constant 0 : index
    %128 = vector.load %arg6[%c0_42, %c0_43] : memref<128x128xf32, #tpu.memory_space<vmem>>, vector<8x128xf32>
    tpu.vector_store %arg6[%c0_42, %c0_43], %118 {strides = array<i32>} : memref<128x128xf32, #tpu.memory_space<vmem>>, vector<8x128xf32>,
    %129 = vector.extract_strided_slice %84 {offsets = [0, 1], sizes = [8, 1], strides = [1, 1]} : vector<8x32xf32> to vector<8x1xf32>
    %130 = vector.broadcast %129 : vector<8x1xf32> to vector<8x128xf32>
    %131 = vector.broadcast %98 : vector<1x128xf32> to vector<8x128xf32>
    %132 = arith.mulf %130, %131 : vector<8x128xf32>
    %133 = vector.extract_strided_slice %84 {offsets = [0, 17], sizes = [8, 1], strides = [1, 1]} : vector<8x32xf32> to vector<8x1xf32>
    %134 = vector.broadcast %133 : vector<8x1xf32> to vector<8x128xf32>
    %135 = vector.broadcast %100 : vector<1x128xf32> to vector<8x128xf32>
    %136 = arith.mulf %134, %135 : vector<8x128xf32>
    %137 = arith.addf %132, %136 : vector<8x128xf32>
    %138 = vector.extract_strided_slice %85 {offsets = [0, 1], sizes = [8, 1], strides = [1, 1]} : vector<8x32xf32> to vector<8x1xf32>
    %139 = vector.broadcast %138 : vector<8x1xf32> to vector<8x128xf32>
    %140 = vector.broadcast %98 : vector<1x128xf32> to vector<8x128xf32>
    %141 = arith.mulf %139, %140 : vector<8x128xf32>
    %142 = vector.extract_strided_slice %85 {offsets = [0, 17], sizes = [8, 1], strides = [1, 1]} : vector<8x32xf32> to vector<8x1xf32>
    %143 = vector.broadcast %142 : vector<8x1xf32> to vector<8x128xf32>
    %144 = vector.broadcast %100 : vector<1x128xf32> to vector<8x128xf32>
    %145 = arith.mulf %143, %144 : vector<8x128xf32>
    %146 = arith.addf %141, %145 : vector<8x128xf32>
    %147 = vector.extract_strided_slice %89 {offsets = [1, 0], sizes = [1, 128], strides = [1, 1]} : vector<16x128xf32> to vector<1x128xf32>
    %148 = vector.broadcast %147 : vector<1x128xf32> to vector<8x128xf32>
    %149 = arith.mulf %148, %14 : vector<8x128xf32>
    %150 = math.exp %149 : vector<8x128xf32>
    %c8_44 = arith.constant 8 : index
    %c0_45 = arith.constant 0 : index
    %151 = vector.load %arg4[%c8_44, %c0_45] : memref<128x128xf32, #tpu.memory_space<vmem>>, vector<8x128xf32>
    tpu.vector_store %arg4[%c8_44, %c0_45], %150 {strides = array<i32>} : memref<128x128xf32, #tpu.memory_space<vmem>>, vector<8x128xf32>,
    %152 = vector.extract_strided_slice %92 {offsets = [1, 0], sizes = [1, 128], strides = [1, 1]} : vector<16x128xf32> to vector<1x128xf32>
    %153 = vector.broadcast %152 : vector<1x128xf32> to vector<8x128xf32>
    %154 = arith.mulf %153, %137 : vector<8x128xf32>
    %c8_46 = arith.constant 8 : index
    %c0_47 = arith.constant 0 : index
    %155 = vector.load %arg5[%c8_46, %c0_47] : memref<128x128xf32, #tpu.memory_space<vmem>>, vector<8x128xf32>
    tpu.vector_store %arg5[%c8_46, %c0_47], %154 {strides = array<i32>} : memref<128x128xf32, #tpu.memory_space<vmem>>, vector<8x128xf32>,
    %c8_48 = arith.constant 8 : index
    %c0_49 = arith.constant 0 : index
    %156 = vector.load %arg6[%c8_48, %c0_49] : memref<128x128xf32, #tpu.memory_space<vmem>>, vector<8x128xf32>
    tpu.vector_store %arg6[%c8_48, %c0_49], %146 {strides = array<i32>} : memref<128x128xf32, #tpu.memory_space<vmem>>, vector<8x128xf32>,
    %157 = vector.extract_strided_slice %84 {offsets = [0, 2], sizes = [8, 1], strides = [1, 1]} : vector<8x32xf32> to vector<8x1xf32>
    %158 = vector.broadcast %157 : vector<8x1xf32> to vector<8x128xf32>
    %159 = vector.broadcast %98 : vector<1x128xf32> to vector<8x128xf32>
    %160 = arith.mulf %158, %159 : vector<8x128xf32>
    %161 = vector.extract_strided_slice %84 {offsets = [0, 18], sizes = [8, 1], strides = [1, 1]} : vector<8x32xf32> to vector<8x1xf32>
    %162 = vector.broadcast %161 : vector<8x1xf32> to vector<8x128xf32>
    %163 = vector.broadcast %100 : vector<1x128xf32> to vector<8x128xf32>
    %164 = arith.mulf %162, %163 : vector<8x128xf32>
    %165 = arith.addf %160, %164 : vector<8x128xf32>
    %166 = vector.extract_strided_slice %85 {offsets = [0, 2], sizes = [8, 1], strides = [1, 1]} : vector<8x32xf32> to vector<8x1xf32>
    %167 = vector.broadcast %166 : vector<8x1xf32> to vector<8x128xf32>
    %168 = vector.broadcast %98 : vector<1x128xf32> to vector<8x128xf32>
    %169 = arith.mulf %167, %168 : vector<8x128xf32>
    %170 = vector.extract_strided_slice %85 {offsets = [0, 18], sizes = [8, 1], strides = [1, 1]} : vector<8x32xf32> to vector<8x1xf32>
    %171 = vector.broadcast %170 : vector<8x1xf32> to vector<8x128xf32>
    %172 = vector.broadcast %100 : vector<1x128xf32> to vector<8x128xf32>
    %173 = arith.mulf %171, %172 : vector<8x128xf32>
    %174 = arith.addf %169, %173 : vector<8x128xf32>
    %175 = vector.extract_strided_slice %89 {offsets = [2, 0], sizes = [1, 128], strides = [1, 1]} : vector<16x128xf32> to vector<1x128xf32>
    %176 = vector.broadcast %175 : vector<1x128xf32> to vector<8x128xf32>
    %177 = arith.mulf %176, %14 : vector<8x128xf32>
    %178 = math.exp %177 : vector<8x128xf32>
    %c16 = arith.constant 16 : index
    %c0_50 = arith.constant 0 : index
    %179 = vector.load %arg4[%c16, %c0_50] : memref<128x128xf32, #tpu.memory_space<vmem>>, vector<8x128xf32>
    tpu.vector_store %arg4[%c16, %c0_50], %178 {strides = array<i32>} : memref<128x128xf32, #tpu.memory_space<vmem>>, vector<8x128xf32>,
    %180 = vector.extract_strided_slice %92 {offsets = [2, 0], sizes = [1, 128], strides = [1, 1]} : vector<16x128xf32> to vector<1x128xf32>
    %181 = vector.broadcast %180 : vector<1x128xf32> to vector<8x128xf32>
    %182 = arith.mulf %181, %165 : vector<8x128xf32>
    %c16_51 = arith.constant 16 : index
    %c0_52 = arith.constant 0 : index
    %183 = vector.load %arg5[%c16_51, %c0_52] : memref<128x128xf32, #tpu.memory_space<vmem>>, vector<8x128xf32>
    tpu.vector_store %arg5[%c16_51, %c0_52], %182 {strides = array<i32>} : memref<128x128xf32, #tpu.memory_space<vmem>>, vector<8x128xf32>,
    %c16_53 = arith.constant 16 : index
    %c0_54 = arith.constant 0 : index
    %184 = vector.load %arg6[%c16_53, %c0_54] : memref<128x128xf32, #tpu.memory_space<vmem>>, vector<8x128xf32>
    tpu.vector_store %arg6[%c16_53, %c0_54], %174 {strides = array<i32>} : memref<128x128xf32, #tpu.memory_space<vmem>>, vector<8x128xf32>,
    %185 = vector.extract_strided_slice %84 {offsets = [0, 3], sizes = [8, 1], strides = [1, 1]} : vector<8x32xf32> to vector<8x1xf32>
    %186 = vector.broadcast %185 : vector<8x1xf32> to vector<8x128xf32>
    %187 = vector.broadcast %98 : vector<1x128xf32> to vector<8x128xf32>
    %188 = arith.mulf %186, %187 : vector<8x128xf32>
    %189 = vector.extract_strided_slice %84 {offsets = [0, 19], sizes = [8, 1], strides = [1, 1]} : vector<8x32xf32> to vector<8x1xf32>
    %190 = vector.broadcast %189 : vector<8x1xf32> to vector<8x128xf32>
    %191 = vector.broadcast %100 : vector<1x128xf32> to vector<8x128xf32>
    %192 = arith.mulf %190, %191 : vector<8x128xf32>
    %193 = arith.addf %188, %192 : vector<8x128xf32>
    %194 = vector.extract_strided_slice %85 {offsets = [0, 3], sizes = [8, 1], strides = [1, 1]} : vector<8x32xf32> to vector<8x1xf32>
    %195 = vector.broadcast %194 : vector<8x1xf32> to vector<8x128xf32>
    %196 = vector.broadcast %98 : vector<1x128xf32> to vector<8x128xf32>
    %197 = arith.mulf %195, %196 : vector<8x128xf32>
    %198 = vector.extract_strided_slice %85 {offsets = [0, 19], sizes = [8, 1], strides = [1, 1]} : vector<8x32xf32> to vector<8x1xf32>
    %199 = vector.broadcast %198 : vector<8x1xf32> to vector<8x128xf32>
    %200 = vector.broadcast %100 : vector<1x128xf32> to vector<8x128xf32>
    %201 = arith.mulf %199, %200 : vector<8x128xf32>
    %202 = arith.addf %197, %201 : vector<8x128xf32>
    %203 = vector.extract_strided_slice %89 {offsets = [3, 0], sizes = [1, 128], strides = [1, 1]} : vector<16x128xf32> to vector<1x128xf32>
    %204 = vector.broadcast %203 : vector<1x128xf32> to vector<8x128xf32>
    %205 = arith.mulf %204, %14 : vector<8x128xf32>
    %206 = math.exp %205 : vector<8x128xf32>
    %c24_55 = arith.constant 24 : index
    %c0_56 = arith.constant 0 : index
    %207 = vector.load %arg4[%c24_55, %c0_56] : memref<128x128xf32, #tpu.memory_space<vmem>>, vector<8x128xf32>
    tpu.vector_store %arg4[%c24_55, %c0_56], %206 {strides = array<i32>} : memref<128x128xf32, #tpu.memory_space<vmem>>, vector<8x128xf32>,
    %208 = vector.extract_strided_slice %92 {offsets = [3, 0], sizes = [1, 128], strides = [1, 1]} : vector<16x128xf32> to vector<1x128xf32>
    %209 = vector.broadcast %208 : vector<1x128xf32> to vector<8x128xf32>
    %210 = arith.mulf %209, %193 : vector<8x128xf32>
    %c24_57 = arith.constant 24 : index
    %c0_58 = arith.constant 0 : index
    %211 = vector.load %arg5[%c24_57, %c0_58] : memref<128x128xf32, #tpu.memory_space<vmem>>, vector<8x128xf32>
    tpu.vector_store %arg5[%c24_57, %c0_58], %210 {strides = array<i32>} : memref<128x128xf32, #tpu.memory_space<vmem>>, vector<8x128xf32>,
    %c24_59 = arith.constant 24 : index
    %c0_60 = arith.constant 0 : index
    %212 = vector.load %arg6[%c24_59, %c0_60] : memref<128x128xf32, #tpu.memory_space<vmem>>, vector<8x128xf32>
    tpu.vector_store %arg6[%c24_59, %c0_60], %202 {strides = array<i32>} : memref<128x128xf32, #tpu.memory_space<vmem>>, vector<8x128xf32>,
    %213 = vector.extract_strided_slice %84 {offsets = [0, 4], sizes = [8, 1], strides = [1, 1]} : vector<8x32xf32> to vector<8x1xf32>
    %214 = vector.broadcast %213 : vector<8x1xf32> to vector<8x128xf32>
    %215 = vector.broadcast %98 : vector<1x128xf32> to vector<8x128xf32>
    %216 = arith.mulf %214, %215 : vector<8x128xf32>
    %217 = vector.extract_strided_slice %84 {offsets = [0, 20], sizes = [8, 1], strides = [1, 1]} : vector<8x32xf32> to vector<8x1xf32>
    %218 = vector.broadcast %217 : vector<8x1xf32> to vector<8x128xf32>
    %219 = vector.broadcast %100 : vector<1x128xf32> to vector<8x128xf32>
    %220 = arith.mulf %218, %219 : vector<8x128xf32>
    %221 = arith.addf %216, %220 : vector<8x128xf32>
    %222 = vector.extract_strided_slice %85 {offsets = [0, 4], sizes = [8, 1], strides = [1, 1]} : vector<8x32xf32> to vector<8x1xf32>
    %223 = vector.broadcast %222 : vector<8x1xf32> to vector<8x128xf32>
    %224 = vector.broadcast %98 : vector<1x128xf32> to vector<8x128xf32>
    %225 = arith.mulf %223, %224 : vector<8x128xf32>
    %226 = vector.extract_strided_slice %85 {offsets = [0, 20], sizes = [8, 1], strides = [1, 1]} : vector<8x32xf32> to vector<8x1xf32>
    %227 = vector.broadcast %226 : vector<8x1xf32> to vector<8x128xf32>
    %228 = vector.broadcast %100 : vector<1x128xf32> to vector<8x128xf32>
    %229 = arith.mulf %227, %228 : vector<8x128xf32>
    %230 = arith.addf %225, %229 : vector<8x128xf32>
    %231 = vector.extract_strided_slice %89 {offsets = [4, 0], sizes = [1, 128], strides = [1, 1]} : vector<16x128xf32> to vector<1x128xf32>
    %232 = vector.broadcast %231 : vector<1x128xf32> to vector<8x128xf32>
    %233 = arith.mulf %232, %14 : vector<8x128xf32>
    %234 = math.exp %233 : vector<8x128xf32>
    %c32_61 = arith.constant 32 : index
    %c0_62 = arith.constant 0 : index
    %235 = vector.load %arg4[%c32_61, %c0_62] : memref<128x128xf32, #tpu.memory_space<vmem>>, vector<8x128xf32>
    tpu.vector_store %arg4[%c32_61, %c0_62], %234 {strides = array<i32>} : memref<128x128xf32, #tpu.memory_space<vmem>>, vector<8x128xf32>,
    %236 = vector.extract_strided_slice %92 {offsets = [4, 0], sizes = [1, 128], strides = [1, 1]} : vector<16x128xf32> to vector<1x128xf32>
    %237 = vector.broadcast %236 : vector<1x128xf32> to vector<8x128xf32>
    %238 = arith.mulf %237, %221 : vector<8x128xf32>
    %c32_63 = arith.constant 32 : index
    %c0_64 = arith.constant 0 : index
    %239 = vector.load %arg5[%c32_63, %c0_64] : memref<128x128xf32, #tpu.memory_space<vmem>>, vector<8x128xf32>
    tpu.vector_store %arg5[%c32_63, %c0_64], %238 {strides = array<i32>} : memref<128x128xf32, #tpu.memory_space<vmem>>, vector<8x128xf32>,
    %c32_65 = arith.constant 32 : index
    %c0_66 = arith.constant 0 : index
    %240 = vector.load %arg6[%c32_65, %c0_66] : memref<128x128xf32, #tpu.memory_space<vmem>>, vector<8x128xf32>
    tpu.vector_store %arg6[%c32_65, %c0_66], %230 {strides = array<i32>} : memref<128x128xf32, #tpu.memory_space<vmem>>, vector<8x128xf32>,
    %241 = vector.extract_strided_slice %84 {offsets = [0, 5], sizes = [8, 1], strides = [1, 1]} : vector<8x32xf32> to vector<8x1xf32>
    %242 = vector.broadcast %241 : vector<8x1xf32> to vector<8x128xf32>
    %243 = vector.broadcast %98 : vector<1x128xf32> to vector<8x128xf32>
    %244 = arith.mulf %242, %243 : vector<8x128xf32>
    %245 = vector.extract_strided_slice %84 {offsets = [0, 21], sizes = [8, 1], strides = [1, 1]} : vector<8x32xf32> to vector<8x1xf32>
    %246 = vector.broadcast %245 : vector<8x1xf32> to vector<8x128xf32>
    %247 = vector.broadcast %100 : vector<1x128xf32> to vector<8x128xf32>
    %248 = arith.mulf %246, %247 : vector<8x128xf32>
    %249 = arith.addf %244, %248 : vector<8x128xf32>
    %250 = vector.extract_strided_slice %85 {offsets = [0, 5], sizes = [8, 1], strides = [1, 1]} : vector<8x32xf32> to vector<8x1xf32>
    %251 = vector.broadcast %250 : vector<8x1xf32> to vector<8x128xf32>
    %252 = vector.broadcast %98 : vector<1x128xf32> to vector<8x128xf32>
    %253 = arith.mulf %251, %252 : vector<8x128xf32>
    %254 = vector.extract_strided_slice %85 {offsets = [0, 21], sizes = [8, 1], strides = [1, 1]} : vector<8x32xf32> to vector<8x1xf32>
    %255 = vector.broadcast %254 : vector<8x1xf32> to vector<8x128xf32>
    %256 = vector.broadcast %100 : vector<1x128xf32> to vector<8x128xf32>
    %257 = arith.mulf %255, %256 : vector<8x128xf32>
    %258 = arith.addf %253, %257 : vector<8x128xf32>
    %259 = vector.extract_strided_slice %89 {offsets = [5, 0], sizes = [1, 128], strides = [1, 1]} : vector<16x128xf32> to vector<1x128xf32>
    %260 = vector.broadcast %259 : vector<1x128xf32> to vector<8x128xf32>
    %261 = arith.mulf %260, %14 : vector<8x128xf32>
    %262 = math.exp %261 : vector<8x128xf32>
    %c40 = arith.constant 40 : index
    %c0_67 = arith.constant 0 : index
    %263 = vector.load %arg4[%c40, %c0_67] : memref<128x128xf32, #tpu.memory_space<vmem>>, vector<8x128xf32>
    tpu.vector_store %arg4[%c40, %c0_67], %262 {strides = array<i32>} : memref<128x128xf32, #tpu.memory_space<vmem>>, vector<8x128xf32>,
    %264 = vector.extract_strided_slice %92 {offsets = [5, 0], sizes = [1, 128], strides = [1, 1]} : vector<16x128xf32> to vector<1x128xf32>
    %265 = vector.broadcast %264 : vector<1x128xf32> to vector<8x128xf32>
    %266 = arith.mulf %265, %249 : vector<8x128xf32>
    %c40_68 = arith.constant 40 : index
    %c0_69 = arith.constant 0 : index
    %267 = vector.load %arg5[%c40_68, %c0_69] : memref<128x128xf32, #tpu.memory_space<vmem>>, vector<8x128xf32>
    tpu.vector_store %arg5[%c40_68, %c0_69], %266 {strides = array<i32>} : memref<128x128xf32, #tpu.memory_space<vmem>>, vector<8x128xf32>,
    %c40_70 = arith.constant 40 : index
    %c0_71 = arith.constant 0 : index
    %268 = vector.load %arg6[%c40_70, %c0_71] : memref<128x128xf32, #tpu.memory_space<vmem>>, vector<8x128xf32>
    tpu.vector_store %arg6[%c40_70, %c0_71], %258 {strides = array<i32>} : memref<128x128xf32, #tpu.memory_space<vmem>>, vector<8x128xf32>,
    %269 = vector.extract_strided_slice %84 {offsets = [0, 6], sizes = [8, 1], strides = [1, 1]} : vector<8x32xf32> to vector<8x1xf32>
    %270 = vector.broadcast %269 : vector<8x1xf32> to vector<8x128xf32>
    %271 = vector.broadcast %98 : vector<1x128xf32> to vector<8x128xf32>
    %272 = arith.mulf %270, %271 : vector<8x128xf32>
    %273 = vector.extract_strided_slice %84 {offsets = [0, 22], sizes = [8, 1], strides = [1, 1]} : vector<8x32xf32> to vector<8x1xf32>
    %274 = vector.broadcast %273 : vector<8x1xf32> to vector<8x128xf32>
    %275 = vector.broadcast %100 : vector<1x128xf32> to vector<8x128xf32>
    %276 = arith.mulf %274, %275 : vector<8x128xf32>
    %277 = arith.addf %272, %276 : vector<8x128xf32>
    %278 = vector.extract_strided_slice %85 {offsets = [0, 6], sizes = [8, 1], strides = [1, 1]} : vector<8x32xf32> to vector<8x1xf32>
    %279 = vector.broadcast %278 : vector<8x1xf32> to vector<8x128xf32>
    %280 = vector.broadcast %98 : vector<1x128xf32> to vector<8x128xf32>
    %281 = arith.mulf %279, %280 : vector<8x128xf32>
    %282 = vector.extract_strided_slice %85 {offsets = [0, 22], sizes = [8, 1], strides = [1, 1]} : vector<8x32xf32> to vector<8x1xf32>
    %283 = vector.broadcast %282 : vector<8x1xf32> to vector<8x128xf32>
    %284 = vector.broadcast %100 : vector<1x128xf32> to vector<8x128xf32>
    %285 = arith.mulf %283, %284 : vector<8x128xf32>
    %286 = arith.addf %281, %285 : vector<8x128xf32>
    %287 = vector.extract_strided_slice %89 {offsets = [6, 0], sizes = [1, 128], strides = [1, 1]} : vector<16x128xf32> to vector<1x128xf32>
    %288 = vector.broadcast %287 : vector<1x128xf32> to vector<8x128xf32>
    %289 = arith.mulf %288, %14 : vector<8x128xf32>
    %290 = math.exp %289 : vector<8x128xf32>
    %c48 = arith.constant 48 : index
    %c0_72 = arith.constant 0 : index
    %291 = vector.load %arg4[%c48, %c0_72] : memref<128x128xf32, #tpu.memory_space<vmem>>, vector<8x128xf32>
    tpu.vector_store %arg4[%c48, %c0_72], %290 {strides = array<i32>} : memref<128x128xf32, #tpu.memory_space<vmem>>, vector<8x128xf32>,
    %292 = vector.extract_strided_slice %92 {offsets = [6, 0], sizes = [1, 128], strides = [1, 1]} : vector<16x128xf32> to vector<1x128xf32>
    %293 = vector.broadcast %292 : vector<1x128xf32> to vector<8x128xf32>
    %294 = arith.mulf %293, %277 : vector<8x128xf32>
    %c48_73 = arith.constant 48 : index
    %c0_74 = arith.constant 0 : index
    %295 = vector.load %arg5[%c48_73, %c0_74] : memref<128x128xf32, #tpu.memory_space<vmem>>, vector<8x128xf32>
    tpu.vector_store %arg5[%c48_73, %c0_74], %294 {strides = array<i32>} : memref<128x128xf32, #tpu.memory_space<vmem>>, vector<8x128xf32>,
    %c48_75 = arith.constant 48 : index
    %c0_76 = arith.constant 0 : index
    %296 = vector.load %arg6[%c48_75, %c0_76] : memref<128x128xf32, #tpu.memory_space<vmem>>, vector<8x128xf32>
    tpu.vector_store %arg6[%c48_75, %c0_76], %286 {strides = array<i32>} : memref<128x128xf32, #tpu.memory_space<vmem>>, vector<8x128xf32>,
    %297 = vector.extract_strided_slice %84 {offsets = [0, 7], sizes = [8, 1], strides = [1, 1]} : vector<8x32xf32> to vector<8x1xf32>
    %298 = vector.broadcast %297 : vector<8x1xf32> to vector<8x128xf32>
    %299 = vector.broadcast %98 : vector<1x128xf32> to vector<8x128xf32>
    %300 = arith.mulf %298, %299 : vector<8x128xf32>
    %301 = vector.extract_strided_slice %84 {offsets = [0, 23], sizes = [8, 1], strides = [1, 1]} : vector<8x32xf32> to vector<8x1xf32>
    %302 = vector.broadcast %301 : vector<8x1xf32> to vector<8x128xf32>
    %303 = vector.broadcast %100 : vector<1x128xf32> to vector<8x128xf32>
    %304 = arith.mulf %302, %303 : vector<8x128xf32>
    %305 = arith.addf %300, %304 : vector<8x128xf32>
    %306 = vector.extract_strided_slice %85 {offsets = [0, 7], sizes = [8, 1], strides = [1, 1]} : vector<8x32xf32> to vector<8x1xf32>
    %307 = vector.broadcast %306 : vector<8x1xf32> to vector<8x128xf32>
    %308 = vector.broadcast %98 : vector<1x128xf32> to vector<8x128xf32>
    %309 = arith.mulf %307, %308 : vector<8x128xf32>
    %310 = vector.extract_strided_slice %85 {offsets = [0, 23], sizes = [8, 1], strides = [1, 1]} : vector<8x32xf32> to vector<8x1xf32>
    %311 = vector.broadcast %310 : vector<8x1xf32> to vector<8x128xf32>
    %312 = vector.broadcast %100 : vector<1x128xf32> to vector<8x128xf32>
    %313 = arith.mulf %311, %312 : vector<8x128xf32>
    %314 = arith.addf %309, %313 : vector<8x128xf32>
    %315 = vector.extract_strided_slice %89 {offsets = [7, 0], sizes = [1, 128], strides = [1, 1]} : vector<16x128xf32> to vector<1x128xf32>
    %316 = vector.broadcast %315 : vector<1x128xf32> to vector<8x128xf32>
    %317 = arith.mulf %316, %14 : vector<8x128xf32>
    %318 = math.exp %317 : vector<8x128xf32>
    %c56 = arith.constant 56 : index
    %c0_77 = arith.constant 0 : index
    %319 = vector.load %arg4[%c56, %c0_77] : memref<128x128xf32, #tpu.memory_space<vmem>>, vector<8x128xf32>
    tpu.vector_store %arg4[%c56, %c0_77], %318 {strides = array<i32>} : memref<128x128xf32, #tpu.memory_space<vmem>>, vector<8x128xf32>,
    %320 = vector.extract_strided_slice %92 {offsets = [7, 0], sizes = [1, 128], strides = [1, 1]} : vector<16x128xf32> to vector<1x128xf32>
    %321 = vector.broadcast %320 : vector<1x128xf32> to vector<8x128xf32>
    %322 = arith.mulf %321, %305 : vector<8x128xf32>
    %c56_78 = arith.constant 56 : index
    %c0_79 = arith.constant 0 : index
    %323 = vector.load %arg5[%c56_78, %c0_79] : memref<128x128xf32, #tpu.memory_space<vmem>>, vector<8x128xf32>
    tpu.vector_store %arg5[%c56_78, %c0_79], %322 {strides = array<i32>} : memref<128x128xf32, #tpu.memory_space<vmem>>, vector<8x128xf32>,
    %c56_80 = arith.constant 56 : index
    %c0_81 = arith.constant 0 : index
    %324 = vector.load %arg6[%c56_80, %c0_81] : memref<128x128xf32, #tpu.memory_space<vmem>>, vector<8x128xf32>
    tpu.vector_store %arg6[%c56_80, %c0_81], %314 {strides = array<i32>} : memref<128x128xf32, #tpu.memory_space<vmem>>, vector<8x128xf32>,
    %325 = vector.extract_strided_slice %84 {offsets = [0, 8], sizes = [8, 1], strides = [1, 1]} : vector<8x32xf32> to vector<8x1xf32>
    %326 = vector.broadcast %325 : vector<8x1xf32> to vector<8x128xf32>
    %327 = vector.broadcast %98 : vector<1x128xf32> to vector<8x128xf32>
    %328 = arith.mulf %326, %327 : vector<8x128xf32>
    %329 = vector.extract_strided_slice %84 {offsets = [0, 24], sizes = [8, 1], strides = [1, 1]} : vector<8x32xf32> to vector<8x1xf32>
    %330 = vector.broadcast %329 : vector<8x1xf32> to vector<8x128xf32>
    %331 = vector.broadcast %100 : vector<1x128xf32> to vector<8x128xf32>
    %332 = arith.mulf %330, %331 : vector<8x128xf32>
    %333 = arith.addf %328, %332 : vector<8x128xf32>
    %334 = vector.extract_strided_slice %85 {offsets = [0, 8], sizes = [8, 1], strides = [1, 1]} : vector<8x32xf32> to vector<8x1xf32>
    %335 = vector.broadcast %334 : vector<8x1xf32> to vector<8x128xf32>
    %336 = vector.broadcast %98 : vector<1x128xf32> to vector<8x128xf32>
    %337 = arith.mulf %335, %336 : vector<8x128xf32>
    %338 = vector.extract_strided_slice %85 {offsets = [0, 24], sizes = [8, 1], strides = [1, 1]} : vector<8x32xf32> to vector<8x1xf32>
    %339 = vector.broadcast %338 : vector<8x1xf32> to vector<8x128xf32>
    %340 = vector.broadcast %100 : vector<1x128xf32> to vector<8x128xf32>
    %341 = arith.mulf %339, %340 : vector<8x128xf32>
    %342 = arith.addf %337, %341 : vector<8x128xf32>
    %343 = vector.extract_strided_slice %89 {offsets = [8, 0], sizes = [1, 128], strides = [1, 1]} : vector<16x128xf32> to vector<1x128xf32>
    %344 = vector.broadcast %343 : vector<1x128xf32> to vector<8x128xf32>
    %345 = arith.mulf %344, %14 : vector<8x128xf32>
    %346 = math.exp %345 : vector<8x128xf32>
    %c64 = arith.constant 64 : index
    %c0_82 = arith.constant 0 : index
    %347 = vector.load %arg4[%c64, %c0_82] : memref<128x128xf32, #tpu.memory_space<vmem>>, vector<8x128xf32>
    tpu.vector_store %arg4[%c64, %c0_82], %346 {strides = array<i32>} : memref<128x128xf32, #tpu.memory_space<vmem>>, vector<8x128xf32>,
    %348 = vector.extract_strided_slice %92 {offsets = [8, 0], sizes = [1, 128], strides = [1, 1]} : vector<16x128xf32> to vector<1x128xf32>
    %349 = vector.broadcast %348 : vector<1x128xf32> to vector<8x128xf32>
    %350 = arith.mulf %349, %333 : vector<8x128xf32>
    %c64_83 = arith.constant 64 : index
    %c0_84 = arith.constant 0 : index
    %351 = vector.load %arg5[%c64_83, %c0_84] : memref<128x128xf32, #tpu.memory_space<vmem>>, vector<8x128xf32>
    tpu.vector_store %arg5[%c64_83, %c0_84], %350 {strides = array<i32>} : memref<128x128xf32, #tpu.memory_space<vmem>>, vector<8x128xf32>,
    %c64_85 = arith.constant 64 : index
    %c0_86 = arith.constant 0 : index
    %352 = vector.load %arg6[%c64_85, %c0_86] : memref<128x128xf32, #tpu.memory_space<vmem>>, vector<8x128xf32>
    tpu.vector_store %arg6[%c64_85, %c0_86], %342 {strides = array<i32>} : memref<128x128xf32, #tpu.memory_space<vmem>>, vector<8x128xf32>,
    %353 = vector.extract_strided_slice %84 {offsets = [0, 9], sizes = [8, 1], strides = [1, 1]} : vector<8x32xf32> to vector<8x1xf32>
    %354 = vector.broadcast %353 : vector<8x1xf32> to vector<8x128xf32>
    %355 = vector.broadcast %98 : vector<1x128xf32> to vector<8x128xf32>
    %356 = arith.mulf %354, %355 : vector<8x128xf32>
    %357 = vector.extract_strided_slice %84 {offsets = [0, 25], sizes = [8, 1], strides = [1, 1]} : vector<8x32xf32> to vector<8x1xf32>
    %358 = vector.broadcast %357 : vector<8x1xf32> to vector<8x128xf32>
    %359 = vector.broadcast %100 : vector<1x128xf32> to vector<8x128xf32>
    %360 = arith.mulf %358, %359 : vector<8x128xf32>
    %361 = arith.addf %356, %360 : vector<8x128xf32>
    %362 = vector.extract_strided_slice %85 {offsets = [0, 9], sizes = [8, 1], strides = [1, 1]} : vector<8x32xf32> to vector<8x1xf32>
    %363 = vector.broadcast %362 : vector<8x1xf32> to vector<8x128xf32>
    %364 = vector.broadcast %98 : vector<1x128xf32> to vector<8x128xf32>
    %365 = arith.mulf %363, %364 : vector<8x128xf32>
    %366 = vector.extract_strided_slice %85 {offsets = [0, 25], sizes = [8, 1], strides = [1, 1]} : vector<8x32xf32> to vector<8x1xf32>
    %367 = vector.broadcast %366 : vector<8x1xf32> to vector<8x128xf32>
    %368 = vector.broadcast %100 : vector<1x128xf32> to vector<8x128xf32>
    %369 = arith.mulf %367, %368 : vector<8x128xf32>
    %370 = arith.addf %365, %369 : vector<8x128xf32>
    %371 = vector.extract_strided_slice %89 {offsets = [9, 0], sizes = [1, 128], strides = [1, 1]} : vector<16x128xf32> to vector<1x128xf32>
    %372 = vector.broadcast %371 : vector<1x128xf32> to vector<8x128xf32>
    %373 = arith.mulf %372, %14 : vector<8x128xf32>
    %374 = math.exp %373 : vector<8x128xf32>
    %c72 = arith.constant 72 : index
    %c0_87 = arith.constant 0 : index
    %375 = vector.load %arg4[%c72, %c0_87] : memref<128x128xf32, #tpu.memory_space<vmem>>, vector<8x128xf32>
    tpu.vector_store %arg4[%c72, %c0_87], %374 {strides = array<i32>} : memref<128x128xf32, #tpu.memory_space<vmem>>, vector<8x128xf32>,
    %376 = vector.extract_strided_slice %92 {offsets = [9, 0], sizes = [1, 128], strides = [1, 1]} : vector<16x128xf32> to vector<1x128xf32>
    %377 = vector.broadcast %376 : vector<1x128xf32> to vector<8x128xf32>
    %378 = arith.mulf %377, %361 : vector<8x128xf32>
    %c72_88 = arith.constant 72 : index
    %c0_89 = arith.constant 0 : index
    %379 = vector.load %arg5[%c72_88, %c0_89] : memref<128x128xf32, #tpu.memory_space<vmem>>, vector<8x128xf32>
    tpu.vector_store %arg5[%c72_88, %c0_89], %378 {strides = array<i32>} : memref<128x128xf32, #tpu.memory_space<vmem>>, vector<8x128xf32>,
    %c72_90 = arith.constant 72 : index
    %c0_91 = arith.constant 0 : index
    %380 = vector.load %arg6[%c72_90, %c0_91] : memref<128x128xf32, #tpu.memory_space<vmem>>, vector<8x128xf32>
    tpu.vector_store %arg6[%c72_90, %c0_91], %370 {strides = array<i32>} : memref<128x128xf32, #tpu.memory_space<vmem>>, vector<8x128xf32>,
    %381 = vector.extract_strided_slice %84 {offsets = [0, 10], sizes = [8, 1], strides = [1, 1]} : vector<8x32xf32> to vector<8x1xf32>
    %382 = vector.broadcast %381 : vector<8x1xf32> to vector<8x128xf32>
    %383 = vector.broadcast %98 : vector<1x128xf32> to vector<8x128xf32>
    %384 = arith.mulf %382, %383 : vector<8x128xf32>
    %385 = vector.extract_strided_slice %84 {offsets = [0, 26], sizes = [8, 1], strides = [1, 1]} : vector<8x32xf32> to vector<8x1xf32>
    %386 = vector.broadcast %385 : vector<8x1xf32> to vector<8x128xf32>
    %387 = vector.broadcast %100 : vector<1x128xf32> to vector<8x128xf32>
    %388 = arith.mulf %386, %387 : vector<8x128xf32>
    %389 = arith.addf %384, %388 : vector<8x128xf32>
    %390 = vector.extract_strided_slice %85 {offsets = [0, 10], sizes = [8, 1], strides = [1, 1]} : vector<8x32xf32> to vector<8x1xf32>
    %391 = vector.broadcast %390 : vector<8x1xf32> to vector<8x128xf32>
    %392 = vector.broadcast %98 : vector<1x128xf32> to vector<8x128xf32>
    %393 = arith.mulf %391, %392 : vector<8x128xf32>
    %394 = vector.extract_strided_slice %85 {offsets = [0, 26], sizes = [8, 1], strides = [1, 1]} : vector<8x32xf32> to vector<8x1xf32>
    %395 = vector.broadcast %394 : vector<8x1xf32> to vector<8x128xf32>
    %396 = vector.broadcast %100 : vector<1x128xf32> to vector<8x128xf32>
    %397 = arith.mulf %395, %396 : vector<8x128xf32>
    %398 = arith.addf %393, %397 : vector<8x128xf32>
    %399 = vector.extract_strided_slice %89 {offsets = [10, 0], sizes = [1, 128], strides = [1, 1]} : vector<16x128xf32> to vector<1x128xf32>
    %400 = vector.broadcast %399 : vector<1x128xf32> to vector<8x128xf32>
    %401 = arith.mulf %400, %14 : vector<8x128xf32>
    %402 = math.exp %401 : vector<8x128xf32>
    %c80 = arith.constant 80 : index
    %c0_92 = arith.constant 0 : index
    %403 = vector.load %arg4[%c80, %c0_92] : memref<128x128xf32, #tpu.memory_space<vmem>>, vector<8x128xf32>
    tpu.vector_store %arg4[%c80, %c0_92], %402 {strides = array<i32>} : memref<128x128xf32, #tpu.memory_space<vmem>>, vector<8x128xf32>,
    %404 = vector.extract_strided_slice %92 {offsets = [10, 0], sizes = [1, 128], strides = [1, 1]} : vector<16x128xf32> to vector<1x128xf32>
    %405 = vector.broadcast %404 : vector<1x128xf32> to vector<8x128xf32>
    %406 = arith.mulf %405, %389 : vector<8x128xf32>
    %c80_93 = arith.constant 80 : index
    %c0_94 = arith.constant 0 : index
    %407 = vector.load %arg5[%c80_93, %c0_94] : memref<128x128xf32, #tpu.memory_space<vmem>>, vector<8x128xf32>
    tpu.vector_store %arg5[%c80_93, %c0_94], %406 {strides = array<i32>} : memref<128x128xf32, #tpu.memory_space<vmem>>, vector<8x128xf32>,
    %c80_95 = arith.constant 80 : index
    %c0_96 = arith.constant 0 : index
    %408 = vector.load %arg6[%c80_95, %c0_96] : memref<128x128xf32, #tpu.memory_space<vmem>>, vector<8x128xf32>
    tpu.vector_store %arg6[%c80_95, %c0_96], %398 {strides = array<i32>} : memref<128x128xf32, #tpu.memory_space<vmem>>, vector<8x128xf32>,
    %409 = vector.extract_strided_slice %84 {offsets = [0, 11], sizes = [8, 1], strides = [1, 1]} : vector<8x32xf32> to vector<8x1xf32>
    %410 = vector.broadcast %409 : vector<8x1xf32> to vector<8x128xf32>
    %411 = vector.broadcast %98 : vector<1x128xf32> to vector<8x128xf32>
    %412 = arith.mulf %410, %411 : vector<8x128xf32>
    %413 = vector.extract_strided_slice %84 {offsets = [0, 27], sizes = [8, 1], strides = [1, 1]} : vector<8x32xf32> to vector<8x1xf32>
    %414 = vector.broadcast %413 : vector<8x1xf32> to vector<8x128xf32>
    %415 = vector.broadcast %100 : vector<1x128xf32> to vector<8x128xf32>
    %416 = arith.mulf %414, %415 : vector<8x128xf32>
    %417 = arith.addf %412, %416 : vector<8x128xf32>
    %418 = vector.extract_strided_slice %85 {offsets = [0, 11], sizes = [8, 1], strides = [1, 1]} : vector<8x32xf32> to vector<8x1xf32>
    %419 = vector.broadcast %418 : vector<8x1xf32> to vector<8x128xf32>
    %420 = vector.broadcast %98 : vector<1x128xf32> to vector<8x128xf32>
    %421 = arith.mulf %419, %420 : vector<8x128xf32>
    %422 = vector.extract_strided_slice %85 {offsets = [0, 27], sizes = [8, 1], strides = [1, 1]} : vector<8x32xf32> to vector<8x1xf32>
    %423 = vector.broadcast %422 : vector<8x1xf32> to vector<8x128xf32>
    %424 = vector.broadcast %100 : vector<1x128xf32> to vector<8x128xf32>
    %425 = arith.mulf %423, %424 : vector<8x128xf32>
    %426 = arith.addf %421, %425 : vector<8x128xf32>
    %427 = vector.extract_strided_slice %89 {offsets = [11, 0], sizes = [1, 128], strides = [1, 1]} : vector<16x128xf32> to vector<1x128xf32>
    %428 = vector.broadcast %427 : vector<1x128xf32> to vector<8x128xf32>
    %429 = arith.mulf %428, %14 : vector<8x128xf32>
    %430 = math.exp %429 : vector<8x128xf32>
    %c88 = arith.constant 88 : index
    %c0_97 = arith.constant 0 : index
    %431 = vector.load %arg4[%c88, %c0_97] : memref<128x128xf32, #tpu.memory_space<vmem>>, vector<8x128xf32>
    tpu.vector_store %arg4[%c88, %c0_97], %430 {strides = array<i32>} : memref<128x128xf32, #tpu.memory_space<vmem>>, vector<8x128xf32>,
    %432 = vector.extract_strided_slice %92 {offsets = [11, 0], sizes = [1, 128], strides = [1, 1]} : vector<16x128xf32> to vector<1x128xf32>
    %433 = vector.broadcast %432 : vector<1x128xf32> to vector<8x128xf32>
    %434 = arith.mulf %433, %417 : vector<8x128xf32>
    %c88_98 = arith.constant 88 : index
    %c0_99 = arith.constant 0 : index
    %435 = vector.load %arg5[%c88_98, %c0_99] : memref<128x128xf32, #tpu.memory_space<vmem>>, vector<8x128xf32>
    tpu.vector_store %arg5[%c88_98, %c0_99], %434 {strides = array<i32>} : memref<128x128xf32, #tpu.memory_space<vmem>>, vector<8x128xf32>,
    %c88_100 = arith.constant 88 : index
    %c0_101 = arith.constant 0 : index
    %436 = vector.load %arg6[%c88_100, %c0_101] : memref<128x128xf32, #tpu.memory_space<vmem>>, vector<8x128xf32>
    tpu.vector_store %arg6[%c88_100, %c0_101], %426 {strides = array<i32>} : memref<128x128xf32, #tpu.memory_space<vmem>>, vector<8x128xf32>,
    %437 = vector.extract_strided_slice %84 {offsets = [0, 12], sizes = [8, 1], strides = [1, 1]} : vector<8x32xf32> to vector<8x1xf32>
    %438 = vector.broadcast %437 : vector<8x1xf32> to vector<8x128xf32>
    %439 = vector.broadcast %98 : vector<1x128xf32> to vector<8x128xf32>
    %440 = arith.mulf %438, %439 : vector<8x128xf32>
    %441 = vector.extract_strided_slice %84 {offsets = [0, 28], sizes = [8, 1], strides = [1, 1]} : vector<8x32xf32> to vector<8x1xf32>
    %442 = vector.broadcast %441 : vector<8x1xf32> to vector<8x128xf32>
    %443 = vector.broadcast %100 : vector<1x128xf32> to vector<8x128xf32>
    %444 = arith.mulf %442, %443 : vector<8x128xf32>
    %445 = arith.addf %440, %444 : vector<8x128xf32>
    %446 = vector.extract_strided_slice %85 {offsets = [0, 12], sizes = [8, 1], strides = [1, 1]} : vector<8x32xf32> to vector<8x1xf32>
    %447 = vector.broadcast %446 : vector<8x1xf32> to vector<8x128xf32>
    %448 = vector.broadcast %98 : vector<1x128xf32> to vector<8x128xf32>
    %449 = arith.mulf %447, %448 : vector<8x128xf32>
    %450 = vector.extract_strided_slice %85 {offsets = [0, 28], sizes = [8, 1], strides = [1, 1]} : vector<8x32xf32> to vector<8x1xf32>
    %451 = vector.broadcast %450 : vector<8x1xf32> to vector<8x128xf32>
    %452 = vector.broadcast %100 : vector<1x128xf32> to vector<8x128xf32>
    %453 = arith.mulf %451, %452 : vector<8x128xf32>
    %454 = arith.addf %449, %453 : vector<8x128xf32>
    %455 = vector.extract_strided_slice %89 {offsets = [12, 0], sizes = [1, 128], strides = [1, 1]} : vector<16x128xf32> to vector<1x128xf32>
    %456 = vector.broadcast %455 : vector<1x128xf32> to vector<8x128xf32>
    %457 = arith.mulf %456, %14 : vector<8x128xf32>
    %458 = math.exp %457 : vector<8x128xf32>
    %c96 = arith.constant 96 : index
    %c0_102 = arith.constant 0 : index
    %459 = vector.load %arg4[%c96, %c0_102] : memref<128x128xf32, #tpu.memory_space<vmem>>, vector<8x128xf32>
    tpu.vector_store %arg4[%c96, %c0_102], %458 {strides = array<i32>} : memref<128x128xf32, #tpu.memory_space<vmem>>, vector<8x128xf32>,
    %460 = vector.extract_strided_slice %92 {offsets = [12, 0], sizes = [1, 128], strides = [1, 1]} : vector<16x128xf32> to vector<1x128xf32>
    %461 = vector.broadcast %460 : vector<1x128xf32> to vector<8x128xf32>
    %462 = arith.mulf %461, %445 : vector<8x128xf32>
    %c96_103 = arith.constant 96 : index
    %c0_104 = arith.constant 0 : index
    %463 = vector.load %arg5[%c96_103, %c0_104] : memref<128x128xf32, #tpu.memory_space<vmem>>, vector<8x128xf32>
    tpu.vector_store %arg5[%c96_103, %c0_104], %462 {strides = array<i32>} : memref<128x128xf32, #tpu.memory_space<vmem>>, vector<8x128xf32>,
    %c96_105 = arith.constant 96 : index
    %c0_106 = arith.constant 0 : index
    %464 = vector.load %arg6[%c96_105, %c0_106] : memref<128x128xf32, #tpu.memory_space<vmem>>, vector<8x128xf32>
    tpu.vector_store %arg6[%c96_105, %c0_106], %454 {strides = array<i32>} : memref<128x128xf32, #tpu.memory_space<vmem>>, vector<8x128xf32>,
    %465 = vector.extract_strided_slice %84 {offsets = [0, 13], sizes = [8, 1], strides = [1, 1]} : vector<8x32xf32> to vector<8x1xf32>
    %466 = vector.broadcast %465 : vector<8x1xf32> to vector<8x128xf32>
    %467 = vector.broadcast %98 : vector<1x128xf32> to vector<8x128xf32>
    %468 = arith.mulf %466, %467 : vector<8x128xf32>
    %469 = vector.extract_strided_slice %84 {offsets = [0, 29], sizes = [8, 1], strides = [1, 1]} : vector<8x32xf32> to vector<8x1xf32>
    %470 = vector.broadcast %469 : vector<8x1xf32> to vector<8x128xf32>
    %471 = vector.broadcast %100 : vector<1x128xf32> to vector<8x128xf32>
    %472 = arith.mulf %470, %471 : vector<8x128xf32>
    %473 = arith.addf %468, %472 : vector<8x128xf32>
    %474 = vector.extract_strided_slice %85 {offsets = [0, 13], sizes = [8, 1], strides = [1, 1]} : vector<8x32xf32> to vector<8x1xf32>
    %475 = vector.broadcast %474 : vector<8x1xf32> to vector<8x128xf32>
    %476 = vector.broadcast %98 : vector<1x128xf32> to vector<8x128xf32>
    %477 = arith.mulf %475, %476 : vector<8x128xf32>
    %478 = vector.extract_strided_slice %85 {offsets = [0, 29], sizes = [8, 1], strides = [1, 1]} : vector<8x32xf32> to vector<8x1xf32>
    %479 = vector.broadcast %478 : vector<8x1xf32> to vector<8x128xf32>
    %480 = vector.broadcast %100 : vector<1x128xf32> to vector<8x128xf32>
    %481 = arith.mulf %479, %480 : vector<8x128xf32>
    %482 = arith.addf %477, %481 : vector<8x128xf32>
    %483 = vector.extract_strided_slice %89 {offsets = [13, 0], sizes = [1, 128], strides = [1, 1]} : vector<16x128xf32> to vector<1x128xf32>
    %484 = vector.broadcast %483 : vector<1x128xf32> to vector<8x128xf32>
    %485 = arith.mulf %484, %14 : vector<8x128xf32>
    %486 = math.exp %485 : vector<8x128xf32>
    %c104 = arith.constant 104 : index
    %c0_107 = arith.constant 0 : index
    %487 = vector.load %arg4[%c104, %c0_107] : memref<128x128xf32, #tpu.memory_space<vmem>>, vector<8x128xf32>
    tpu.vector_store %arg4[%c104, %c0_107], %486 {strides = array<i32>} : memref<128x128xf32, #tpu.memory_space<vmem>>, vector<8x128xf32>,
    %488 = vector.extract_strided_slice %92 {offsets = [13, 0], sizes = [1, 128], strides = [1, 1]} : vector<16x128xf32> to vector<1x128xf32>
    %489 = vector.broadcast %488 : vector<1x128xf32> to vector<8x128xf32>
    %490 = arith.mulf %489, %473 : vector<8x128xf32>
    %c104_108 = arith.constant 104 : index
    %c0_109 = arith.constant 0 : index
    %491 = vector.load %arg5[%c104_108, %c0_109] : memref<128x128xf32, #tpu.memory_space<vmem>>, vector<8x128xf32>
    tpu.vector_store %arg5[%c104_108, %c0_109], %490 {strides = array<i32>} : memref<128x128xf32, #tpu.memory_space<vmem>>, vector<8x128xf32>,
    %c104_110 = arith.constant 104 : index
    %c0_111 = arith.constant 0 : index
    %492 = vector.load %arg6[%c104_110, %c0_111] : memref<128x128xf32, #tpu.memory_space<vmem>>, vector<8x128xf32>
    tpu.vector_store %arg6[%c104_110, %c0_111], %482 {strides = array<i32>} : memref<128x128xf32, #tpu.memory_space<vmem>>, vector<8x128xf32>,
    %493 = vector.extract_strided_slice %84 {offsets = [0, 14], sizes = [8, 1], strides = [1, 1]} : vector<8x32xf32> to vector<8x1xf32>
    %494 = vector.broadcast %493 : vector<8x1xf32> to vector<8x128xf32>
    %495 = vector.broadcast %98 : vector<1x128xf32> to vector<8x128xf32>
    %496 = arith.mulf %494, %495 : vector<8x128xf32>
    %497 = vector.extract_strided_slice %84 {offsets = [0, 30], sizes = [8, 1], strides = [1, 1]} : vector<8x32xf32> to vector<8x1xf32>
    %498 = vector.broadcast %497 : vector<8x1xf32> to vector<8x128xf32>
    %499 = vector.broadcast %100 : vector<1x128xf32> to vector<8x128xf32>
    %500 = arith.mulf %498, %499 : vector<8x128xf32>
    %501 = arith.addf %496, %500 : vector<8x128xf32>
    %502 = vector.extract_strided_slice %85 {offsets = [0, 14], sizes = [8, 1], strides = [1, 1]} : vector<8x32xf32> to vector<8x1xf32>
    %503 = vector.broadcast %502 : vector<8x1xf32> to vector<8x128xf32>
    %504 = vector.broadcast %98 : vector<1x128xf32> to vector<8x128xf32>
    %505 = arith.mulf %503, %504 : vector<8x128xf32>
    %506 = vector.extract_strided_slice %85 {offsets = [0, 30], sizes = [8, 1], strides = [1, 1]} : vector<8x32xf32> to vector<8x1xf32>
    %507 = vector.broadcast %506 : vector<8x1xf32> to vector<8x128xf32>
    %508 = vector.broadcast %100 : vector<1x128xf32> to vector<8x128xf32>
    %509 = arith.mulf %507, %508 : vector<8x128xf32>
    %510 = arith.addf %505, %509 : vector<8x128xf32>
    %511 = vector.extract_strided_slice %89 {offsets = [14, 0], sizes = [1, 128], strides = [1, 1]} : vector<16x128xf32> to vector<1x128xf32>
    %512 = vector.broadcast %511 : vector<1x128xf32> to vector<8x128xf32>
    %513 = arith.mulf %512, %14 : vector<8x128xf32>
    %514 = math.exp %513 : vector<8x128xf32>
    %c112 = arith.constant 112 : index
    %c0_112 = arith.constant 0 : index
    %515 = vector.load %arg4[%c112, %c0_112] : memref<128x128xf32, #tpu.memory_space<vmem>>, vector<8x128xf32>
    tpu.vector_store %arg4[%c112, %c0_112], %514 {strides = array<i32>} : memref<128x128xf32, #tpu.memory_space<vmem>>, vector<8x128xf32>,
    %516 = vector.extract_strided_slice %92 {offsets = [14, 0], sizes = [1, 128], strides = [1, 1]} : vector<16x128xf32> to vector<1x128xf32>
    %517 = vector.broadcast %516 : vector<1x128xf32> to vector<8x128xf32>
    %518 = arith.mulf %517, %501 : vector<8x128xf32>
    %c112_113 = arith.constant 112 : index
    %c0_114 = arith.constant 0 : index
    %519 = vector.load %arg5[%c112_113, %c0_114] : memref<128x128xf32, #tpu.memory_space<vmem>>, vector<8x128xf32>
    tpu.vector_store %arg5[%c112_113, %c0_114], %518 {strides = array<i32>} : memref<128x128xf32, #tpu.memory_space<vmem>>, vector<8x128xf32>,
    %c112_115 = arith.constant 112 : index
    %c0_116 = arith.constant 0 : index
    %520 = vector.load %arg6[%c112_115, %c0_116] : memref<128x128xf32, #tpu.memory_space<vmem>>, vector<8x128xf32>
    tpu.vector_store %arg6[%c112_115, %c0_116], %510 {strides = array<i32>} : memref<128x128xf32, #tpu.memory_space<vmem>>, vector<8x128xf32>,
    %521 = vector.extract_strided_slice %84 {offsets = [0, 15], sizes = [8, 1], strides = [1, 1]} : vector<8x32xf32> to vector<8x1xf32>
    %522 = vector.broadcast %521 : vector<8x1xf32> to vector<8x128xf32>
    %523 = vector.broadcast %98 : vector<1x128xf32> to vector<8x128xf32>
    %524 = arith.mulf %522, %523 : vector<8x128xf32>
    %525 = vector.extract_strided_slice %84 {offsets = [0, 31], sizes = [8, 1], strides = [1, 1]} : vector<8x32xf32> to vector<8x1xf32>
    %526 = vector.broadcast %525 : vector<8x1xf32> to vector<8x128xf32>
    %527 = vector.broadcast %100 : vector<1x128xf32> to vector<8x128xf32>
    %528 = arith.mulf %526, %527 : vector<8x128xf32>
    %529 = arith.addf %524, %528 : vector<8x128xf32>
    %530 = vector.extract_strided_slice %85 {offsets = [0, 15], sizes = [8, 1], strides = [1, 1]} : vector<8x32xf32> to vector<8x1xf32>
    %531 = vector.broadcast %530 : vector<8x1xf32> to vector<8x128xf32>
    %532 = vector.broadcast %98 : vector<1x128xf32> to vector<8x128xf32>
    %533 = arith.mulf %531, %532 : vector<8x128xf32>
    %534 = vector.extract_strided_slice %85 {offsets = [0, 31], sizes = [8, 1], strides = [1, 1]} : vector<8x32xf32> to vector<8x1xf32>
    %535 = vector.broadcast %534 : vector<8x1xf32> to vector<8x128xf32>
    %536 = vector.broadcast %100 : vector<1x128xf32> to vector<8x128xf32>
    %537 = arith.mulf %535, %536 : vector<8x128xf32>
    %538 = arith.addf %533, %537 : vector<8x128xf32>
    %539 = vector.extract_strided_slice %89 {offsets = [15, 0], sizes = [1, 128], strides = [1, 1]} : vector<16x128xf32> to vector<1x128xf32>
    %540 = vector.broadcast %539 : vector<1x128xf32> to vector<8x128xf32>
    %541 = arith.mulf %540, %14 : vector<8x128xf32>
    %542 = math.exp %541 : vector<8x128xf32>
    %c120 = arith.constant 120 : index
    %c0_117 = arith.constant 0 : index
    %543 = vector.load %arg4[%c120, %c0_117] : memref<128x128xf32, #tpu.memory_space<vmem>>, vector<8x128xf32>
    tpu.vector_store %arg4[%c120, %c0_117], %542 {strides = array<i32>} : memref<128x128xf32, #tpu.memory_space<vmem>>, vector<8x128xf32>,
    %544 = vector.extract_strided_slice %92 {offsets = [15, 0], sizes = [1, 128], strides = [1, 1]} : vector<16x128xf32> to vector<1x128xf32>
    %545 = vector.broadcast %544 : vector<1x128xf32> to vector<8x128xf32>
    %546 = arith.mulf %545, %529 : vector<8x128xf32>
    %c120_118 = arith.constant 120 : index
    %c0_119 = arith.constant 0 : index
    %547 = vector.load %arg5[%c120_118, %c0_119] : memref<128x128xf32, #tpu.memory_space<vmem>>, vector<8x128xf32>
    tpu.vector_store %arg5[%c120_118, %c0_119], %546 {strides = array<i32>} : memref<128x128xf32, #tpu.memory_space<vmem>>, vector<8x128xf32>,
    %c120_120 = arith.constant 120 : index
    %c0_121 = arith.constant 0 : index
    %548 = vector.load %arg6[%c120_120, %c0_121] : memref<128x128xf32, #tpu.memory_space<vmem>>, vector<8x128xf32>
    tpu.vector_store %arg6[%c120_120, %c0_121], %538 {strides = array<i32>} : memref<128x128xf32, #tpu.memory_space<vmem>>, vector<8x128xf32>,
    %cst_122 = arith.constant 0.000000e+00 : f32
    %549 = vector.broadcast %cst_122 : f32 to vector<8x128xf32>
    %c0_123 = arith.constant 0 : index
    %c0_124 = arith.constant 0 : index
    %550 = vector.load %arg4[%c0_123, %c0_124] : memref<128x128xf32, #tpu.memory_space<vmem>>, vector<8x128xf32>
    %551 = arith.mulf %550, %549 : vector<8x128xf32>
    %c0_125 = arith.constant 0 : index
    %c0_126 = arith.constant 0 : index
    %552 = vector.load %arg5[%c0_125, %c0_126] : memref<128x128xf32, #tpu.memory_space<vmem>>, vector<8x128xf32>
    %553 = arith.addf %551, %552 : vector<8x128xf32>
    %c0_127 = arith.constant 0 : index
    %c0_128 = arith.constant 0 : index
    %554 = vector.load %arg6[%c0_127, %c0_128] : memref<128x128xf32, #tpu.memory_space<vmem>>, vector<8x128xf32>
    %555 = arith.mulf %553, %554 : vector<8x128xf32>
    %cst_129 = arith.constant dense<0.000000e+00> : vector<128xf32>
    %556 = vector.multi_reduction <add>, %555, %cst_129 [0] : vector<8x128xf32> to vector<128xf32>
    %557 = vector.shape_cast %556 : vector<128xf32> to vector<1x128xf32>
    %c0_130 = arith.constant 0 : index
    %c0_131 = arith.constant 0 : index
    %558 = vector.load %arg7[%c0_130, %c0_131] : memref<16x128xf32, #tpu.memory_space<vmem>>, vector<1x128xf32>
    tpu.vector_store %arg7[%c0_130, %c0_131], %557 {strides = array<i32>} : memref<16x128xf32, #tpu.memory_space<vmem>>, vector<1x128xf32>,
    %c8_132 = arith.constant 8 : index
    %c0_133 = arith.constant 0 : index
    %559 = vector.load %arg4[%c8_132, %c0_133] : memref<128x128xf32, #tpu.memory_space<vmem>>, vector<8x128xf32>
    %560 = arith.mulf %559, %553 : vector<8x128xf32>
    %c8_134 = arith.constant 8 : index
    %c0_135 = arith.constant 0 : index
    %561 = vector.load %arg5[%c8_134, %c0_135] : memref<128x128xf32, #tpu.memory_space<vmem>>, vector<8x128xf32>
    %562 = arith.addf %560, %561 : vector<8x128xf32>
    %c8_136 = arith.constant 8 : index
    %c0_137 = arith.constant 0 : index
    %563 = vector.load %arg6[%c8_136, %c0_137] : memref<128x128xf32, #tpu.memory_space<vmem>>, vector<8x128xf32>
    %564 = arith.mulf %562, %563 : vector<8x128xf32>
    %cst_138 = arith.constant dense<0.000000e+00> : vector<128xf32>
    %565 = vector.multi_reduction <add>, %564, %cst_138 [0] : vector<8x128xf32> to vector<128xf32>
    %566 = vector.shape_cast %565 : vector<128xf32> to vector<1x128xf32>
    %c1 = arith.constant 1 : index
    %c0_139 = arith.constant 0 : index
    %567 = vector.load %arg7[%c1, %c0_139] : memref<16x128xf32, #tpu.memory_space<vmem>>, vector<1x128xf32>
    tpu.vector_store %arg7[%c1, %c0_139], %566 {strides = array<i32>} : memref<16x128xf32, #tpu.memory_space<vmem>>, vector<1x128xf32>,
    %c16_140 = arith.constant 16 : index
    %c0_141 = arith.constant 0 : index
    %568 = vector.load %arg4[%c16_140, %c0_141] : memref<128x128xf32, #tpu.memory_space<vmem>>, vector<8x128xf32>
    %569 = arith.mulf %568, %562 : vector<8x128xf32>
    %c16_142 = arith.constant 16 : index
    %c0_143 = arith.constant 0 : index
    %570 = vector.load %arg5[%c16_142, %c0_143] : memref<128x128xf32, #tpu.memory_space<vmem>>, vector<8x128xf32>
    %571 = arith.addf %569, %570 : vector<8x128xf32>
    %c16_144 = arith.constant 16 : index
    %c0_145 = arith.constant 0 : index
    %572 = vector.load %arg6[%c16_144, %c0_145] : memref<128x128xf32, #tpu.memory_space<vmem>>, vector<8x128xf32>
    %573 = arith.mulf %571, %572 : vector<8x128xf32>
    %cst_146 = arith.constant dense<0.000000e+00> : vector<128xf32>
    %574 = vector.multi_reduction <add>, %573, %cst_146 [0] : vector<8x128xf32> to vector<128xf32>
    %575 = vector.shape_cast %574 : vector<128xf32> to vector<1x128xf32>
    %c2 = arith.constant 2 : index
    %c0_147 = arith.constant 0 : index
    %576 = vector.load %arg7[%c2, %c0_147] : memref<16x128xf32, #tpu.memory_space<vmem>>, vector<1x128xf32>
    tpu.vector_store %arg7[%c2, %c0_147], %575 {strides = array<i32>} : memref<16x128xf32, #tpu.memory_space<vmem>>, vector<1x128xf32>,
    %c24_148 = arith.constant 24 : index
    %c0_149 = arith.constant 0 : index
    %577 = vector.load %arg4[%c24_148, %c0_149] : memref<128x128xf32, #tpu.memory_space<vmem>>, vector<8x128xf32>
    %578 = arith.mulf %577, %571 : vector<8x128xf32>
    %c24_150 = arith.constant 24 : index
    %c0_151 = arith.constant 0 : index
    %579 = vector.load %arg5[%c24_150, %c0_151] : memref<128x128xf32, #tpu.memory_space<vmem>>, vector<8x128xf32>
    %580 = arith.addf %578, %579 : vector<8x128xf32>
    %c24_152 = arith.constant 24 : index
    %c0_153 = arith.constant 0 : index
    %581 = vector.load %arg6[%c24_152, %c0_153] : memref<128x128xf32, #tpu.memory_space<vmem>>, vector<8x128xf32>
    %582 = arith.mulf %580, %581 : vector<8x128xf32>
    %cst_154 = arith.constant dense<0.000000e+00> : vector<128xf32>
    %583 = vector.multi_reduction <add>, %582, %cst_154 [0] : vector<8x128xf32> to vector<128xf32>
    %584 = vector.shape_cast %583 : vector<128xf32> to vector<1x128xf32>
    %c3 = arith.constant 3 : index
    %c0_155 = arith.constant 0 : index
    %585 = vector.load %arg7[%c3, %c0_155] : memref<16x128xf32, #tpu.memory_space<vmem>>, vector<1x128xf32>
    tpu.vector_store %arg7[%c3, %c0_155], %584 {strides = array<i32>} : memref<16x128xf32, #tpu.memory_space<vmem>>, vector<1x128xf32>,
    %c32_156 = arith.constant 32 : index
    %c0_157 = arith.constant 0 : index
    %586 = vector.load %arg4[%c32_156, %c0_157] : memref<128x128xf32, #tpu.memory_space<vmem>>, vector<8x128xf32>
    %587 = arith.mulf %586, %580 : vector<8x128xf32>
    %c32_158 = arith.constant 32 : index
    %c0_159 = arith.constant 0 : index
    %588 = vector.load %arg5[%c32_158, %c0_159] : memref<128x128xf32, #tpu.memory_space<vmem>>, vector<8x128xf32>
    %589 = arith.addf %587, %588 : vector<8x128xf32>
    %c32_160 = arith.constant 32 : index
    %c0_161 = arith.constant 0 : index
    %590 = vector.load %arg6[%c32_160, %c0_161] : memref<128x128xf32, #tpu.memory_space<vmem>>, vector<8x128xf32>
    %591 = arith.mulf %589, %590 : vector<8x128xf32>
    %cst_162 = arith.constant dense<0.000000e+00> : vector<128xf32>
    %592 = vector.multi_reduction <add>, %591, %cst_162 [0] : vector<8x128xf32> to vector<128xf32>
    %593 = vector.shape_cast %592 : vector<128xf32> to vector<1x128xf32>
    %c4_163 = arith.constant 4 : index
    %c0_164 = arith.constant 0 : index
    %594 = vector.load %arg7[%c4_163, %c0_164] : memref<16x128xf32, #tpu.memory_space<vmem>>, vector<1x128xf32>
    tpu.vector_store %arg7[%c4_163, %c0_164], %593 {strides = array<i32>} : memref<16x128xf32, #tpu.memory_space<vmem>>, vector<1x128xf32>,
    %c40_165 = arith.constant 40 : index
    %c0_166 = arith.constant 0 : index
    %595 = vector.load %arg4[%c40_165, %c0_166] : memref<128x128xf32, #tpu.memory_space<vmem>>, vector<8x128xf32>
    %596 = arith.mulf %595, %589 : vector<8x128xf32>
    %c40_167 = arith.constant 40 : index
    %c0_168 = arith.constant 0 : index
    %597 = vector.load %arg5[%c40_167, %c0_168] : memref<128x128xf32, #tpu.memory_space<vmem>>, vector<8x128xf32>
    %598 = arith.addf %596, %597 : vector<8x128xf32>
    %c40_169 = arith.constant 40 : index
    %c0_170 = arith.constant 0 : index
    %599 = vector.load %arg6[%c40_169, %c0_170] : memref<128x128xf32, #tpu.memory_space<vmem>>, vector<8x128xf32>
    %600 = arith.mulf %598, %599 : vector<8x128xf32>
    %cst_171 = arith.constant dense<0.000000e+00> : vector<128xf32>
    %601 = vector.multi_reduction <add>, %600, %cst_171 [0] : vector<8x128xf32> to vector<128xf32>
    %602 = vector.shape_cast %601 : vector<128xf32> to vector<1x128xf32>
    %c5_172 = arith.constant 5 : index
    %c0_173 = arith.constant 0 : index
    %603 = vector.load %arg7[%c5_172, %c0_173] : memref<16x128xf32, #tpu.memory_space<vmem>>, vector<1x128xf32>
    tpu.vector_store %arg7[%c5_172, %c0_173], %602 {strides = array<i32>} : memref<16x128xf32, #tpu.memory_space<vmem>>, vector<1x128xf32>,
    %c48_174 = arith.constant 48 : index
    %c0_175 = arith.constant 0 : index
    %604 = vector.load %arg4[%c48_174, %c0_175] : memref<128x128xf32, #tpu.memory_space<vmem>>, vector<8x128xf32>
    %605 = arith.mulf %604, %598 : vector<8x128xf32>
    %c48_176 = arith.constant 48 : index
    %c0_177 = arith.constant 0 : index
    %606 = vector.load %arg5[%c48_176, %c0_177] : memref<128x128xf32, #tpu.memory_space<vmem>>, vector<8x128xf32>
    %607 = arith.addf %605, %606 : vector<8x128xf32>
    %c48_178 = arith.constant 48 : index
    %c0_179 = arith.constant 0 : index
    %608 = vector.load %arg6[%c48_178, %c0_179] : memref<128x128xf32, #tpu.memory_space<vmem>>, vector<8x128xf32>
    %609 = arith.mulf %607, %608 : vector<8x128xf32>
    %cst_180 = arith.constant dense<0.000000e+00> : vector<128xf32>
    %610 = vector.multi_reduction <add>, %609, %cst_180 [0] : vector<8x128xf32> to vector<128xf32>
    %611 = vector.shape_cast %610 : vector<128xf32> to vector<1x128xf32>
    %c6_181 = arith.constant 6 : index
    %c0_182 = arith.constant 0 : index
    %612 = vector.load %arg7[%c6_181, %c0_182] : memref<16x128xf32, #tpu.memory_space<vmem>>, vector<1x128xf32>
    tpu.vector_store %arg7[%c6_181, %c0_182], %611 {strides = array<i32>} : memref<16x128xf32, #tpu.memory_space<vmem>>, vector<1x128xf32>,
    %c56_183 = arith.constant 56 : index
    %c0_184 = arith.constant 0 : index
    %613 = vector.load %arg4[%c56_183, %c0_184] : memref<128x128xf32, #tpu.memory_space<vmem>>, vector<8x128xf32>
    %614 = arith.mulf %613, %607 : vector<8x128xf32>
    %c56_185 = arith.constant 56 : index
    %c0_186 = arith.constant 0 : index
    %615 = vector.load %arg5[%c56_185, %c0_186] : memref<128x128xf32, #tpu.memory_space<vmem>>, vector<8x128xf32>
    %616 = arith.addf %614, %615 : vector<8x128xf32>
    %c56_187 = arith.constant 56 : index
    %c0_188 = arith.constant 0 : index
    %617 = vector.load %arg6[%c56_187, %c0_188] : memref<128x128xf32, #tpu.memory_space<vmem>>, vector<8x128xf32>
    %618 = arith.mulf %616, %617 : vector<8x128xf32>
    %cst_189 = arith.constant dense<0.000000e+00> : vector<128xf32>
    %619 = vector.multi_reduction <add>, %618, %cst_189 [0] : vector<8x128xf32> to vector<128xf32>
    %620 = vector.shape_cast %619 : vector<128xf32> to vector<1x128xf32>
    %c7_190 = arith.constant 7 : index
    %c0_191 = arith.constant 0 : index
    %621 = vector.load %arg7[%c7_190, %c0_191] : memref<16x128xf32, #tpu.memory_space<vmem>>, vector<1x128xf32>
    tpu.vector_store %arg7[%c7_190, %c0_191], %620 {strides = array<i32>} : memref<16x128xf32, #tpu.memory_space<vmem>>, vector<1x128xf32>,
    %c64_192 = arith.constant 64 : index
    %c0_193 = arith.constant 0 : index
    %622 = vector.load %arg4[%c64_192, %c0_193] : memref<128x128xf32, #tpu.memory_space<vmem>>, vector<8x128xf32>
    %623 = arith.mulf %622, %616 : vector<8x128xf32>
    %c64_194 = arith.constant 64 : index
    %c0_195 = arith.constant 0 : index
    %624 = vector.load %arg5[%c64_194, %c0_195] : memref<128x128xf32, #tpu.memory_space<vmem>>, vector<8x128xf32>
    %625 = arith.addf %623, %624 : vector<8x128xf32>
    %c64_196 = arith.constant 64 : index
    %c0_197 = arith.constant 0 : index
    %626 = vector.load %arg6[%c64_196, %c0_197] : memref<128x128xf32, #tpu.memory_space<vmem>>, vector<8x128xf32>
    %627 = arith.mulf %625, %626 : vector<8x128xf32>
    %cst_198 = arith.constant dense<0.000000e+00> : vector<128xf32>
    %628 = vector.multi_reduction <add>, %627, %cst_198 [0] : vector<8x128xf32> to vector<128xf32>
    %629 = vector.shape_cast %628 : vector<128xf32> to vector<1x128xf32>
    %c8_199 = arith.constant 8 : index
    %c0_200 = arith.constant 0 : index
    %630 = vector.load %arg7[%c8_199, %c0_200] : memref<16x128xf32, #tpu.memory_space<vmem>>, vector<1x128xf32>
    tpu.vector_store %arg7[%c8_199, %c0_200], %629 {strides = array<i32>} : memref<16x128xf32, #tpu.memory_space<vmem>>, vector<1x128xf32>,
    %c72_201 = arith.constant 72 : index
    %c0_202 = arith.constant 0 : index
    %631 = vector.load %arg4[%c72_201, %c0_202] : memref<128x128xf32, #tpu.memory_space<vmem>>, vector<8x128xf32>
    %632 = arith.mulf %631, %625 : vector<8x128xf32>
    %c72_203 = arith.constant 72 : index
    %c0_204 = arith.constant 0 : index
    %633 = vector.load %arg5[%c72_203, %c0_204] : memref<128x128xf32, #tpu.memory_space<vmem>>, vector<8x128xf32>
    %634 = arith.addf %632, %633 : vector<8x128xf32>
    %c72_205 = arith.constant 72 : index
    %c0_206 = arith.constant 0 : index
    %635 = vector.load %arg6[%c72_205, %c0_206] : memref<128x128xf32, #tpu.memory_space<vmem>>, vector<8x128xf32>
    %636 = arith.mulf %634, %635 : vector<8x128xf32>
    %cst_207 = arith.constant dense<0.000000e+00> : vector<128xf32>
    %637 = vector.multi_reduction <add>, %636, %cst_207 [0] : vector<8x128xf32> to vector<128xf32>
    %638 = vector.shape_cast %637 : vector<128xf32> to vector<1x128xf32>
    %c9 = arith.constant 9 : index
    %c0_208 = arith.constant 0 : index
    %639 = vector.load %arg7[%c9, %c0_208] : memref<16x128xf32, #tpu.memory_space<vmem>>, vector<1x128xf32>
    tpu.vector_store %arg7[%c9, %c0_208], %638 {strides = array<i32>} : memref<16x128xf32, #tpu.memory_space<vmem>>, vector<1x128xf32>,
    %c80_209 = arith.constant 80 : index
    %c0_210 = arith.constant 0 : index
    %640 = vector.load %arg4[%c80_209, %c0_210] : memref<128x128xf32, #tpu.memory_space<vmem>>, vector<8x128xf32>
    %641 = arith.mulf %640, %634 : vector<8x128xf32>
    %c80_211 = arith.constant 80 : index
    %c0_212 = arith.constant 0 : index
    %642 = vector.load %arg5[%c80_211, %c0_212] : memref<128x128xf32, #tpu.memory_space<vmem>>, vector<8x128xf32>
    %643 = arith.addf %641, %642 : vector<8x128xf32>
    %c80_213 = arith.constant 80 : index
    %c0_214 = arith.constant 0 : index
    %644 = vector.load %arg6[%c80_213, %c0_214] : memref<128x128xf32, #tpu.memory_space<vmem>>, vector<8x128xf32>
    %645 = arith.mulf %643, %644 : vector<8x128xf32>
    %cst_215 = arith.constant dense<0.000000e+00> : vector<128xf32>
    %646 = vector.multi_reduction <add>, %645, %cst_215 [0] : vector<8x128xf32> to vector<128xf32>
    %647 = vector.shape_cast %646 : vector<128xf32> to vector<1x128xf32>
    %c10 = arith.constant 10 : index
    %c0_216 = arith.constant 0 : index
    %648 = vector.load %arg7[%c10, %c0_216] : memref<16x128xf32, #tpu.memory_space<vmem>>, vector<1x128xf32>
    tpu.vector_store %arg7[%c10, %c0_216], %647 {strides = array<i32>} : memref<16x128xf32, #tpu.memory_space<vmem>>, vector<1x128xf32>,
    %c88_217 = arith.constant 88 : index
    %c0_218 = arith.constant 0 : index
    %649 = vector.load %arg4[%c88_217, %c0_218] : memref<128x128xf32, #tpu.memory_space<vmem>>, vector<8x128xf32>
    %650 = arith.mulf %649, %643 : vector<8x128xf32>
    %c88_219 = arith.constant 88 : index
    %c0_220 = arith.constant 0 : index
    %651 = vector.load %arg5[%c88_219, %c0_220] : memref<128x128xf32, #tpu.memory_space<vmem>>, vector<8x128xf32>
    %652 = arith.addf %650, %651 : vector<8x128xf32>
    %c88_221 = arith.constant 88 : index
    %c0_222 = arith.constant 0 : index
    %653 = vector.load %arg6[%c88_221, %c0_222] : memref<128x128xf32, #tpu.memory_space<vmem>>, vector<8x128xf32>
    %654 = arith.mulf %652, %653 : vector<8x128xf32>
    %cst_223 = arith.constant dense<0.000000e+00> : vector<128xf32>
    %655 = vector.multi_reduction <add>, %654, %cst_223 [0] : vector<8x128xf32> to vector<128xf32>
    %656 = vector.shape_cast %655 : vector<128xf32> to vector<1x128xf32>
    %c11 = arith.constant 11 : index
    %c0_224 = arith.constant 0 : index
    %657 = vector.load %arg7[%c11, %c0_224] : memref<16x128xf32, #tpu.memory_space<vmem>>, vector<1x128xf32>
    tpu.vector_store %arg7[%c11, %c0_224], %656 {strides = array<i32>} : memref<16x128xf32, #tpu.memory_space<vmem>>, vector<1x128xf32>,
    %c96_225 = arith.constant 96 : index
    %c0_226 = arith.constant 0 : index
    %658 = vector.load %arg4[%c96_225, %c0_226] : memref<128x128xf32, #tpu.memory_space<vmem>>, vector<8x128xf32>
    %659 = arith.mulf %658, %652 : vector<8x128xf32>
    %c96_227 = arith.constant 96 : index
    %c0_228 = arith.constant 0 : index
    %660 = vector.load %arg5[%c96_227, %c0_228] : memref<128x128xf32, #tpu.memory_space<vmem>>, vector<8x128xf32>
    %661 = arith.addf %659, %660 : vector<8x128xf32>
    %c96_229 = arith.constant 96 : index
    %c0_230 = arith.constant 0 : index
    %662 = vector.load %arg6[%c96_229, %c0_230] : memref<128x128xf32, #tpu.memory_space<vmem>>, vector<8x128xf32>
    %663 = arith.mulf %661, %662 : vector<8x128xf32>
    %cst_231 = arith.constant dense<0.000000e+00> : vector<128xf32>
    %664 = vector.multi_reduction <add>, %663, %cst_231 [0] : vector<8x128xf32> to vector<128xf32>
    %665 = vector.shape_cast %664 : vector<128xf32> to vector<1x128xf32>
    %c12 = arith.constant 12 : index
    %c0_232 = arith.constant 0 : index
    %666 = vector.load %arg7[%c12, %c0_232] : memref<16x128xf32, #tpu.memory_space<vmem>>, vector<1x128xf32>
    tpu.vector_store %arg7[%c12, %c0_232], %665 {strides = array<i32>} : memref<16x128xf32, #tpu.memory_space<vmem>>, vector<1x128xf32>,
    %c104_233 = arith.constant 104 : index
    %c0_234 = arith.constant 0 : index
    %667 = vector.load %arg4[%c104_233, %c0_234] : memref<128x128xf32, #tpu.memory_space<vmem>>, vector<8x128xf32>
    %668 = arith.mulf %667, %661 : vector<8x128xf32>
    %c104_235 = arith.constant 104 : index
    %c0_236 = arith.constant 0 : index
    %669 = vector.load %arg5[%c104_235, %c0_236] : memref<128x128xf32, #tpu.memory_space<vmem>>, vector<8x128xf32>
    %670 = arith.addf %668, %669 : vector<8x128xf32>
    %c104_237 = arith.constant 104 : index
    %c0_238 = arith.constant 0 : index
    %671 = vector.load %arg6[%c104_237, %c0_238] : memref<128x128xf32, #tpu.memory_space<vmem>>, vector<8x128xf32>
    %672 = arith.mulf %670, %671 : vector<8x128xf32>
    %cst_239 = arith.constant dense<0.000000e+00> : vector<128xf32>
    %673 = vector.multi_reduction <add>, %672, %cst_239 [0] : vector<8x128xf32> to vector<128xf32>
    %674 = vector.shape_cast %673 : vector<128xf32> to vector<1x128xf32>
    %c13 = arith.constant 13 : index
    %c0_240 = arith.constant 0 : index
    %675 = vector.load %arg7[%c13, %c0_240] : memref<16x128xf32, #tpu.memory_space<vmem>>, vector<1x128xf32>
    tpu.vector_store %arg7[%c13, %c0_240], %674 {strides = array<i32>} : memref<16x128xf32, #tpu.memory_space<vmem>>, vector<1x128xf32>,
    %c112_241 = arith.constant 112 : index
    %c0_242 = arith.constant 0 : index
    %676 = vector.load %arg4[%c112_241, %c0_242] : memref<128x128xf32, #tpu.memory_space<vmem>>, vector<8x128xf32>
    %677 = arith.mulf %676, %670 : vector<8x128xf32>
    %c112_243 = arith.constant 112 : index
    %c0_244 = arith.constant 0 : index
    %678 = vector.load %arg5[%c112_243, %c0_244] : memref<128x128xf32, #tpu.memory_space<vmem>>, vector<8x128xf32>
    %679 = arith.addf %677, %678 : vector<8x128xf32>
    %c112_245 = arith.constant 112 : index
    %c0_246 = arith.constant 0 : index
    %680 = vector.load %arg6[%c112_245, %c0_246] : memref<128x128xf32, #tpu.memory_space<vmem>>, vector<8x128xf32>
    %681 = arith.mulf %679, %680 : vector<8x128xf32>
    %cst_247 = arith.constant dense<0.000000e+00> : vector<128xf32>
    %682 = vector.multi_reduction <add>, %681, %cst_247 [0] : vector<8x128xf32> to vector<128xf32>
    %683 = vector.shape_cast %682 : vector<128xf32> to vector<1x128xf32>
    %c14 = arith.constant 14 : index
    %c0_248 = arith.constant 0 : index
    %684 = vector.load %arg7[%c14, %c0_248] : memref<16x128xf32, #tpu.memory_space<vmem>>, vector<1x128xf32>
    tpu.vector_store %arg7[%c14, %c0_248], %683 {strides = array<i32>} : memref<16x128xf32, #tpu.memory_space<vmem>>, vector<1x128xf32>,
    %c120_249 = arith.constant 120 : index
    %c0_250 = arith.constant 0 : index
    %685 = vector.load %arg4[%c120_249, %c0_250] : memref<128x128xf32, #tpu.memory_space<vmem>>, vector<8x128xf32>
    %686 = arith.mulf %685, %679 : vector<8x128xf32>
    %c120_251 = arith.constant 120 : index
    %c0_252 = arith.constant 0 : index
    %687 = vector.load %arg5[%c120_251, %c0_252] : memref<128x128xf32, #tpu.memory_space<vmem>>, vector<8x128xf32>
    %688 = arith.addf %686, %687 : vector<8x128xf32>
    %c120_253 = arith.constant 120 : index
    %c0_254 = arith.constant 0 : index
    %689 = vector.load %arg6[%c120_253, %c0_254] : memref<128x128xf32, #tpu.memory_space<vmem>>, vector<8x128xf32>
    %690 = arith.mulf %688, %689 : vector<8x128xf32>
    %cst_255 = arith.constant dense<0.000000e+00> : vector<128xf32>
    %691 = vector.multi_reduction <add>, %690, %cst_255 [0] : vector<8x128xf32> to vector<128xf32>
    %692 = vector.shape_cast %691 : vector<128xf32> to vector<1x128xf32>
    %c15 = arith.constant 15 : index
    %c0_256 = arith.constant 0 : index
    %693 = vector.load %arg7[%c15, %c0_256] : memref<16x128xf32, #tpu.memory_space<vmem>>, vector<1x128xf32>
    tpu.vector_store %arg7[%c15, %c0_256], %692 {strides = array<i32>} : memref<16x128xf32, #tpu.memory_space<vmem>>, vector<1x128xf32>,
    %c0_257 = arith.constant 0 : index
    %c0_258 = arith.constant 0 : index
    %694 = vector.load %arg7[%c0_257, %c0_258] : memref<16x128xf32, #tpu.memory_space<vmem>>, vector<16x128xf32>
    %695 = vector.extract_strided_slice %694 {offsets = [0, 0], sizes = [16, 64], strides = [1, 1]} : vector<16x128xf32> to vector<16x64xf32>
    %696 = vector.extract_strided_slice %694 {offsets = [0, 64], sizes = [16, 64], strides = [1, 1]} : vector<16x128xf32> to vector<16x64xf32>
    %697 = tpu.concatenate %695, %696 in 0 : vector<16x64xf32>, vector<16x64xf32> -> vector<32x64xf32>
    %698 = vector.broadcast %11 : vector<1x64xf32> to vector<32x64xf32>
    %699 = arith.mulf %698, %68 : vector<32x64xf32>
    %700 = arith.addf %697, %699 : vector<32x64xf32>
    %cst_259 = arith.constant 0.000000e+00 : f32
    %701 = vector.broadcast %cst_259 : f32 to vector<32x64xf32>
    %702 = arith.subf %701, %25 : vector<32x64xf32>
    %703 = math.exp %702 : vector<32x64xf32>
    %cst_260 = arith.constant 1.000000e+00 : f32
    %704 = vector.broadcast %cst_260 : f32 to vector<32x64xf32>
    %705 = arith.addf %704, %703 : vector<32x64xf32>
    %cst_261 = arith.constant 1.000000e+00 : f32
    %706 = vector.broadcast %cst_261 : f32 to vector<32x64xf32>
    %707 = arith.divf %706, %705 : vector<32x64xf32>
    %708 = arith.mulf %25, %707 : vector<32x64xf32>
    %709 = arith.mulf %700, %708 : vector<32x64xf32>
    %710 = arith.truncf %709 : vector<32x64xf32> to vector<32x64xbf16>
    %cst_262 = arith.constant dense<0.000000e+00> : vector<32x32xf32>
    %711 = tpu.matmul %710, %6, %cst_262 {dimension_numbers = #tpu.dot_dimension_numbers<[1], [0], [0], [1], [0, 0, 1, 1], [], []>} : vector<32x64xbf16>, vector<64x32xbf16>, vector<32x32xf32> -> vector<32x32xf32>
    %712 = arith.addf %22, %711 : vector<32x32xf32>
    %713 = tpu.iota {dimensions = array<i32: 1>} : vector<8x32xi32>
    %714 = vector.broadcast %1 : vector<8x1xi32> to vector<8x32xi32>
    %715 = arith.cmpi eq, %713, %714 : vector<8x32xi32>
    %cst_263 = arith.constant 1.000000e+00 : f32
    %cst_264 = arith.constant 0.000000e+00 : f32
    %716 = vector.broadcast %cst_263 : f32 to vector<8x32xf32>
    %717 = vector.broadcast %cst_264 : f32 to vector<8x32xf32>
    %718 = arith.select %715, %716, %717 : vector<8x32xi1>, vector<8x32xf32>
    %719 = arith.truncf %718 : vector<8x32xf32> to vector<8x32xbf16>
    %720 = arith.truncf %712 : vector<32x32xf32> to vector<32x32xbf16>
    %cst_265 = arith.constant dense<0.000000e+00> : vector<8x32xf32>
    %721 = tpu.matmul %719, %720, %cst_265 {dimension_numbers = #tpu.dot_dimension_numbers<[1], [0], [0], [1], [0, 0, 1, 1], [], []>} : vector<8x32xbf16>, vector<32x32xbf16>, vector<8x32xf32> -> vector<8x32xf32>
    %722 = arith.truncf %721 : vector<8x32xf32> to vector<8x32xbf16>
    %cst_266 = arith.constant dense<0.000000e+00> : vector<8x64xf32>
    %723 = tpu.matmul %722, %7, %cst_266 {dimension_numbers = #tpu.dot_dimension_numbers<[1], [0], [0], [1], [0, 0, 1, 1], [], []>} : vector<8x32xbf16>, vector<32x64xbf16>, vector<8x64xf32> -> vector<8x64xf32>
    %724 = vector.broadcast %12 : vector<1x64xf32> to vector<8x64xf32>
    %725 = arith.addf %723, %724 : vector<8x64xf32>
    %c0_267 = arith.constant 0 : index
    %c0_268 = arith.constant 0 : index
    %726 = vector.load %arg3[%c0_267, %c0_268] : memref<8x64xf32, #tpu.memory_space<vmem>>, vector<8x64xf32>
    tpu.vector_store %arg3[%c0_267, %c0_268], %725 {strides = array<i32>} : memref<8x64xf32, #tpu.memory_space<vmem>>, vector<8x64xf32>,
    return
  }
}

</mosaic_0001>

<llo_original>
// kernel: mamba_compressor_forward.1
$region0: #{mamba_compressor_forward.1}
  #allocation0 [shape = 'u32[]', space=smem, size = 0x4, offset = 0x4, fixed_abs, tag = 'smem constant byte address 0x4 - core index']
  #allocation1 [shape = 'u32[144,128]{1,0:T(1,128)}', space=vmem, size = 0x12000, scoped, tag = 'internal scratch']
  #allocation2 [shape = 'f32[128,128]{1,0:T(8,128)}', space=vmem, size = 0x10000, scoped, tag = 'scratch operand']
  #allocation3 [shape = 'f32[128,128]{1,0:T(8,128)}', space=vmem, size = 0x10000, scoped, tag = 'scratch operand']
  #allocation4 [shape = 'f32[128,128]{1,0:T(8,128)}', space=vmem, size = 0x10000, scoped, tag = 'scratch operand']
  #allocation5 [shape = 'f32[16,128]{1,0:T(8,128)}', space=vmem, size = 0x2000, scoped, tag = 'scratch operand']
  %s0 = inlined_call_operand.vmem [shape: s32[40,1], index: 0, kind: input, shape index: {}]
  %s1 = inlined_call_operand.vmem [shape: bf16[352,64], index: 1, kind: input, shape index: {}]
  %s2 = inlined_call_operand.vmem [shape: f32[32,128], index: 2, kind: input, shape index: {}]
  %s3 = inlined_call_operand.hbm [shape: f32[8,64], index: 3, kind: output, shape index: {}]
  %s4 = sld [smem:[#allocation0]]
  $region22: #{mamba_compressor_forward.1} parent=0
    _
  %s6 = ssub.s32 1, %s4
  %s7 = scalar_select 0, %s6, %s4
  $region1: #{mamba_compressor_forward.1} parent=0
    #allocation6 [shape = 'u8[4096]{0}', space=vmem, size = 0x1000, scoped, tag = 'output window, operand 0, single buffered']
    #allocation7 [shape = 's32[1]{0}', space=sflag, size = 0x4, scoped, tag = 'scoped memory for mamba_compressor_forward.1']
    %8 = vsyncpa [#allocation7], 0
    // Predicated region
    $region2: #{mamba_compressor_forward.1} parent=1 // pred_check
      _
    $region3: #{mamba_compressor_forward.1} parent=1 // pred_check_branch
      %10 = sbr.rel (0) target = $region5
    $region4: #{mamba_compressor_forward.1} parent=1 // pred_region
      _
    $region5: #{mamba_compressor_forward.1} parent=1 // pred_fallthru
      _
    // Predicated region
    $region6: #{mamba_compressor_forward.1} parent=1 // pred_check
      _
    $region7: #{mamba_compressor_forward.1} parent=1 // pred_check_branch
      %12 = sbr.rel (0) target = $region9
    $region8: #{mamba_compressor_forward.1} parent=1 // pred_region
      _
    $region9: #{mamba_compressor_forward.1} parent=1 // pred_fallthru
      _
    // Predicated region
    $region10: #{mamba_compressor_forward.1} parent=1 // pred_check
      _
    $region11: #{mamba_compressor_forward.1} parent=1 // pred_check_branch
      %14 = sbr.rel (0) target = $region13
    $region12: #{mamba_compressor_forward.1} parent=1 // pred_region
      _
    $region13: #{mamba_compressor_forward.1} parent=1 // pred_fallthru
      _
    %v16 = vld [vmem:[%s0] sm:$0xff]
    %v17 = vld [vmem:[%s0 + $0x8] sm:$0xff]
    %v18 = vld [vmem:[%s0 + $0x10] sm:$0xff]
    %v19 = vld [vmem:[%s0 + $0x18] sm:$0xff]
    %v20 = vld [vmem:[%s0 + $0x20] sm:$0xff]
    %v21 = vld [vmem:[%s1] sm:$0xf]
    %v22 = vld [vmem:[%s1 + $0x4] sm:$0xf]
    %v23 = vld [vmem:[%s1 + $0x8] sm:$0xf]
    %v24 = vld [vmem:[%s1 + $0xc] sm:$0xf]
    %v25 = vld [vmem:[%s1 + $0x10] sm:$0xf]
    %v26 = vld [vmem:[%s1 + $0x14] sm:$0xf]
    %v27 = vld [vmem:[%s1 + $0x18] sm:$0xf]
    %v28 = vld [vmem:[%s1 + $0x1c] sm:$0xf]
    %v29 = vld [vmem:[%s1 + $0x20] sm:$0xf]
    %v30 = vld [vmem:[%s1 + $0x24] sm:$0xf]
    %v31 = vld [vmem:[%s1 + $0x28] sm:$0xf]
    %v32 = vld [vmem:[%s1 + $0x2c] sm:$0xf]
    %v33 = vld [vmem:[%s1 + $0x30] sm:$0xf]
    %v34 = vld [vmem:[%s1 + $0x34] sm:$0xf]
    %v35 = vld [vmem:[%s1 + $0x38] sm:$0xf]
    %v36 = vld [vmem:[%s1 + $0x3c] sm:$0xf]
    %v37 = vld [vmem:[%s1 + $0x40] sm:$0xf]
    %v38 = vld [vmem:[%s1 + $0x44] sm:$0xf]
    %v39 = vld [vmem:[%s1 + $0x48] sm:$0xf]
    %v40 = vld [vmem:[%s1 + $0x4c] sm:$0xf]
    %v41 = vld [vmem:[%s1 + $0x50] sm:$0xf]
    %v42 = vld [vmem:[%s1 + $0x54] sm:$0xf]
    %v43 = vld [vmem:[%s1 + $0x58] sm:$0xf]
    %v44 = vld [vmem:[%s1 + $0x5c] sm:$0xf]
    %v45 = vld [vmem:[%s1 + $0x60] sm:$0xf]
    %v46 = vld [vmem:[%s1 + $0x64] sm:$0xf]
    %v47 = vld [vmem:[%s1 + $0x68] sm:$0xf]
    %v48 = vld [vmem:[%s1 + $0x6c] sm:$0xf]
    %v49 = vld [vmem:[%s1 + $0x70] sm:$0xf]
    %v50 = vld [vmem:[%s1 + $0x74] sm:$0xf]
    %v51 = vld [vmem:[%s1 + $0x78] sm:$0xf]
    %v52 = vld [vmem:[%s1 + $0x7c] sm:$0xf]
    %v53 = vld [vmem:[%s1 + $0x80] sm:$0xf]
    %v54 = vld [vmem:[%s1 + $0x84] sm:$0xf]
    %v55 = vld [vmem:[%s1 + $0x88] sm:$0xf]
    %v56 = vld [vmem:[%s1 + $0x8c] sm:$0xf]
    %v57 = vld [vmem:[%s1 + $0x90] sm:$0xf]
    %v58 = vld [vmem:[%s1 + $0x94] sm:$0xf]
    %v59 = vld [vmem:[%s1 + $0x98] sm:$0xf]
    %v60 = vld [vmem:[%s1 + $0x9c] sm:$0xf]
    %v61 = vld [vmem:[%s1 + $0xa0] sm:$0xf]
    %v62 = vld [vmem:[%s1 + $0xa4] sm:$0xf]
    %v63 = vld [vmem:[%s1 + $0xa8] sm:$0xf]
    %v64 = vld [vmem:[%s1 + $0xac] sm:$0xf]
    %v65 = vld [vmem:[%s2] sm:$0xf]
    %v66 = vld [vmem:[%s2 + $0x4] sm:$0x1]
    %v67 = vld [vmem:[%s2 + $0x5] sm:$0x1]
    %v68 = vld [vmem:[%s2 + $0x6] sm:$0x1]
    %v69 = vld [vmem:[%s2 + $0x7] sm:$0x1]
    %v70 = vld [vmem:[%s2 + $0x8] sm:$0xff]
    %v71 = vld [vmem:[%s2 + $0x10] sm:$0xff]
    %v72 = vld [vmem:[%s2 + $0x18] sm:$0xff]
    %v73 = vlaneseq
    %v74 = vand.u32 %v73, 127
    %75 = vset.pattern.permute.xlu0 0
    %76 = vperm.xlu0 %75, %v16
    %v77 = vpop.permute.xlu0 %76
    %78 = vset.pattern.permute.xlu0 0
    %79 = vperm.xlu0 %78, %v17
    %v80 = vpop.permute.xlu0 %79
    %81 = vset.pattern.permute.xlu0 0
    %82 = vperm.xlu0 %81, %v18
    %v83 = vpop.permute.xlu0 %82
    %84 = vset.pattern.permute.xlu0 0
    %85 = vperm.xlu0 %84, %v19
    %v86 = vpop.permute.xlu0 %85
    %vm87 = vcmp.eq.s32.totalorder %v74, %v77
    %vm88 = vcmp.eq.s32.totalorder %v74, %v80
    %vm89 = vcmp.eq.s32.totalorder %v74, %v83
    %vm90 = vcmp.eq.s32.totalorder %v74, %v86
    %v91 = vsel %vm87, 1.0, 0.0
    %v92 = vsel %vm88, 1.0, 0.0
    %v93 = vsel %vm89, 1.0, 0.0
    %v94 = vsel %vm90, 1.0, 0.0
    %v95 = vpack.c.bf16 %v92, %v91
    %v96 = vpack.c.bf16 %v94, %v93
    %v113 = vunpack.c.l.b16 %v21
    %v114 = vunpack.c.l.b16 %v22
    %v115 = vunpack.c.l.b16 %v23
    %v116 = vunpack.c.l.b16 %v24
    %v117 = vunpack.c.l.b16 %v25
    %v118 = vunpack.c.l.b16 %v26
    %v119 = vunpack.c.l.b16 %v27
    %v120 = vunpack.c.l.b16 %v28
    %v121 = vunpack.c.l.b16 %v29
    %v122 = vunpack.c.l.b16 %v30
    %v123 = vunpack.c.l.b16 %v31
    %v124 = vunpack.c.l.b16 %v32
    %v125 = vunpack.c.l.b16 %v33
    %v126 = vunpack.c.l.b16 %v34
    %v127 = vunpack.c.l.b16 %v35
    %v128 = vunpack.c.l.b16 %v36
    %v129 = vpack.c.b16 %v114, %v113
    %v130 = vpack.c.b16 %v116, %v115
    %v131 = vpack.c.b16 %v118, %v117
    %v132 = vpack.c.b16 %v120, %v119
    %v133 = vpack.c.b16 %v122, %v121
    %v134 = vpack.c.b16 %v124, %v123
    %v135 = vpack.c.b16 %v126, %v125
    %v136 = vpack.c.b16 %v128, %v127
    %145 = vmatprep.subr.bf16.mxu0 0
    %146 = vmatpush1.bf16.msra.mxu0 %v129
    %147 = vmatprep.subr.bf16.mxu0 0
    %148 = vmatpush1.bf16.msra.mxu0 %v130
    %149 = vmatprep.subr.bf16.mxu0 0
    %150 = vmatpush1.bf16.msra.mxu0 %v131
    %151 = vmatprep.subr.bf16.mxu0 0
    %152 = vmatpush1.bf16.msra.mxu0 %v132
    %153 = vmatprep.subr.bf16.mxu0 0
    %154 = vmatpush1.bf16.msra.mxu0 %v133
    %155 = vmatprep.subr.bf16.mxu0 0
    %156 = vmatpush1.bf16.msra.mxu0 %v134
    %157 = vmatprep.subr.bf16.mxu0 0
    %158 = vmatpush1.bf16.msra.mxu0 %v135
    %159 = vmatprep.subr.bf16.mxu0 0
    %160 = vmatpush1.bf16.msra.mxu0 %v136
    %161 = vmatprep.subr.bf16.mxu0 0
    %162 = vmatpush1.bf16.msra.mxu0 0
    %163 = vmatprep.subr.bf16.mxu0 0
    %164 = vmatpush1.bf16.msra.mxu0 0
    %165 = vmatprep.subr.bf16.mxu0 0
    %166 = vmatpush1.bf16.msra.mxu0 0
    %167 = vmatprep.subr.bf16.mxu0 0
    %168 = vmatpush1.bf16.msra.mxu0 0
    %169 = vmatprep.subr.bf16.mxu0 0
    %170 = vmatpush1.bf16.msra.mxu0 0
    %171 = vmatprep.subr.bf16.mxu0 0
    %172 = vmatpush1.bf16.msra.mxu0 0
    %173 = vmatprep.subr.bf16.mxu0 0
    %174 = vmatpush1.bf16.msra.mxu0 0
    %175 = vmatprep.subr.bf16.mxu0 0
    %176 = vmatpush1.bf16.msra.mxu0 0
    %177 = vmatprep.mubr.bf16.mxu0 0
    %178 = vmatmul.mubr.bf16.gmra.mrb[0].mxu0 %v95
    %v179 = vpop.f32.mrb[0].mxu0
    %v180 = vadd.f32 0.0, %v179
    %v181 = vpop.f32.mrb[0].mxu0
    %v182 = vpop.f32.mrb[0].mxu0
    %v183 = vadd.f32 0.0, %v182
    %v184 = vpop.f32.mrb[0].mxu0
    %185 = vmatprep.mubr.bf16.mxu0 0
    %186 = vmatmul.mubr.bf16.gmra.mrb[0].mxu0 %v96
    %v187 = vpop.f32.mrb[0].mxu0
    %v188 = vadd.f32 0.0, %v187
    %v189 = vpop.f32.mrb[0].mxu0
    %v190 = vpop.f32.mrb[0].mxu0
    %v191 = vadd.f32 0.0, %v190
    %v192 = vpop.f32.mrb[0].mxu0
    %193 = vdwg.mxu0
    %v194 = vpack.c.bf16 %v183, %v180
    %v195 = vpack.c.bf16 %v191, %v188
    %v200 = vunpack.c.l.b16 %v37
    %v201 = vunpack.c.l.b16 %v38
    %v202 = vunpack.c.l.b16 %v39
    %v203 = vunpack.c.l.b16 %v40
    %v204 = vpack.c.b16 %v201, %v200
    %v205 = vpack.c.b16 %v203, %v202
    %vm208 = vcmask 261120
    %v210 = vsel %vm208, %v194, 0
    %v213 = vsel %vm208, %v195, 0
    %215 = vmatprep.subr.bf16.mxu0 0
    %216 = vmatpush1.bf16.msra.mxu0 %v204
    %217 = vmatprep.subr.bf16.mxu0 0
    %218 = vmatpush1.bf16.msra.mxu0 %v205
    %219 = vmatprep.subr.bf16.mxu0 0
    %220 = vmatpush1.bf16.msra.mxu0 0
    %221 = vmatprep.subr.bf16.mxu0 0
    %222 = vmatpush1.bf16.msra.mxu0 0
    %223 = vmatprep.subr.bf16.mxu0 0
    %224 = vmatpush1.bf16.msra.mxu0 0
    %225 = vmatprep.subr.bf16.mxu0 0
    %226 = vmatpush1.bf16.msra.mxu0 0
    %227 = vmatprep.subr.bf16.mxu0 0
    %228 = vmatpush1.bf16.msra.mxu0 0
    %229 = vmatprep.subr.bf16.mxu0 0
    %230 = vmatpush1.bf16.msra.mxu0 0
    %231 = vmatprep.subr.bf16.mxu0 0
    %232 = vmatpush1.bf16.msra.mxu0 0
    %233 = vmatprep.subr.bf16.mxu0 0
    %234 = vmatpush1.bf16.msra.mxu0 0
    %235 = vmatprep.subr.bf16.mxu0 0
    %236 = vmatpush1.bf16.msra.mxu0 0
    %237 = vmatprep.subr.bf16.mxu0 0
    %238 = vmatpush1.bf16.msra.mxu0 0
    %239 = vmatprep.subr.bf16.mxu0 0
    %240 = vmatpush1.bf16.msra.mxu0 0
    %241 = vmatprep.subr.bf16.mxu0 0
    %242 = vmatpush1.bf16.msra.mxu0 0
    %243 = vmatprep.subr.bf16.mxu0 0
    %244 = vmatpush1.bf16.msra.mxu0 0
    %245 = vmatprep.subr.bf16.mxu0 0
    %246 = vmatpush1.bf16.msra.mxu0 0
    %247 = vmatprep.mubr.bf16.mxu0 0
    %248 = vmatmul.mubr.bf16.gmra.mrb[0].mxu0 %v210
    %v249 = vpop.f32.mrb[0].mxu0
    %v250 = vadd.f32 0.0, %v249
    %v251 = vpop.f32.mrb[0].mxu0
    %v252 = vpop.f32.mrb[0].mxu0
    %v253 = vadd.f32 0.0, %v252
    %v254 = vpop.f32.mrb[0].mxu0
    %255 = vmatprep.mubr.bf16.mxu0 0
    %256 = vmatmul.mubr.bf16.gmra.mrb[0].mxu0 %v213
    %v257 = vpop.f32.mrb[0].mxu0
    %v258 = vadd.f32 0.0, %v257
    %v259 = vpop.f32.mrb[0].mxu0
    %v260 = vpop.f32.mrb[0].mxu0
    %v261 = vadd.f32 0.0, %v260
    %v262 = vpop.f32.mrb[0].mxu0
    %263 = vdwg.mxu0
    %v268 = vunpack.c.l.b16 %v41
    %v269 = vunpack.c.l.b16 %v42
    %v270 = vunpack.c.l.b16 %v43
    %v271 = vunpack.c.l.b16 %v44
    %v272 = vpack.c.b16 %v269, %v268
    %v273 = vpack.c.b16 %v271, %v270
    %276 = vmatprep.subr.bf16.mxu0 0
    %277 = vmatpush1.bf16.msra.mxu0 %v272
    %278 = vmatprep.subr.bf16.mxu0 0
    %279 = vmatpush1.bf16.msra.mxu0 %v273
    %280 = vmatprep.subr.bf16.mxu0 0
    %281 = vmatpush1.bf16.msra.mxu0 0
    %282 = vmatprep.subr.bf16.mxu0 0
    %283 = vmatpush1.bf16.msra.mxu0 0
    %284 = vmatprep.subr.bf16.mxu0 0
    %285 = vmatpush1.bf16.msra.mxu0 0
    %286 = vmatprep.subr.bf16.mxu0 0
    %287 = vmatpush1.bf16.msra.mxu0 0
    %288 = vmatprep.subr.bf16.mxu0 0
    %289 = vmatpush1.bf16.msra.mxu0 0
    %290 = vmatprep.subr.bf16.mxu0 0
    %291 = vmatpush1.bf16.msra.mxu0 0
    %292 = vmatprep.subr.bf16.mxu0 0
    %293 = vmatpush1.bf16.msra.mxu0 0
    %294 = vmatprep.subr.bf16.mxu0 0
    %295 = vmatpush1.bf16.msra.mxu0 0
    %296 = vmatprep.subr.bf16.mxu0 0
    %297 = vmatpush1.bf16.msra.mxu0 0
    %298 = vmatprep.subr.bf16.mxu0 0
    %299 = vmatpush1.bf16.msra.mxu0 0
    %300 = vmatprep.subr.bf16.mxu0 0
    %301 = vmatpush1.bf16.msra.mxu0 0
    %302 = vmatprep.subr.bf16.mxu0 0
    %303 = vmatpush1.bf16.msra.mxu0 0
    %304 = vmatprep.subr.bf16.mxu0 0
    %305 = vmatpush1.bf16.msra.mxu0 0
    %306 = vmatprep.subr.bf16.mxu0 0
    %307 = vmatpush1.bf16.msra.mxu0 0
    %308 = vmatprep.mubr.bf16.mxu0 0
    %309 = vmatmul.mubr.bf16.gmra.mrb[0].mxu0 %v210
    %v310 = vpop.f32.mrb[0].mxu0
    %v311 = vadd.f32 0.0, %v310
    %v312 = vpop.f32.mrb[0].mxu0
    %v313 = vpop.f32.mrb[0].mxu0
    %v314 = vadd.f32 0.0, %v313
    %v315 = vpop.f32.mrb[0].mxu0
    %316 = vmatprep.mubr.bf16.mxu0 0
    %317 = vmatmul.mubr.bf16.gmra.mrb[0].mxu0 %v213
    %v318 = vpop.f32.mrb[0].mxu0
    %v319 = vadd.f32 0.0, %v318
    %v320 = vpop.f32.mrb[0].mxu0
    %v321 = vpop.f32.mrb[0].mxu0
    %v322 = vadd.f32 0.0, %v321
    %v323 = vpop.f32.mrb[0].mxu0
    %324 = vdwg.mxu0
    %v325 = vlaneseq
    %v326 = vshrl.u32 %v325, 7
    %v327 = vadd.s32 %v326, 8
    %v328 = vadd.s32 %v326, 16
    %v329 = vadd.s32 %v326, 24
    %vm330 = vcmp.lt.s32.totalorder %v326, 0
    %v331 = vsub.s32 0, %v326
    %v332 = vsel %vm330, %v331, %v326
    %v333 = vshrl.u32 %v332, 4
    %v334 = vand.u32 %v332, 15
    %v335 = vsub.s32 0, %v334
    %v336 = vsel %vm330, %v335, %v334
    %vm337 = vcmp.lt.s32.totalorder %v327, 0
    %v338 = vsub.s32 0, %v327
    %v339 = vsel %vm337, %v338, %v327
    %v340 = vshrl.u32 %v339, 4
    %v341 = vand.u32 %v339, 15
    %v342 = vsub.s32 0, %v341
    %v343 = vsel %vm337, %v342, %v341
    %vm344 = vcmp.lt.s32.totalorder %v328, 0
    %v345 = vsub.s32 0, %v328
    %v346 = vsel %vm344, %v345, %v328
    %v347 = vshrl.u32 %v346, 4
    %v348 = vand.u32 %v346, 15
    %v349 = vsub.s32 0, %v348
    %v350 = vsel %vm344, %v349, %v348
    %vm351 = vcmp.lt.s32.totalorder %v329, 0
    %v352 = vsub.s32 0, %v329
    %v353 = vsel %vm351, %v352, %v329
    %v354 = vshrl.u32 %v353, 4
    %v355 = vand.u32 %v353, 15
    %v356 = vsub.s32 0, %v355
    %v357 = vsel %vm351, %v356, %v355
    %v358 = vlaneseq
    %v359 = vshrl.u32 %v358, 7
    %v360 = vsub.s32 3, %v359
    %v361 = vrot.slane %v65, %v360
    %v362 = vmul.f32 %v361, %v250
    %v363 = vmul.f32 %v361, %v253
    %v364 = vmul.f32 %v361, %v258
    %v365 = vmul.f32 %v361, %v261
    %v366 = vrot.slane %v250, 7
    %v367 = vrot.slane %v253, 7
    %v368 = vrot.slane %v258, 7
    %v369 = vrot.slane %v261, 7
    %vm370 = vcmp.lt.s32.totalorder %v326, 1
    %v371 = vsel %vm370, %v368, %v369
    %v372 = vsel %vm370, %v367, %v368
    %v373 = vsel %vm370, %v366, %v367
    %v374 = vsel %vm370, %v369, %v366
    %vm375 = vcmp.ge.s32.totalorder %v336, 1
    %vm376 = vcmp.ge.s32.totalorder %v343, 1
    %vm377 = vcmp.ge.s32.totalorder %v350, 1
    %vm378 = vcmp.ge.s32.totalorder %v357, 1
    %v379 = vsel %vm375, %v374, 0.0
    %v380 = vsel %vm376, %v373, 0.0
    %v381 = vsel %vm377, %v372, 0.0
    %v382 = vsel %vm378, %v371, 0.0
    %v383 = vlaneseq
    %v384 = vshrl.u32 %v383, 7
    %v385 = vsub.s32 2, %v384
    %v386 = vrot.slane %v65, %v385
    %v387 = vmul.f32 %v386, %v379
    %v388 = vmul.f32 %v386, %v380
    %v389 = vmul.f32 %v386, %v381
    %v390 = vmul.f32 %v386, %v382
    %v391 = vadd.f32 %v362, %v387
    %v392 = vadd.f32 %v363, %v388
    %v393 = vadd.f32 %v364, %v389
    %v394 = vadd.f32 %v365, %v390
    %v395 = vrot.slane %v250, 6
    %v396 = vrot.slane %v253, 6
    %v397 = vrot.slane %v258, 6
    %v398 = vrot.slane %v261, 6
    %vm399 = vcmp.lt.s32.totalorder %v326, 2
    %v400 = vsel %vm399, %v397, %v398
    %v401 = vsel %vm399, %v396, %v397
    %v402 = vsel %vm399, %v395, %v396
    %v403 = vsel %vm399, %v398, %v395
    %vm404 = vcmp.ge.s32.totalorder %v336, 2
    %vm405 = vcmp.ge.s32.totalorder %v343, 2
    %vm406 = vcmp.ge.s32.totalorder %v350, 2
    %vm407 = vcmp.ge.s32.totalorder %v357, 2
    %v408 = vsel %vm404, %v403, 0.0
    %v409 = vsel %vm405, %v402, 0.0
    %v410 = vsel %vm406, %v401, 0.0
    %v411 = vsel %vm407, %v400, 0.0
    %v412 = vlaneseq
    %v413 = vshrl.u32 %v412, 7
    %v414 = vsub.s32 1, %v413
    %v415 = vrot.slane %v65, %v414
    %v416 = vmul.f32 %v415, %v408
    %v417 = vmul.f32 %v415, %v409
    %v418 = vmul.f32 %v415, %v410
    %v419 = vmul.f32 %v415, %v411
    %v420 = vadd.f32 %v391, %v416
    %v421 = vadd.f32 %v392, %v417
    %v422 = vadd.f32 %v393, %v418
    %v423 = vadd.f32 %v394, %v419
    %v424 = vrot.slane %v250, 5
    %v425 = vrot.slane %v253, 5
    %v426 = vrot.slane %v258, 5
    %v427 = vrot.slane %v261, 5
    %vm428 = vcmp.lt.s32.totalorder %v326, 3
    %v429 = vsel %vm428, %v426, %v427
    %v430 = vsel %vm428, %v425, %v426
    %v431 = vsel %vm428, %v424, %v425
    %v432 = vsel %vm428, %v427, %v424
    %vm433 = vcmp.ge.s32.totalorder %v336, 3
    %vm434 = vcmp.ge.s32.totalorder %v343, 3
    %vm435 = vcmp.ge.s32.totalorder %v350, 3
    %vm436 = vcmp.ge.s32.totalorder %v357, 3
    %v437 = vsel %vm433, %v432, 0.0
    %v438 = vsel %vm434, %v431, 0.0
    %v439 = vsel %vm435, %v430, 0.0
    %v440 = vsel %vm436, %v429, 0.0
    %v441 = vlaneseq
    %v442 = vshrl.u32 %v441, 7
    %v443 = vsub.s32 0, %v442
    %v444 = vrot.slane %v65, %v443
    %v445 = vmul.f32 %v444, %v437
    %v446 = vmul.f32 %v444, %v438
    %v447 = vmul.f32 %v444, %v439
    %v448 = vmul.f32 %v444, %v440
    %v449 = vadd.f32 %v420, %v445
    %v450 = vadd.f32 %v421, %v446
    %v451 = vadd.f32 %v422, %v447
    %v452 = vadd.f32 %v423, %v448
    %v453 = vlaneseq
    %v454 = vshrl.u32 %v453, 7
    %v455 = vsub.s32 0, %v454
    %v456 = vrot.slane %v66, %v455
    %v457 = vadd.f32 %v449, %v456
    %v458 = vadd.f32 %v450, %v456
    %v459 = vadd.f32 %v451, %v456
    %v460 = vadd.f32 %v452, %v456
    %v461 = vsub.f32 0.0, %v457
    %v462 = vsub.f32 0.0, %v458
    %v463 = vsub.f32 0.0, %v459
    %v464 = vsub.f32 0.0, %v460
    %v465 = vmul.f32 %v461, 1.442695
    %v466 = vpow.pop %v465
    %v467 = vmul.f32 %v462, 1.442695
    %v468 = vpow.pop %v467
    %v469 = vmul.f32 %v463, 1.442695
    %v470 = vpow.pop %v469
    %v471 = vmul.f32 %v464, 1.442695
    %v472 = vpow.pop %v471
    %v473 = vadd.f32 %v466, 1.0
    %v474 = vadd.f32 %v468, 1.0
    %v475 = vadd.f32 %v470, 1.0
    %v476 = vadd.f32 %v472, 1.0
    %v477 = vrcp.pop %v473
    %v478 = vmul.f32 1.0, %v477
    %v479 = vrcp.pop %v474
    %v480 = vmul.f32 1.0, %v479
    %v481 = vrcp.pop %v475
    %v482 = vmul.f32 1.0, %v481
    %v483 = vrcp.pop %v476
    %v484 = vmul.f32 1.0, %v483
    %v485 = vmul.f32 %v457, %v478
    %v486 = vmul.f32 %v458, %v480
    %v487 = vmul.f32 %v459, %v482
    %v488 = vmul.f32 %v460, %v484
    %v489 = vpack.c.bf16 %v486, %v485
    %v490 = vpack.c.bf16 %v488, %v487
    %v491 = vlaneseq
    %v492 = vshrl.u32 %v491, 7
    %v493 = vsub.s32 0, %v492
    %v494 = vrot.slane %v67, %v493
    %v503 = vunpack.c.l.b16 %v45
    %v504 = vunpack.c.l.b16 %v46
    %v505 = vunpack.c.l.b16 %v47
    %v506 = vunpack.c.l.b16 %v48
    %v507 = vunpack.c.l.b16 %v49
    %v508 = vunpack.c.l.b16 %v50
    %v509 = vunpack.c.l.b16 %v51
    %v510 = vunpack.c.l.b16 %v52
    %v511 = vpack.c.b16 %v504, %v503
    %v512 = vpack.c.b16 %v506, %v505
    %v513 = vpack.c.b16 %v508, %v507
    %v514 = vpack.c.b16 %v510, %v509
    %vm519 = vcmask 523264
    %v521 = vsel %vm519, %v489, 0
    %v524 = vsel %vm519, %v490, 0
    %526 = vmatprep.subr.bf16.mxu0 0
    %527 = vmatpush1.bf16.msra.mxu0 %v511
    %528 = vmatprep.subr.bf16.mxu0 0
    %529 = vmatpush1.bf16.msra.mxu0 %v512
    %530 = vmatprep.subr.bf16.mxu0 0
    %531 = vmatpush1.bf16.msra.mxu0 %v513
    %532 = vmatprep.subr.bf16.mxu0 0
    %533 = vmatpush1.bf16.msra.mxu0 %v514
    %534 = vmatprep.subr.bf16.mxu0 0
    %535 = vmatpush1.bf16.msra.mxu0 0
    %536 = vmatprep.subr.bf16.mxu0 0
    %537 = vmatpush1.bf16.msra.mxu0 0
    %538 = vmatprep.subr.bf16.mxu0 0
    %539 = vmatpush1.bf16.msra.mxu0 0
    %540 = vmatprep.subr.bf16.mxu0 0
    %541 = vmatpush1.bf16.msra.mxu0 0
    %542 = vmatprep.subr.bf16.mxu0 0
    %543 = vmatpush1.bf16.msra.mxu0 0
    %544 = vmatprep.subr.bf16.mxu0 0
    %545 = vmatpush1.bf16.msra.mxu0 0
    %546 = vmatprep.subr.bf16.mxu0 0
    %547 = vmatpush1.bf16.msra.mxu0 0
    %548 = vmatprep.subr.bf16.mxu0 0
    %549 = vmatpush1.bf16.msra.mxu0 0
    %550 = vmatprep.subr.bf16.mxu0 0
    %551 = vmatpush1.bf16.msra.mxu0 0
    %552 = vmatprep.subr.bf16.mxu0 0
    %553 = vmatpush1.bf16.msra.mxu0 0
    %554 = vmatprep.subr.bf16.mxu0 0
    %555 = vmatpush1.bf16.msra.mxu0 0
    %556 = vmatprep.subr.bf16.mxu0 0
    %557 = vmatpush1.bf16.msra.mxu0 0
    %558 = vmatprep.mubr.bf16.mxu0 0
    %559 = vmatmul.mubr.bf16.gmra.mrb[0].mxu0 %v521
    %v560 = vpop.f32.mrb[0].mxu0
    %v561 = vadd.f32 %v494, %v560
    %v562 = vpop.f32.mrb[0].mxu0
    %v563 = vpop.f32.mrb[0].mxu0
    %v564 = vadd.f32 %v494, %v563
    %v565 = vpop.f32.mrb[0].mxu0
    %566 = vmatprep.mubr.bf16.mxu0 0
    %567 = vmatmul.mubr.bf16.gmra.mrb[0].mxu0 %v524
    %v568 = vpop.f32.mrb[0].mxu0
    %v569 = vadd.f32 %v494, %v568
    %v570 = vpop.f32.mrb[0].mxu0
    %v571 = vpop.f32.mrb[0].mxu0
    %v572 = vadd.f32 %v494, %v571
    %v573 = vpop.f32.mrb[0].mxu0
    %574 = vdwg.mxu0
    %v575 = vmax.f32 %v561, 0.0
    %v576 = vmax.f32 %v564, 0.0
    %v577 = vmax.f32 %v569, 0.0
    %v578 = vmax.f32 %v572, 0.0
    %v579 = vand.u32 2147483647, %v561
    %v580 = vand.u32 2147483647, %v564
    %v581 = vand.u32 2147483647, %v569
    %v582 = vand.u32 2147483647, %v572
    %v583 = vsub.f32 0.0, %v579
    %v584 = vsub.f32 0.0, %v580
    %v585 = vsub.f32 0.0, %v581
    %v586 = vsub.f32 0.0, %v582
    %v587 = vmul.f32 %v583, 1.442695
    %v588 = vpow.pop %v587
    %v589 = vmul.f32 %v584, 1.442695
    %v590 = vpow.pop %v589
    %v591 = vmul.f32 %v585, 1.442695
    %v592 = vpow.pop %v591
    %v593 = vmul.f32 %v586, 1.442695
    %v594 = vpow.pop %v593
    %v595 = vadd.f32 %v588, 1.0
    %v596 = vadd.f32 %v590, 1.0
    %v597 = vadd.f32 %v592, 1.0
    %v598 = vadd.f32 %v594, 1.0
    %v599 = vlog2.pop %v595
    %v600 = vmul.f32 %v599, 0.6931472
    %v601 = vlog2.pop %v596
    %v602 = vmul.f32 %v601, 0.6931472
    %v603 = vlog2.pop %v597
    %v604 = vmul.f32 %v603, 0.6931472
    %v605 = vlog2.pop %v598
    %v606 = vmul.f32 %v605, 0.6931472
    %v607 = vadd.f32 %v575, %v600
    %v608 = vadd.f32 %v576, %v602
    %v609 = vadd.f32 %v577, %v604
    %v610 = vadd.f32 %v578, %v606
    %v612 = vsel %vm519, %v70, 0
    %v615 = vsel %vm519, %v71, 0
    %v618 = vsel %vm519, %v485, 0
    %v621 = vsel %vm519, %v486, 0
    %v624 = vsel %vm519, %v487, 0
    %v627 = vsel %vm519, %v488, 0
    %629 = vmatprep.subr.mxu0 0.0
    %630 = vmatpush1.xpose.msra.mxu0 %v618
    %631 = vmatprep.subr.mxu0 0.0
    %632 = vmatpush1.xpose.msra.mxu0 %v621
    %633 = vmatprep.subr.mxu0 0.0
    %634 = vmatpush1.xpose.msra.mxu0 %v624
    %635 = vmatprep.subr.mxu0 0.0
    %636 = vmatpush1.xpose.msra.mxu0 %v627
    %637 = vmatprep.subr.mxu0 0.0
    %638 = vmatpush1.xpose.msra.mxu0 0.0
    %639 = vmatprep.subr.mxu0 0.0
    %640 = vmatpush1.xpose.msra.mxu0 0.0
    %641 = vmatprep.subr.mxu0 0.0
    %642 = vmatpush1.xpose.msra.mxu0 0.0
    %643 = vmatprep.subr.mxu0 0.0
    %644 = vmatpush1.xpose.msra.mxu0 0.0
    %645 = vmatprep.subr.mxu0 0.0
    %646 = vmatpush1.xpose.msra.mxu0 0.0
    %647 = vmatprep.subr.mxu0 0.0
    %648 = vmatpush1.xpose.msra.mxu0 0.0
    %649 = vmatprep.subr.mxu0 0.0
    %650 = vmatpush1.xpose.msra.mxu0 0.0
    %651 = vmatprep.subr.mxu0 0.0
    %652 = vmatpush1.xpose.msra.mxu0 0.0
    %653 = vmatprep.subr.mxu0 0.0
    %654 = vmatpush1.xpose.msra.mxu0 0.0
    %655 = vmatprep.subr.mxu0 0.0
    %656 = vmatpush1.xpose.msra.mxu0 0.0
    %657 = vmatprep.subr.mxu0 0.0
    %658 = vmatpush1.xpose.msra.mxu0 0.0
    %659 = vmatprep.subr.mxu0 0.0
    %660 = vmatpush1.xpose.msra.mxu0 0.0
    %661 = vmatprep.subr.mxu0 0.0
    %662 = vmatpush1.xpose.msra.mxu0 0.0
    %663 = vmatprep.subr.mxu0 0.0
    %664 = vmatpush1.xpose.msra.mxu0 0.0
    %665 = vmatprep.subr.mxu0 0.0
    %666 = vmatpush1.xpose.msra.mxu0 0.0
    %667 = vmatprep.subr.mxu0 0.0
    %668 = vmatpush1.xpose.msra.mxu0 0.0
    %669 = vmatprep.subr.mxu0 0.0
    %670 = vmatpush1.xpose.msra.mxu0 0.0
    %671 = vmatprep.subr.mxu0 0.0
    %672 = vmatpush1.xpose.msra.mxu0 0.0
    %673 = vmatprep.subr.mxu0 0.0
    %674 = vmatpush1.xpose.msra.mxu0 0.0
    %675 = vmatprep.subr.mxu0 0.0
    %676 = vmatpush1.xpose.msra.mxu0 0.0
    %677 = vmatprep.subr.mxu0 0.0
    %678 = vmatpush1.xpose.msra.mxu0 0.0
    %679 = vmatprep.subr.mxu0 0.0
    %680 = vmatpush1.xpose.msra.mxu0 0.0
    %681 = vmatprep.subr.mxu0 0.0
    %682 = vmatpush1.xpose.msra.mxu0 0.0
    %683 = vmatprep.subr.mxu0 0.0
    %684 = vmatpush1.xpose.msra.mxu0 0.0
    %685 = vmatprep.subr.mxu0 0.0
    %686 = vmatpush1.xpose.msra.mxu0 0.0
    %687 = vmatprep.subr.mxu0 0.0
    %688 = vmatpush1.xpose.msra.mxu0 0.0
    %689 = vmatprep.subr.mxu0 0.0
    %690 = vmatpush1.xpose.msra.mxu0 0.0
    %691 = vmatprep.subr.mxu0 0.0
    %692 = vmatpush1.xpose.msra.mxu0 0.0
    %693 = vmatprep.mubr.f32.mxu0 0.0
    %694 = vmatmul.mubr.f32.gmra.mrb[0].mxu0 %v612
    %v695 = vpop.f32.mrb[0].mxu0
    %v696 = vadd.f32 0.0, %v695
    %v697 = vpop.f32.mrb[0].mxu0
    %698 = vmatprep.mubr.f32.mxu0 0.0
    %699 = vmatmul.mubr.f32.gmra.mrb[0].mxu0 %v615
    %v700 = vpop.f32.mrb[0].mxu0
    %v701 = vadd.f32 0.0, %v700
    %v702 = vpop.f32.mrb[0].mxu0
    %703 = vdwg.mxu0
    %v704 = vmul.f32 %v607, %v485
    %v705 = vmul.f32 %v608, %v486
    %v706 = vmul.f32 %v609, %v487
    %v707 = vmul.f32 %v610, %v488
    %710 = vrot.lane.b32.xlu0 %v609, 64
    %v711 = vpop.permute.xlu0 %710
    %712 = vrot.lane.b32.xlu0 %v610, 64
    %v713 = vpop.permute.xlu0 %712
    %v716 = vsel %vm519, %v607, %v711
    %v717 = vsel %vm519, %v608, %v713
    %720 = vrot.lane.b32.xlu0 %v706, 64
    %v721 = vpop.permute.xlu0 %720
    %722 = vrot.lane.b32.xlu0 %v707, 64
    %v723 = vpop.permute.xlu0 %722
    %v726 = vsel %vm519, %v704, %v721
    %v727 = vsel %vm519, %v705, %v723
    %vm728 = vcmp.lt.s32.totalorder %v74, 64
    %v729 = vsel %vm728, 1.0, 0.0
    %v730 = vsub.f32 1.0, %v729
    %732 = vset.pattern.permute.xlu0 0
    %733 = vperm.xlu0 %732, %v696
    %v734 = vpop.permute.xlu0 %733
    %v736 = vmul.f32 %v734, %v729
    %737 = vset.pattern.permute.xlu0 16
    %738 = vperm.xlu0 %737, %v696
    %v739 = vpop.permute.xlu0 %738
    %v741 = vmul.f32 %v739, %v730
    %v742 = vadd.f32 %v736, %v741
    %744 = vset.pattern.permute.xlu0 0
    %745 = vperm.xlu0 %744, %v701
    %v746 = vpop.permute.xlu0 %745
    %v748 = vmul.f32 %v746, %v729
    %749 = vset.pattern.permute.xlu0 16
    %750 = vperm.xlu0 %749, %v701
    %v751 = vpop.permute.xlu0 %750
    %v753 = vmul.f32 %v751, %v730
    %v754 = vadd.f32 %v748, %v753
    %v755 = vlaneseq
    %v756 = vshrl.u32 %v755, 7
    %v757 = vsub.s32 0, %v756
    %v758 = vrot.slane %v716, %v757
    %v759 = vmul.f32 %v758, %v72
    %v760 = vmul.f32 %v759, 1.442695
    %v761 = vpow.pop %v760
    %762 = vst [vmem:[#allocation2] sm:$0xff] %v761
    %v763 = vlaneseq
    %v764 = vshrl.u32 %v763, 7
    %v765 = vsub.s32 0, %v764
    %v766 = vrot.slane %v726, %v765
    %v767 = vmul.f32 %v766, %v742
    %768 = vst [vmem:[#allocation3] sm:$0xff] %v767
    %769 = vst [vmem:[#allocation4] sm:$0xff] %v754
    %770 = vset.pattern.permute.xlu0 1
    %771 = vperm.xlu0 %770, %v696
    %v772 = vpop.permute.xlu0 %771
    %v774 = vmul.f32 %v772, %v729
    %775 = vset.pattern.permute.xlu0 17
    %776 = vperm.xlu0 %775, %v696
    %v777 = vpop.permute.xlu0 %776
    %v779 = vmul.f32 %v777, %v730
    %v780 = vadd.f32 %v774, %v779
    %781 = vset.pattern.permute.xlu0 1
    %782 = vperm.xlu0 %781, %v701
    %v783 = vpop.permute.xlu0 %782
    %v785 = vmul.f32 %v783, %v729
    %786 = vset.pattern.permute.xlu0 17
    %787 = vperm.xlu0 %786, %v701
    %v788 = vpop.permute.xlu0 %787
    %v790 = vmul.f32 %v788, %v730
    %v791 = vadd.f32 %v785, %v790
    %v792 = vlaneseq
    %v793 = vshrl.u32 %v792, 7
    %v794 = vsub.s32 1, %v793
    %v795 = vrot.slane %v716, %v794
    %v796 = vmul.f32 %v795, %v72
    %v797 = vmul.f32 %v796, 1.442695
    %v798 = vpow.pop %v797
    %799 = vst [vmem:[#allocation2 + $0x8] sm:$0xff] %v798
    %v800 = vlaneseq
    %v801 = vshrl.u32 %v800, 7
    %v802 = vsub.s32 1, %v801
    %v803 = vrot.slane %v726, %v802
    %v804 = vmul.f32 %v803, %v780
    %805 = vst [vmem:[#allocation3 + $0x8] sm:$0xff] %v804
    %806 = vst [vmem:[#allocation4 + $0x8] sm:$0xff] %v791
    %807 = vset.pattern.permute.xlu0 2
    %808 = vperm.xlu0 %807, %v696
    %v809 = vpop.permute.xlu0 %808
    %v811 = vmul.f32 %v809, %v729
    %812 = vset.pattern.permute.xlu0 18
    %813 = vperm.xlu0 %812, %v696
    %v814 = vpop.permute.xlu0 %813
    %v816 = vmul.f32 %v814, %v730
    %v817 = vadd.f32 %v811, %v816
    %818 = vset.pattern.permute.xlu0 2
    %819 = vperm.xlu0 %818, %v701
    %v820 = vpop.permute.xlu0 %819
    %v822 = vmul.f32 %v820, %v729
    %823 = vset.pattern.permute.xlu0 18
    %824 = vperm.xlu0 %823, %v701
    %v825 = vpop.permute.xlu0 %824
    %v827 = vmul.f32 %v825, %v730
    %v828 = vadd.f32 %v822, %v827
    %v829 = vlaneseq
    %v830 = vshrl.u32 %v829, 7
    %v831 = vsub.s32 2, %v830
    %v832 = vrot.slane %v716, %v831
    %v833 = vmul.f32 %v832, %v72
    %v834 = vmul.f32 %v833, 1.442695
    %v835 = vpow.pop %v834
    %836 = vst [vmem:[#allocation2 + $0x10] sm:$0xff] %v835
    %v837 = vlaneseq
    %v838 = vshrl.u32 %v837, 7
    %v839 = vsub.s32 2, %v838
    %v840 = vrot.slane %v726, %v839
    %v841 = vmul.f32 %v840, %v817
    %842 = vst [vmem:[#allocation3 + $0x10] sm:$0xff] %v841
    %843 = vst [vmem:[#allocation4 + $0x10] sm:$0xff] %v828
    %844 = vset.pattern.permute.xlu0 3
    %845 = vperm.xlu0 %844, %v696
    %v846 = vpop.permute.xlu0 %845
    %v848 = vmul.f32 %v846, %v729
    %849 = vset.pattern.permute.xlu0 19
    %850 = vperm.xlu0 %849, %v696
    %v851 = vpop.permute.xlu0 %850
    %v853 = vmul.f32 %v851, %v730
    %v854 = vadd.f32 %v848, %v853
    %855 = vset.pattern.permute.xlu0 3
    %856 = vperm.xlu0 %855, %v701
    %v857 = vpop.permute.xlu0 %856
    %v859 = vmul.f32 %v857, %v729
    %860 = vset.pattern.permute.xlu0 19
    %861 = vperm.xlu0 %860, %v701
    %v862 = vpop.permute.xlu0 %861
    %v864 = vmul.f32 %v862, %v730
    %v865 = vadd.f32 %v859, %v864
    %v866 = vlaneseq
    %v867 = vshrl.u32 %v866, 7
    %v868 = vsub.s32 3, %v867
    %v869 = vrot.slane %v716, %v868
    %v870 = vmul.f32 %v869, %v72
    %v871 = vmul.f32 %v870, 1.442695
    %v872 = vpow.pop %v871
    %873 = vst [vmem:[#allocation2 + $0x18] sm:$0xff] %v872
    %v874 = vlaneseq
    %v875 = vshrl.u32 %v874, 7
    %v876 = vsub.s32 3, %v875
    %v877 = vrot.slane %v726, %v876
    %v878 = vmul.f32 %v877, %v854
    %879 = vst [vmem:[#allocation3 + $0x18] sm:$0xff] %v878
    %880 = vst [vmem:[#allocation4 + $0x18] sm:$0xff] %v865
    %881 = vset.pattern.permute.xlu0 4
    %882 = vperm.xlu0 %881, %v696
    %v883 = vpop.permute.xlu0 %882
    %v885 = vmul.f32 %v883, %v729
    %886 = vset.pattern.permute.xlu0 20
    %887 = vperm.xlu0 %886, %v696
    %v888 = vpop.permute.xlu0 %887
    %v890 = vmul.f32 %v888, %v730
    %v891 = vadd.f32 %v885, %v890
    %892 = vset.pattern.permute.xlu0 4
    %893 = vperm.xlu0 %892, %v701
    %v894 = vpop.permute.xlu0 %893
    %v896 = vmul.f32 %v894, %v729
    %897 = vset.pattern.permute.xlu0 20
    %898 = vperm.xlu0 %897, %v701
    %v899 = vpop.permute.xlu0 %898
    %v901 = vmul.f32 %v899, %v730
    %v902 = vadd.f32 %v896, %v901
    %v903 = vlaneseq
    %v904 = vshrl.u32 %v903, 7
    %v905 = vsub.s32 4, %v904
    %v906 = vrot.slane %v716, %v905
    %v907 = vmul.f32 %v906, %v72
    %v908 = vmul.f32 %v907, 1.442695
    %v909 = vpow.pop %v908
    %910 = vst [vmem:[#allocation2 + $0x20] sm:$0xff] %v909
    %v911 = vlaneseq
    %v912 = vshrl.u32 %v911, 7
    %v913 = vsub.s32 4, %v912
    %v914 = vrot.slane %v726, %v913
    %v915 = vmul.f32 %v914, %v891
    %916 = vst [vmem:[#allocation3 + $0x20] sm:$0xff] %v915
    %917 = vst [vmem:[#allocation4 + $0x20] sm:$0xff] %v902
    %918 = vset.pattern.permute.xlu0 5
    %919 = vperm.xlu0 %918, %v696
    %v920 = vpop.permute.xlu0 %919
    %v922 = vmul.f32 %v920, %v729
    %923 = vset.pattern.permute.xlu0 21
    %924 = vperm.xlu0 %923, %v696
    %v925 = vpop.permute.xlu0 %924
    %v927 = vmul.f32 %v925, %v730
    %v928 = vadd.f32 %v922, %v927
    %929 = vset.pattern.permute.xlu0 5
    %930 = vperm.xlu0 %929, %v701
    %v931 = vpop.permute.xlu0 %930
    %v933 = vmul.f32 %v931, %v729
    %934 = vset.pattern.permute.xlu0 21
    %935 = vperm.xlu0 %934, %v701
    %v936 = vpop.permute.xlu0 %935
    %v938 = vmul.f32 %v936, %v730
    %v939 = vadd.f32 %v933, %v938
    %v940 = vlaneseq
    %v941 = vshrl.u32 %v940, 7
    %v942 = vsub.s32 5, %v941
    %v943 = vrot.slane %v716, %v942
    %v944 = vmul.f32 %v943, %v72
    %v945 = vmul.f32 %v944, 1.442695
    %v946 = vpow.pop %v945
    %947 = vst [vmem:[#allocation2 + $0x28] sm:$0xff] %v946
    %v948 = vlaneseq
    %v949 = vshrl.u32 %v948, 7
    %v950 = vsub.s32 5, %v949
    %v951 = vrot.slane %v726, %v950
    %v952 = vmul.f32 %v951, %v928
    %953 = vst [vmem:[#allocation3 + $0x28] sm:$0xff] %v952
    %954 = vst [vmem:[#allocation4 + $0x28] sm:$0xff] %v939
    %955 = vset.pattern.permute.xlu0 6
    %956 = vperm.xlu0 %955, %v696
    %v957 = vpop.permute.xlu0 %956
    %v959 = vmul.f32 %v957, %v729
    %960 = vset.pattern.permute.xlu0 22
    %961 = vperm.xlu0 %960, %v696
    %v962 = vpop.permute.xlu0 %961
    %v964 = vmul.f32 %v962, %v730
    %v965 = vadd.f32 %v959, %v964
    %966 = vset.pattern.permute.xlu0 6
    %967 = vperm.xlu0 %966, %v701
    %v968 = vpop.permute.xlu0 %967
    %v970 = vmul.f32 %v968, %v729
    %971 = vset.pattern.permute.xlu0 22
    %972 = vperm.xlu0 %971, %v701
    %v973 = vpop.permute.xlu0 %972
    %v975 = vmul.f32 %v973, %v730
    %v976 = vadd.f32 %v970, %v975
    %v977 = vlaneseq
    %v978 = vshrl.u32 %v977, 7
    %v979 = vsub.s32 6, %v978
    %v980 = vrot.slane %v716, %v979
    %v981 = vmul.f32 %v980, %v72
    %v982 = vmul.f32 %v981, 1.442695
    %v983 = vpow.pop %v982
    %984 = vst [vmem:[#allocation2 + $0x30] sm:$0xff] %v983
    %v985 = vlaneseq
    %v986 = vshrl.u32 %v985, 7
    %v987 = vsub.s32 6, %v986
    %v988 = vrot.slane %v726, %v987
    %v989 = vmul.f32 %v988, %v965
    %990 = vst [vmem:[#allocation3 + $0x30] sm:$0xff] %v989
    %991 = vst [vmem:[#allocation4 + $0x30] sm:$0xff] %v976
    %992 = vset.pattern.permute.xlu0 7
    %993 = vperm.xlu0 %992, %v696
    %v994 = vpop.permute.xlu0 %993
    %v996 = vmul.f32 %v994, %v729
    %997 = vset.pattern.permute.xlu0 23
    %998 = vperm.xlu0 %997, %v696
    %v999 = vpop.permute.xlu0 %998
    %v1001 = vmul.f32 %v999, %v730
    %v1002 = vadd.f32 %v996, %v1001
    %1003 = vset.pattern.permute.xlu0 7
    %1004 = vperm.xlu0 %1003, %v701
    %v1005 = vpop.permute.xlu0 %1004
    %v1007 = vmul.f32 %v1005, %v729
    %1008 = vset.pattern.permute.xlu0 23
    %1009 = vperm.xlu0 %1008, %v701
    %v1010 = vpop.permute.xlu0 %1009
    %v1012 = vmul.f32 %v1010, %v730
    %v1013 = vadd.f32 %v1007, %v1012
    %v1014 = vlaneseq
    %v1015 = vshrl.u32 %v1014, 7
    %v1016 = vsub.s32 7, %v1015
    %v1017 = vrot.slane %v716, %v1016
    %v1018 = vmul.f32 %v1017, %v72
    %v1019 = vmul.f32 %v1018, 1.442695
    %v1020 = vpow.pop %v1019
    %1021 = vst [vmem:[#allocation2 + $0x38] sm:$0xff] %v1020
    %v1022 = vlaneseq
    %v1023 = vshrl.u32 %v1022, 7
    %v1024 = vsub.s32 7, %v1023
    %v1025 = vrot.slane %v726, %v1024
    %v1026 = vmul.f32 %v1025, %v1002
    %1027 = vst [vmem:[#allocation3 + $0x38] sm:$0xff] %v1026
    %1028 = vst [vmem:[#allocation4 + $0x38] sm:$0xff] %v1013
    %1029 = vset.pattern.permute.xlu0 8
    %1030 = vperm.xlu0 %1029, %v696
    %v1031 = vpop.permute.xlu0 %1030
    %v1033 = vmul.f32 %v1031, %v729
    %1034 = vset.pattern.permute.xlu0 24
    %1035 = vperm.xlu0 %1034, %v696
    %v1036 = vpop.permute.xlu0 %1035
    %v1038 = vmul.f32 %v1036, %v730
    %v1039 = vadd.f32 %v1033, %v1038
    %1040 = vset.pattern.permute.xlu0 8
    %1041 = vperm.xlu0 %1040, %v701
    %v1042 = vpop.permute.xlu0 %1041
    %v1044 = vmul.f32 %v1042, %v729
    %1045 = vset.pattern.permute.xlu0 24
    %1046 = vperm.xlu0 %1045, %v701
    %v1047 = vpop.permute.xlu0 %1046
    %v1049 = vmul.f32 %v1047, %v730
    %v1050 = vadd.f32 %v1044, %v1049
    %v1051 = vlaneseq
    %v1052 = vshrl.u32 %v1051, 7
    %v1053 = vsub.s32 0, %v1052
    %v1054 = vrot.slane %v717, %v1053
    %v1055 = vmul.f32 %v1054, %v72
    %v1056 = vmul.f32 %v1055, 1.442695
    %v1057 = vpow.pop %v1056
    %1058 = vst [vmem:[#allocation2 + $0x40] sm:$0xff] %v1057
    %v1059 = vlaneseq
    %v1060 = vshrl.u32 %v1059, 7
    %v1061 = vsub.s32 0, %v1060
    %v1062 = vrot.slane %v727, %v1061
    %v1063 = vmul.f32 %v1062, %v1039
    %1064 = vst [vmem:[#allocation3 + $0x40] sm:$0xff] %v1063
    %1065 = vst [vmem:[#allocation4 + $0x40] sm:$0xff] %v1050
    %1066 = vset.pattern.permute.xlu0 9
    %1067 = vperm.xlu0 %1066, %v696
    %v1068 = vpop.permute.xlu0 %1067
    %v1070 = vmul.f32 %v1068, %v729
    %1071 = vset.pattern.permute.xlu0 25
    %1072 = vperm.xlu0 %1071, %v696
    %v1073 = vpop.permute.xlu0 %1072
    %v1075 = vmul.f32 %v1073, %v730
    %v1076 = vadd.f32 %v1070, %v1075
    %1077 = vset.pattern.permute.xlu0 9
    %1078 = vperm.xlu0 %1077, %v701
    %v1079 = vpop.permute.xlu0 %1078
    %v1081 = vmul.f32 %v1079, %v729
    %1082 = vset.pattern.permute.xlu0 25
    %1083 = vperm.xlu0 %1082, %v701
    %v1084 = vpop.permute.xlu0 %1083
    %v1086 = vmul.f32 %v1084, %v730
    %v1087 = vadd.f32 %v1081, %v1086
    %v1088 = vlaneseq
    %v1089 = vshrl.u32 %v1088, 7
    %v1090 = vsub.s32 1, %v1089
    %v1091 = vrot.slane %v717, %v1090
    %v1092 = vmul.f32 %v1091, %v72
    %v1093 = vmul.f32 %v1092, 1.442695
    %v1094 = vpow.pop %v1093
    %1095 = vst [vmem:[#allocation2 + $0x48] sm:$0xff] %v1094
    %v1096 = vlaneseq
    %v1097 = vshrl.u32 %v1096, 7
    %v1098 = vsub.s32 1, %v1097
    %v1099 = vrot.slane %v727, %v1098
    %v1100 = vmul.f32 %v1099, %v1076
    %1101 = vst [vmem:[#allocation3 + $0x48] sm:$0xff] %v1100
    %1102 = vst [vmem:[#allocation4 + $0x48] sm:$0xff] %v1087
    %1103 = vset.pattern.permute.xlu0 10
    %1104 = vperm.xlu0 %1103, %v696
    %v1105 = vpop.permute.xlu0 %1104
    %v1107 = vmul.f32 %v1105, %v729
    %1108 = vset.pattern.permute.xlu0 26
    %1109 = vperm.xlu0 %1108, %v696
    %v1110 = vpop.permute.xlu0 %1109
    %v1112 = vmul.f32 %v1110, %v730
    %v1113 = vadd.f32 %v1107, %v1112
    %1114 = vset.pattern.permute.xlu0 10
    %1115 = vperm.xlu0 %1114, %v701
    %v1116 = vpop.permute.xlu0 %1115
    %v1118 = vmul.f32 %v1116, %v729
    %1119 = vset.pattern.permute.xlu0 26
    %1120 = vperm.xlu0 %1119, %v701
    %v1121 = vpop.permute.xlu0 %1120
    %v1123 = vmul.f32 %v1121, %v730
    %v1124 = vadd.f32 %v1118, %v1123
    %v1125 = vlaneseq
    %v1126 = vshrl.u32 %v1125, 7
    %v1127 = vsub.s32 2, %v1126
    %v1128 = vrot.slane %v717, %v1127
    %v1129 = vmul.f32 %v1128, %v72
    %v1130 = vmul.f32 %v1129, 1.442695
    %v1131 = vpow.pop %v1130
    %1132 = vst [vmem:[#allocation2 + $0x50] sm:$0xff] %v1131
    %v1133 = vlaneseq
    %v1134 = vshrl.u32 %v1133, 7
    %v1135 = vsub.s32 2, %v1134
    %v1136 = vrot.slane %v727, %v1135
    %v1137 = vmul.f32 %v1136, %v1113
    %1138 = vst [vmem:[#allocation3 + $0x50] sm:$0xff] %v1137
    %1139 = vst [vmem:[#allocation4 + $0x50] sm:$0xff] %v1124
    %1140 = vset.pattern.permute.xlu0 11
    %1141 = vperm.xlu0 %1140, %v696
    %v1142 = vpop.permute.xlu0 %1141
    %v1144 = vmul.f32 %v1142, %v729
    %1145 = vset.pattern.permute.xlu0 27
    %1146 = vperm.xlu0 %1145, %v696
    %v1147 = vpop.permute.xlu0 %1146
    %v1149 = vmul.f32 %v1147, %v730
    %v1150 = vadd.f32 %v1144, %v1149
    %1151 = vset.pattern.permute.xlu0 11
    %1152 = vperm.xlu0 %1151, %v701
    %v1153 = vpop.permute.xlu0 %1152
    %v1155 = vmul.f32 %v1153, %v729
    %1156 = vset.pattern.permute.xlu0 27
    %1157 = vperm.xlu0 %1156, %v701
    %v1158 = vpop.permute.xlu0 %1157
    %v1160 = vmul.f32 %v1158, %v730
    %v1161 = vadd.f32 %v1155, %v1160
    %v1162 = vlaneseq
    %v1163 = vshrl.u32 %v1162, 7
    %v1164 = vsub.s32 3, %v1163
    %v1165 = vrot.slane %v717, %v1164
    %v1166 = vmul.f32 %v1165, %v72
    %v1167 = vmul.f32 %v1166, 1.442695
    %v1168 = vpow.pop %v1167
    %1169 = vst [vmem:[#allocation2 + $0x58] sm:$0xff] %v1168
    %v1170 = vlaneseq
    %v1171 = vshrl.u32 %v1170, 7
    %v1172 = vsub.s32 3, %v1171
    %v1173 = vrot.slane %v727, %v1172
    %v1174 = vmul.f32 %v1173, %v1150
    %1175 = vst [vmem:[#allocation3 + $0x58] sm:$0xff] %v1174
    %1176 = vst [vmem:[#allocation4 + $0x58] sm:$0xff] %v1161
    %1177 = vset.pattern.permute.xlu0 12
    %1178 = vperm.xlu0 %1177, %v696
    %v1179 = vpop.permute.xlu0 %1178
    %v1181 = vmul.f32 %v1179, %v729
    %1182 = vset.pattern.permute.xlu0 28
    %1183 = vperm.xlu0 %1182, %v696
    %v1184 = vpop.permute.xlu0 %1183
    %v1186 = vmul.f32 %v1184, %v730
    %v1187 = vadd.f32 %v1181, %v1186
    %1188 = vset.pattern.permute.xlu0 12
    %1189 = vperm.xlu0 %1188, %v701
    %v1190 = vpop.permute.xlu0 %1189
    %v1192 = vmul.f32 %v1190, %v729
    %1193 = vset.pattern.permute.xlu0 28
    %1194 = vperm.xlu0 %1193, %v701
    %v1195 = vpop.permute.xlu0 %1194
    %v1197 = vmul.f32 %v1195, %v730
    %v1198 = vadd.f32 %v1192, %v1197
    %v1199 = vlaneseq
    %v1200 = vshrl.u32 %v1199, 7
    %v1201 = vsub.s32 4, %v1200
    %v1202 = vrot.slane %v717, %v1201
    %v1203 = vmul.f32 %v1202, %v72
    %v1204 = vmul.f32 %v1203, 1.442695
    %v1205 = vpow.pop %v1204
    %1206 = vst [vmem:[#allocation2 + $0x60] sm:$0xff] %v1205
    %v1207 = vlaneseq
    %v1208 = vshrl.u32 %v1207, 7
    %v1209 = vsub.s32 4, %v1208
    %v1210 = vrot.slane %v727, %v1209
    %v1211 = vmul.f32 %v1210, %v1187
    %1212 = vst [vmem:[#allocation3 + $0x60] sm:$0xff] %v1211
    %1213 = vst [vmem:[#allocation4 + $0x60] sm:$0xff] %v1198
    %1214 = vset.pattern.permute.xlu0 13
    %1215 = vperm.xlu0 %1214, %v696
    %v1216 = vpop.permute.xlu0 %1215
    %v1218 = vmul.f32 %v1216, %v729
    %1219 = vset.pattern.permute.xlu0 29
    %1220 = vperm.xlu0 %1219, %v696
    %v1221 = vpop.permute.xlu0 %1220
    %v1223 = vmul.f32 %v1221, %v730
    %v1224 = vadd.f32 %v1218, %v1223
    %1225 = vset.pattern.permute.xlu0 13
    %1226 = vperm.xlu0 %1225, %v701
    %v1227 = vpop.permute.xlu0 %1226
    %v1229 = vmul.f32 %v1227, %v729
    %1230 = vset.pattern.permute.xlu0 29
    %1231 = vperm.xlu0 %1230, %v701
    %v1232 = vpop.permute.xlu0 %1231
    %v1234 = vmul.f32 %v1232, %v730
    %v1235 = vadd.f32 %v1229, %v1234
    %v1236 = vlaneseq
    %v1237 = vshrl.u32 %v1236, 7
    %v1238 = vsub.s32 5, %v1237
    %v1239 = vrot.slane %v717, %v1238
    %v1240 = vmul.f32 %v1239, %v72
    %v1241 = vmul.f32 %v1240, 1.442695
    %v1242 = vpow.pop %v1241
    %1243 = vst [vmem:[#allocation2 + $0x68] sm:$0xff] %v1242
    %v1244 = vlaneseq
    %v1245 = vshrl.u32 %v1244, 7
    %v1246 = vsub.s32 5, %v1245
    %v1247 = vrot.slane %v727, %v1246
    %v1248 = vmul.f32 %v1247, %v1224
    %1249 = vst [vmem:[#allocation3 + $0x68] sm:$0xff] %v1248
    %1250 = vst [vmem:[#allocation4 + $0x68] sm:$0xff] %v1235
    %1251 = vset.pattern.permute.xlu0 14
    %1252 = vperm.xlu0 %1251, %v696
    %v1253 = vpop.permute.xlu0 %1252
    %v1255 = vmul.f32 %v1253, %v729
    %1256 = vset.pattern.permute.xlu0 30
    %1257 = vperm.xlu0 %1256, %v696
    %v1258 = vpop.permute.xlu0 %1257
    %v1260 = vmul.f32 %v1258, %v730
    %v1261 = vadd.f32 %v1255, %v1260
    %1262 = vset.pattern.permute.xlu0 14
    %1263 = vperm.xlu0 %1262, %v701
    %v1264 = vpop.permute.xlu0 %1263
    %v1266 = vmul.f32 %v1264, %v729
    %1267 = vset.pattern.permute.xlu0 30
    %1268 = vperm.xlu0 %1267, %v701
    %v1269 = vpop.permute.xlu0 %1268
    %v1271 = vmul.f32 %v1269, %v730
    %v1272 = vadd.f32 %v1266, %v1271
    %v1273 = vlaneseq
    %v1274 = vshrl.u32 %v1273, 7
    %v1275 = vsub.s32 6, %v1274
    %v1276 = vrot.slane %v717, %v1275
    %v1277 = vmul.f32 %v1276, %v72
    %v1278 = vmul.f32 %v1277, 1.442695
    %v1279 = vpow.pop %v1278
    %1280 = vst [vmem:[#allocation2 + $0x70] sm:$0xff] %v1279
    %v1281 = vlaneseq
    %v1282 = vshrl.u32 %v1281, 7
    %v1283 = vsub.s32 6, %v1282
    %v1284 = vrot.slane %v727, %v1283
    %v1285 = vmul.f32 %v1284, %v1261
    %1286 = vst [vmem:[#allocation3 + $0x70] sm:$0xff] %v1285
    %1287 = vst [vmem:[#allocation4 + $0x70] sm:$0xff] %v1272
    %1288 = vset.pattern.permute.xlu0 15
    %1289 = vperm.xlu0 %1288, %v696
    %v1290 = vpop.permute.xlu0 %1289
    %v1292 = vmul.f32 %v1290, %v729
    %1293 = vset.pattern.permute.xlu0 31
    %1294 = vperm.xlu0 %1293, %v696
    %v1295 = vpop.permute.xlu0 %1294
    %v1297 = vmul.f32 %v1295, %v730
    %v1298 = vadd.f32 %v1292, %v1297
    %1299 = vset.pattern.permute.xlu0 15
    %1300 = vperm.xlu0 %1299, %v701
    %v1301 = vpop.permute.xlu0 %1300
    %v1303 = vmul.f32 %v1301, %v729
    %1304 = vset.pattern.permute.xlu0 31
    %1305 = vperm.xlu0 %1304, %v701
    %v1306 = vpop.permute.xlu0 %1305
    %v1308 = vmul.f32 %v1306, %v730
    %v1309 = vadd.f32 %v1303, %v1308
    %v1310 = vlaneseq
    %v1311 = vshrl.u32 %v1310, 7
    %v1312 = vsub.s32 7, %v1311
    %v1313 = vrot.slane %v717, %v1312
    %v1314 = vmul.f32 %v1313, %v72
    %v1315 = vmul.f32 %v1314, 1.442695
    %v1316 = vpow.pop %v1315
    %1317 = vst [vmem:[#allocation2 + $0x78] sm:$0xff] %v1316
    %v1318 = vlaneseq
    %v1319 = vshrl.u32 %v1318, 7
    %v1320 = vsub.s32 7, %v1319
    %v1321 = vrot.slane %v727, %v1320
    %v1322 = vmul.f32 %v1321, %v1298
    %1323 = vst [vmem:[#allocation3 + $0x78] sm:$0xff] %v1322
    %1324 = vst [vmem:[#allocation4 + $0x78] sm:$0xff] %v1309
    %v1325 = vld [vmem:[#allocation2] sm:$0xff]
    %v1326 = vmul.f32 %v1325, 0.0
    %v1327 = vld [vmem:[#allocation3] sm:$0xff]
    %v1328 = vadd.f32 %v1326, %v1327
    %v1329 = vld [vmem:[#allocation4] sm:$0xff]
    %v1330 = vmul.f32 %v1328, %v1329
    %v1331 = vrot.slane %v1330, 4
    %v1332 = vadd.f32 %v1330, %v1331
    %v1333 = vrot.slane %v1332, 2
    %v1334 = vadd.f32 %v1332, %v1333
    %v1335 = vrot.slane %v1334, 1
    %v1336 = vadd.f32 %v1334, %v1335
    %1337 = vst [vmem:[#allocation5] sm:$0x1] %v1336
    %v1338 = vld [vmem:[#allocation2 + $0x8] sm:$0xff]
    %v1339 = vmul.f32 %v1338, %v1328
    %v1340 = vld [vmem:[#allocation3 + $0x8] sm:$0xff]
    %v1341 = vadd.f32 %v1339, %v1340
    %v1342 = vld [vmem:[#allocation4 + $0x8] sm:$0xff]
    %v1343 = vmul.f32 %v1341, %v1342
    %v1344 = vrot.slane %v1343, 4
    %v1345 = vadd.f32 %v1343, %v1344
    %v1346 = vrot.slane %v1345, 2
    %v1347 = vadd.f32 %v1345, %v1346
    %v1348 = vrot.slane %v1347, 1
    %v1349 = vadd.f32 %v1347, %v1348
    %1350 = vst [vmem:[#allocation5 + $0x1] sm:$0x1] %v1349
    %v1351 = vld [vmem:[#allocation2 + $0x10] sm:$0xff]
    %v1352 = vmul.f32 %v1351, %v1341
    %v1353 = vld [vmem:[#allocation3 + $0x10] sm:$0xff]
    %v1354 = vadd.f32 %v1352, %v1353
    %v1355 = vld [vmem:[#allocation4 + $0x10] sm:$0xff]
    %v1356 = vmul.f32 %v1354, %v1355
    %v1357 = vrot.slane %v1356, 4
    %v1358 = vadd.f32 %v1356, %v1357
    %v1359 = vrot.slane %v1358, 2
    %v1360 = vadd.f32 %v1358, %v1359
    %v1361 = vrot.slane %v1360, 1
    %v1362 = vadd.f32 %v1360, %v1361
    %1363 = vst [vmem:[#allocation5 + $0x2] sm:$0x1] %v1362
    %v1364 = vld [vmem:[#allocation2 + $0x18] sm:$0xff]
    %v1365 = vmul.f32 %v1364, %v1354
    %v1366 = vld [vmem:[#allocation3 + $0x18] sm:$0xff]
    %v1367 = vadd.f32 %v1365, %v1366
    %v1368 = vld [vmem:[#allocation4 + $0x18] sm:$0xff]
    %v1369 = vmul.f32 %v1367, %v1368
    %v1370 = vrot.slane %v1369, 4
    %v1371 = vadd.f32 %v1369, %v1370
    %v1372 = vrot.slane %v1371, 2
    %v1373 = vadd.f32 %v1371, %v1372
    %v1374 = vrot.slane %v1373, 1
    %v1375 = vadd.f32 %v1373, %v1374
    %1376 = vst [vmem:[#allocation5 + $0x3] sm:$0x1] %v1375
    %v1377 = vld [vmem:[#allocation2 + $0x20] sm:$0xff]
    %v1378 = vmul.f32 %v1377, %v1367
    %v1379 = vld [vmem:[#allocation3 + $0x20] sm:$0xff]
    %v1380 = vadd.f32 %v1378, %v1379
    %v1381 = vld [vmem:[#allocation4 + $0x20] sm:$0xff]
    %v1382 = vmul.f32 %v1380, %v1381
    %v1383 = vrot.slane %v1382, 4
    %v1384 = vadd.f32 %v1382, %v1383
    %v1385 = vrot.slane %v1384, 2
    %v1386 = vadd.f32 %v1384, %v1385
    %v1387 = vrot.slane %v1386, 1
    %v1388 = vadd.f32 %v1386, %v1387
    %1389 = vst [vmem:[#allocation5 + $0x4] sm:$0x1] %v1388
    %v1390 = vld [vmem:[#allocation2 + $0x28] sm:$0xff]
    %v1391 = vmul.f32 %v1390, %v1380
    %v1392 = vld [vmem:[#allocation3 + $0x28] sm:$0xff]
    %v1393 = vadd.f32 %v1391, %v1392
    %v1394 = vld [vmem:[#allocation4 + $0x28] sm:$0xff]
    %v1395 = vmul.f32 %v1393, %v1394
    %v1396 = vrot.slane %v1395, 4
    %v1397 = vadd.f32 %v1395, %v1396
    %v1398 = vrot.slane %v1397, 2
    %v1399 = vadd.f32 %v1397, %v1398
    %v1400 = vrot.slane %v1399, 1
    %v1401 = vadd.f32 %v1399, %v1400
    %1402 = vst [vmem:[#allocation5 + $0x5] sm:$0x1] %v1401
    %v1403 = vld [vmem:[#allocation2 + $0x30] sm:$0xff]
    %v1404 = vmul.f32 %v1403, %v1393
    %v1405 = vld [vmem:[#allocation3 + $0x30] sm:$0xff]
    %v1406 = vadd.f32 %v1404, %v1405
    %v1407 = vld [vmem:[#allocation4 + $0x30] sm:$0xff]
    %v1408 = vmul.f32 %v1406, %v1407
    %v1409 = vrot.slane %v1408, 4
    %v1410 = vadd.f32 %v1408, %v1409
    %v1411 = vrot.slane %v1410, 2
    %v1412 = vadd.f32 %v1410, %v1411
    %v1413 = vrot.slane %v1412, 1
    %v1414 = vadd.f32 %v1412, %v1413
    %1415 = vst [vmem:[#allocation5 + $0x6] sm:$0x1] %v1414
    %v1416 = vld [vmem:[#allocation2 + $0x38] sm:$0xff]
    %v1417 = vmul.f32 %v1416, %v1406
    %v1418 = vld [vmem:[#allocation3 + $0x38] sm:$0xff]
    %v1419 = vadd.f32 %v1417, %v1418
    %v1420 = vld [vmem:[#allocation4 + $0x38] sm:$0xff]
    %v1421 = vmul.f32 %v1419, %v1420
    %v1422 = vrot.slane %v1421, 4
    %v1423 = vadd.f32 %v1421, %v1422
    %v1424 = vrot.slane %v1423, 2
    %v1425 = vadd.f32 %v1423, %v1424
    %v1426 = vrot.slane %v1425, 1
    %v1427 = vadd.f32 %v1425, %v1426
    %1428 = vst [vmem:[#allocation5 + $0x7] sm:$0x1] %v1427
    %v1429 = vld [vmem:[#allocation2 + $0x40] sm:$0xff]
    %v1430 = vmul.f32 %v1429, %v1419
    %v1431 = vld [vmem:[#allocation3 + $0x40] sm:$0xff]
    %v1432 = vadd.f32 %v1430, %v1431
    %v1433 = vld [vmem:[#allocation4 + $0x40] sm:$0xff]
    %v1434 = vmul.f32 %v1432, %v1433
    %v1435 = vrot.slane %v1434, 4
    %v1436 = vadd.f32 %v1434, %v1435
    %v1437 = vrot.slane %v1436, 2
    %v1438 = vadd.f32 %v1436, %v1437
    %v1439 = vrot.slane %v1438, 1
    %v1440 = vadd.f32 %v1438, %v1439
    %1441 = vst [vmem:[#allocation5 + $0x8] sm:$0x1] %v1440
    %v1442 = vld [vmem:[#allocation2 + $0x48] sm:$0xff]
    %v1443 = vmul.f32 %v1442, %v1432
    %v1444 = vld [vmem:[#allocation3 + $0x48] sm:$0xff]
    %v1445 = vadd.f32 %v1443, %v1444
    %v1446 = vld [vmem:[#allocation4 + $0x48] sm:$0xff]
    %v1447 = vmul.f32 %v1445, %v1446
    %v1448 = vrot.slane %v1447, 4
    %v1449 = vadd.f32 %v1447, %v1448
    %v1450 = vrot.slane %v1449, 2
    %v1451 = vadd.f32 %v1449, %v1450
    %v1452 = vrot.slane %v1451, 1
    %v1453 = vadd.f32 %v1451, %v1452
    %1454 = vst [vmem:[#allocation5 + $0x9] sm:$0x1] %v1453
    %v1455 = vld [vmem:[#allocation2 + $0x50] sm:$0xff]
    %v1456 = vmul.f32 %v1455, %v1445
    %v1457 = vld [vmem:[#allocation3 + $0x50] sm:$0xff]
    %v1458 = vadd.f32 %v1456, %v1457
    %v1459 = vld [vmem:[#allocation4 + $0x50] sm:$0xff]
    %v1460 = vmul.f32 %v1458, %v1459
    %v1461 = vrot.slane %v1460, 4
    %v1462 = vadd.f32 %v1460, %v1461
    %v1463 = vrot.slane %v1462, 2
    %v1464 = vadd.f32 %v1462, %v1463
    %v1465 = vrot.slane %v1464, 1
    %v1466 = vadd.f32 %v1464, %v1465
    %1467 = vst [vmem:[#allocation5 + $0xa] sm:$0x1] %v1466
    %v1468 = vld [vmem:[#allocation2 + $0x58] sm:$0xff]
    %v1469 = vmul.f32 %v1468, %v1458
    %v1470 = vld [vmem:[#allocation3 + $0x58] sm:$0xff]
    %v1471 = vadd.f32 %v1469, %v1470
    %v1472 = vld [vmem:[#allocation4 + $0x58] sm:$0xff]
    %v1473 = vmul.f32 %v1471, %v1472
    %v1474 = vrot.slane %v1473, 4
    %v1475 = vadd.f32 %v1473, %v1474
    %v1476 = vrot.slane %v1475, 2
    %v1477 = vadd.f32 %v1475, %v1476
    %v1478 = vrot.slane %v1477, 1
    %v1479 = vadd.f32 %v1477, %v1478
    %1480 = vst [vmem:[#allocation5 + $0xb] sm:$0x1] %v1479
    %v1481 = vld [vmem:[#allocation2 + $0x60] sm:$0xff]
    %v1482 = vmul.f32 %v1481, %v1471
    %v1483 = vld [vmem:[#allocation3 + $0x60] sm:$0xff]
    %v1484 = vadd.f32 %v1482, %v1483
    %v1485 = vld [vmem:[#allocation4 + $0x60] sm:$0xff]
    %v1486 = vmul.f32 %v1484, %v1485
    %v1487 = vrot.slane %v1486, 4
    %v1488 = vadd.f32 %v1486, %v1487
    %v1489 = vrot.slane %v1488, 2
    %v1490 = vadd.f32 %v1488, %v1489
    %v1491 = vrot.slane %v1490, 1
    %v1492 = vadd.f32 %v1490, %v1491
    %1493 = vst [vmem:[#allocation5 + $0xc] sm:$0x1] %v1492
    %v1494 = vld [vmem:[#allocation2 + $0x68] sm:$0xff]
    %v1495 = vmul.f32 %v1494, %v1484
    %v1496 = vld [vmem:[#allocation3 + $0x68] sm:$0xff]
    %v1497 = vadd.f32 %v1495, %v1496
    %v1498 = vld [vmem:[#allocation4 + $0x68] sm:$0xff]
    %v1499 = vmul.f32 %v1497, %v1498
    %v1500 = vrot.slane %v1499, 4
    %v1501 = vadd.f32 %v1499, %v1500
    %v1502 = vrot.slane %v1501, 2
    %v1503 = vadd.f32 %v1501, %v1502
    %v1504 = vrot.slane %v1503, 1
    %v1505 = vadd.f32 %v1503, %v1504
    %1506 = vst [vmem:[#allocation5 + $0xd] sm:$0x1] %v1505
    %v1507 = vld [vmem:[#allocation2 + $0x70] sm:$0xff]
    %v1508 = vmul.f32 %v1507, %v1497
    %v1509 = vld [vmem:[#allocation3 + $0x70] sm:$0xff]
    %v1510 = vadd.f32 %v1508, %v1509
    %v1511 = vld [vmem:[#allocation4 + $0x70] sm:$0xff]
    %v1512 = vmul.f32 %v1510, %v1511
    %v1513 = vrot.slane %v1512, 4
    %v1514 = vadd.f32 %v1512, %v1513
    %v1515 = vrot.slane %v1514, 2
    %v1516 = vadd.f32 %v1514, %v1515
    %v1517 = vrot.slane %v1516, 1
    %v1518 = vadd.f32 %v1516, %v1517
    %1519 = vst [vmem:[#allocation5 + $0xe] sm:$0x1] %v1518
    %v1520 = vld [vmem:[#allocation2 + $0x78] sm:$0xff]
    %v1521 = vmul.f32 %v1520, %v1510
    %v1522 = vld [vmem:[#allocation3 + $0x78] sm:$0xff]
    %v1523 = vadd.f32 %v1521, %v1522
    %v1524 = vld [vmem:[#allocation4 + $0x78] sm:$0xff]
    %v1525 = vmul.f32 %v1523, %v1524
    %v1526 = vrot.slane %v1525, 4
    %v1527 = vadd.f32 %v1525, %v1526
    %v1528 = vrot.slane %v1527, 2
    %v1529 = vadd.f32 %v1527, %v1528
    %v1530 = vrot.slane %v1529, 1
    %v1531 = vadd.f32 %v1529, %v1530
    %1532 = vst [vmem:[#allocation5 + $0xf] sm:$0x1] %v1531
    %v1533 = vld [vmem:[#allocation5] sm:$0xff]
    %v1534 = vld [vmem:[#allocation5 + $0x8] sm:$0xff]
    %1537 = vrot.lane.b32.xlu0 %v1533, 64
    %v1538 = vpop.permute.xlu0 %1537
    %1539 = vrot.lane.b32.xlu0 %v1534, 64
    %v1540 = vpop.permute.xlu0 %1539
    %v1543 = vlaneseq
    %v1544 = vshrl.u32 %v1543, 7
    %v1545 = vsub.s32 0, %v1544
    %v1546 = vrot.slane %v68, %v1545
    %v1547 = vmul.f32 %v1546, %v485
    %v1548 = vmul.f32 %v1546, %v486
    %v1549 = vmul.f32 %v1546, %v487
    %v1550 = vmul.f32 %v1546, %v488
    %v1551 = vadd.f32 %v1533, %v1547
    %v1552 = vadd.f32 %v1534, %v1548
    %v1553 = vadd.f32 %v1538, %v1549
    %v1554 = vadd.f32 %v1540, %v1550
    %v1555 = vsub.f32 0.0, %v311
    %v1556 = vsub.f32 0.0, %v314
    %v1557 = vsub.f32 0.0, %v319
    %v1558 = vsub.f32 0.0, %v322
    %v1559 = vmul.f32 %v1555, 1.442695
    %v1560 = vpow.pop %v1559
    %v1561 = vmul.f32 %v1556, 1.442695
    %v1562 = vpow.pop %v1561
    %v1563 = vmul.f32 %v1557, 1.442695
    %v1564 = vpow.pop %v1563
    %v1565 = vmul.f32 %v1558, 1.442695
    %v1566 = vpow.pop %v1565
    %v1567 = vadd.f32 %v1560, 1.0
    %v1568 = vadd.f32 %v1562, 1.0
    %v1569 = vadd.f32 %v1564, 1.0
    %v1570 = vadd.f32 %v1566, 1.0
    %v1571 = vrcp.pop %v1567
    %v1572 = vmul.f32 1.0, %v1571
    %v1573 = vrcp.pop %v1568
    %v1574 = vmul.f32 1.0, %v1573
    %v1575 = vrcp.pop %v1569
    %v1576 = vmul.f32 1.0, %v1575
    %v1577 = vrcp.pop %v1570
    %v1578 = vmul.f32 1.0, %v1577
    %v1579 = vmul.f32 %v311, %v1572
    %v1580 = vmul.f32 %v314, %v1574
    %v1581 = vmul.f32 %v319, %v1576
    %v1582 = vmul.f32 %v322, %v1578
    %v1583 = vmul.f32 %v1551, %v1579
    %v1584 = vmul.f32 %v1552, %v1580
    %v1585 = vmul.f32 %v1553, %v1581
    %v1586 = vmul.f32 %v1554, %v1582
    %v1587 = vpack.c.bf16 %v1584, %v1583
    %v1588 = vpack.c.bf16 %v1586, %v1585
    %v1597 = vunpack.c.l.b16 %v53
    %v1598 = vunpack.c.l.b16 %v54
    %v1599 = vunpack.c.l.b16 %v55
    %v1600 = vunpack.c.l.b16 %v56
    %v1601 = vunpack.c.l.b16 %v57
    %v1602 = vunpack.c.l.b16 %v58
    %v1603 = vunpack.c.l.b16 %v59
    %v1604 = vunpack.c.l.b16 %v60
    %v1605 = vpack.c.b16 %v1598, %v1597
    %v1606 = vpack.c.b16 %v1600, %v1599
    %v1607 = vpack.c.b16 %v1602, %v1601
    %v1608 = vpack.c.b16 %v1604, %v1603
    %v1614 = vsel %vm519, %v1587, 0
    %v1617 = vsel %vm519, %v1588, 0
    %1619 = vmatprep.subr.bf16.mxu0 0
    %1620 = vmatpush1.bf16.msra.mxu0 %v1605
    %1621 = vmatprep.subr.bf16.mxu0 0
    %1622 = vmatpush1.bf16.msra.mxu0 %v1606
    %1623 = vmatprep.subr.bf16.mxu0 0
    %1624 = vmatpush1.bf16.msra.mxu0 %v1607
    %1625 = vmatprep.subr.bf16.mxu0 0
    %1626 = vmatpush1.bf16.msra.mxu0 %v1608
    %1627 = vmatprep.subr.bf16.mxu0 0
    %1628 = vmatpush1.bf16.msra.mxu0 0
    %1629 = vmatprep.subr.bf16.mxu0 0
    %1630 = vmatpush1.bf16.msra.mxu0 0
    %1631 = vmatprep.subr.bf16.mxu0 0
    %1632 = vmatpush1.bf16.msra.mxu0 0
    %1633 = vmatprep.subr.bf16.mxu0 0
    %1634 = vmatpush1.bf16.msra.mxu0 0
    %1635 = vmatprep.subr.bf16.mxu0 0
    %1636 = vmatpush1.bf16.msra.mxu0 0
    %1637 = vmatprep.subr.bf16.mxu0 0
    %1638 = vmatpush1.bf16.msra.mxu0 0
    %1639 = vmatprep.subr.bf16.mxu0 0
    %1640 = vmatpush1.bf16.msra.mxu0 0
    %1641 = vmatprep.subr.bf16.mxu0 0
    %1642 = vmatpush1.bf16.msra.mxu0 0
    %1643 = vmatprep.subr.bf16.mxu0 0
    %1644 = vmatpush1.bf16.msra.mxu0 0
    %1645 = vmatprep.subr.bf16.mxu0 0
    %1646 = vmatpush1.bf16.msra.mxu0 0
    %1647 = vmatprep.subr.bf16.mxu0 0
    %1648 = vmatpush1.bf16.msra.mxu0 0
    %1649 = vmatprep.subr.bf16.mxu0 0
    %1650 = vmatpush1.bf16.msra.mxu0 0
    %1651 = vmatprep.mubr.bf16.mxu0 0
    %1652 = vmatmul.mubr.bf16.gmra.mrb[0].mxu0 %v1614
    %v1653 = vpop.f32.mrb[0].mxu0
    %v1654 = vadd.f32 0.0, %v1653
    %v1655 = vpop.f32.mrb[0].mxu0
    %v1656 = vpop.f32.mrb[0].mxu0
    %v1657 = vadd.f32 0.0, %v1656
    %v1658 = vpop.f32.mrb[0].mxu0
    %1659 = vmatprep.mubr.bf16.mxu0 0
    %1660 = vmatmul.mubr.bf16.gmra.mrb[0].mxu0 %v1617
    %v1661 = vpop.f32.mrb[0].mxu0
    %v1662 = vadd.f32 0.0, %v1661
    %v1663 = vpop.f32.mrb[0].mxu0
    %v1664 = vpop.f32.mrb[0].mxu0
    %v1665 = vadd.f32 0.0, %v1664
    %v1666 = vpop.f32.mrb[0].mxu0
    %1667 = vdwg.mxu0
    %v1668 = vadd.f32 %v180, %v1654
    %v1669 = vadd.f32 %v183, %v1657
    %v1670 = vadd.f32 %v188, %v1662
    %v1671 = vadd.f32 %v191, %v1665
    %1672 = vset.pattern.permute.xlu0 0
    %1673 = vperm.xlu0 %1672, %v20
    %v1674 = vpop.permute.xlu0 %1673
    %vm1675 = vcmp.eq.s32.totalorder %v74, %v1674
    %v1676 = vsel %vm1675, 1.0, 0.0
    %v1677 = vpack.c.bf16 %v1676, %v1676
    %v1678 = vpack.c.bf16 %v1669, %v1668
    %v1679 = vpack.c.bf16 %v1671, %v1670
    %v1681 = vsel %vm208, %v1677, 0
    %1683 = vmatprep.subr.bf16.mxu0 0
    %1684 = vmatpush1.bf16.msra.mxu0 %v1678
    %1685 = vmatprep.subr.bf16.mxu0 0
    %1686 = vmatpush1.bf16.msra.mxu0 %v1679
    %1687 = vmatprep.subr.bf16.mxu0 0
    %1688 = vmatpush1.bf16.msra.mxu0 0
    %1689 = vmatprep.subr.bf16.mxu0 0
    %1690 = vmatpush1.bf16.msra.mxu0 0
    %1691 = vmatprep.subr.bf16.mxu0 0
    %1692 = vmatpush1.bf16.msra.mxu0 0
    %1693 = vmatprep.subr.bf16.mxu0 0
    %1694 = vmatpush1.bf16.msra.mxu0 0
    %1695 = vmatprep.subr.bf16.mxu0 0
    %1696 = vmatpush1.bf16.msra.mxu0 0
    %1697 = vmatprep.subr.bf16.mxu0 0
    %1698 = vmatpush1.bf16.msra.mxu0 0
    %1699 = vmatprep.subr.bf16.mxu0 0
    %1700 = vmatpush1.bf16.msra.mxu0 0
    %1701 = vmatprep.subr.bf16.mxu0 0
    %1702 = vmatpush1.bf16.msra.mxu0 0
    %1703 = vmatprep.subr.bf16.mxu0 0
    %1704 = vmatpush1.bf16.msra.mxu0 0
    %1705 = vmatprep.subr.bf16.mxu0 0
    %1706 = vmatpush1.bf16.msra.mxu0 0
    %1707 = vmatprep.subr.bf16.mxu0 0
    %1708 = vmatpush1.bf16.msra.mxu0 0
    %1709 = vmatprep.subr.bf16.mxu0 0
    %1710 = vmatpush1.bf16.msra.mxu0 0
    %1711 = vmatprep.subr.bf16.mxu0 0
    %1712 = vmatpush1.bf16.msra.mxu0 0
    %1713 = vmatprep.subr.bf16.mxu0 0
    %1714 = vmatpush1.bf16.msra.mxu0 0
    %1715 = vmatprep.mubr.bf16.mxu0 0
    %1716 = vmatmul.mubr.bf16.gmra.mrb[0].mxu0 %v1681
    %v1717 = vpop.f32.mrb[0].mxu0
    %v1718 = vadd.f32 0.0, %v1717
    %v1719 = vpop.f32.mrb[0].mxu0
    %v1720 = vpop.f32.mrb[0].mxu0
    %v1721 = vpop.f32.mrb[0].mxu0
    %1722 = vdwg.mxu0
    %v1723 = vpack.c.bf16 %v1718, %v1718
    %v1724 = vlaneseq
    %v1725 = vshrl.u32 %v1724, 7
    %v1726 = vsub.s32 0, %v1725
    %v1727 = vrot.slane %v69, %v1726
    %v1732 = vunpack.c.l.b16 %v61
    %v1733 = vunpack.c.l.b16 %v62
    %v1734 = vunpack.c.l.b16 %v63
    %v1735 = vunpack.c.l.b16 %v64
    %v1736 = vpack.c.b16 %v1733, %v1732
    %v1737 = vpack.c.b16 %v1735, %v1734
    %v1741 = vsel %vm208, %v1723, 0
    %1743 = vmatprep.subr.bf16.mxu0 0
    %1744 = vmatpush1.bf16.msra.mxu0 %v1736
    %1745 = vmatprep.subr.bf16.mxu0 0
    %1746 = vmatpush1.bf16.msra.mxu0 %v1737
    %1747 = vmatprep.subr.bf16.mxu0 0
    %1748 = vmatpush1.bf16.msra.mxu0 0
    %1749 = vmatprep.subr.bf16.mxu0 0
    %1750 = vmatpush1.bf16.msra.mxu0 0
    %1751 = vmatprep.subr.bf16.mxu0 0
    %1752 = vmatpush1.bf16.msra.mxu0 0
    %1753 = vmatprep.subr.bf16.mxu0 0
    %1754 = vmatpush1.bf16.msra.mxu0 0
    %1755 = vmatprep.subr.bf16.mxu0 0
    %1756 = vmatpush1.bf16.msra.mxu0 0
    %1757 = vmatprep.subr.bf16.mxu0 0
    %1758 = vmatpush1.bf16.msra.mxu0 0
    %1759 = vmatprep.subr.bf16.mxu0 0
    %1760 = vmatpush1.bf16.msra.mxu0 0
    %1761 = vmatprep.subr.bf16.mxu0 0
    %1762 = vmatpush1.bf16.msra.mxu0 0
    %1763 = vmatprep.subr.bf16.mxu0 0
    %1764 = vmatpush1.bf16.msra.mxu0 0
    %1765 = vmatprep.subr.bf16.mxu0 0
    %1766 = vmatpush1.bf16.msra.mxu0 0
    %1767 = vmatprep.subr.bf16.mxu0 0
    %1768 = vmatpush1.bf16.msra.mxu0 0
    %1769 = vmatprep.subr.bf16.mxu0 0
    %1770 = vmatpush1.bf16.msra.mxu0 0
    %1771 = vmatprep.subr.bf16.mxu0 0
    %1772 = vmatpush1.bf16.msra.mxu0 0
    %1773 = vmatprep.subr.bf16.mxu0 0
    %1774 = vmatpush1.bf16.msra.mxu0 0
    %1775 = vmatprep.mubr.bf16.mxu0 0
    %1776 = vmatmul.mubr.bf16.gmra.mrb[0].mxu0 %v1741
    %v1777 = vpop.f32.mrb[0].mxu0
    %v1778 = vadd.f32 %v1727, %v1777
    %v1779 = vpop.f32.mrb[0].mxu0
    %v1780 = vpop.f32.mrb[0].mxu0
    %v1781 = vpop.f32.mrb[0].mxu0
    %1782 = vdwg.mxu0
    %1783 = vst.msk [vmem:[#allocation6] sm:$0xff] %vm519, %v1778
    // Predicated region
    $region14: #{mamba_compressor_forward.1} parent=1 // pred_check
      _
    $region15: #{mamba_compressor_forward.1} parent=1 // pred_check_branch
      %1785 = sbr.rel (0) target = $region17
    $region16: #{mamba_compressor_forward.1} parent=1 // pred_region
      %s1787 = ssub.s32 128, 128
      %1788 = vsyncadd [#allocation7], %s1787
      %s1790 = sshll.u32 [#allocation6], 4
      %s1791 = int_to_ptr.vmem [resolvable:$true] %s1790
      %1793 = dma.vmem_to_hbm [thread:$0]  %s1791, 128, %s3, [#allocation7]
    $region17: #{mamba_compressor_forward.1} parent=1 // pred_fallthru
      _
    // Predicated region
    $region18: #{mamba_compressor_forward.1} parent=1 // pred_check
      _
    $region19: #{mamba_compressor_forward.1} parent=1 // pred_check_branch
      %1795 = sbr.rel (0) target = $region21
    $region20: #{mamba_compressor_forward.1} parent=1 // pred_region
      %1796 = dma.done [#allocation7], 128
    $region21: #{mamba_compressor_forward.1} parent=1 // pred_fallthru
      _
    %1797 = vsyncpa [#allocation7], 1

</llo_original>
